<compile_context>
chip_gen: v7x
topology: tpu7x:2x2x1
jax: 0.10.0
libtpu: 0.0.40
codegen_flags: <defaults>
</compile_context>

<pallas_src>
import functools

import jax
import jax.numpy as jnp
from jax.experimental import pallas as pl
from jax.experimental.pallas import tpu as pltpu

LANE = 128
HID = 100                       # logical hidden width
HID_P = 128                     # padded hidden width
NEIGHBORS = 5
GRU_IN_P = NEIGHBORS * HID_P    # 640
GATES_P = 3 * HID_P             # 384 (gate-concatenated r|z|n)
FUSED_MAX_ROWS = 512            # fully fused single-kernel path when padded N <= this

_STAGE_A_KEYS = ("We1", "We2", "We3", "be", "Wpc1", "Wpc23", "bpc", "Wproj", "bproj")
_ITER_KEYS = ("Wih", "Whh", "bgru", "Wbo", "bbo", "Wcd", "bcd")


# --------------------------------------------------------------------------------------
# small helpers
# --------------------------------------------------------------------------------------
def _round_up(x, m):
    return (x + m - 1) // m * m


def _row_tiling(n8):
    """(row_tile, n_pad) for the tiled two-kernel path.

    >=2 row programs so v7x megacore can shard rows; 16-row alignment (bf16
    sublane tiling of the ww/uu blocks); 512-row tiles for large N (review: ~85%
    of HBM roofline at 512 vs ~63% at 256).
    """
    if n8 <= 1024:
        tile = _round_up((n8 + 1) // 2, 16)
        return tile, 2 * tile
    tile = 512
    return tile, _round_up(n8, 2 * tile)     # even number of programs


def _pad2d(x, rows, cols):
    return jnp.pad(x, ((0, rows - x.shape[0]), (0, cols - x.shape[1])))


def _const_spec(a):
    """Full-array block for a weight operand (constant across the row grid)."""
    if a.ndim == 2:
        return pl.BlockSpec(a.shape, lambda i: (0, 0))
    return pl.BlockSpec(a.shape, lambda i: (0, 0, 0))


def _params(parallel):
    return pltpu.CompilerParams(
        dimension_semantics=("parallel",) if parallel else ("arbitrary",),
        vmem_limit_bytes=32 * 1024 * 1024,
    )


def _mm(x, w):
    # bf16 MXU operands, f32 accumulation.
    return jnp.dot(x.astype(jnp.bfloat16), w, preferred_element_type=jnp.float32)


# --------------------------------------------------------------------------------------
# shared math (used inside the Pallas kernels AND by the padded "mirror" reference)
# --------------------------------------------------------------------------------------
def _stage_a_math(e, p, c, we1, we2, we3, be, wpc1, wpc2, wpc3, bpc, wproj, bproj):
    # moduleA_embeddings: Linear+ReLU, Linear+ReLU, Linear  (384-wide padded)
    x = jnp.maximum(_mm(e, we1) + be[0:1, :], 0.0)
    x = jnp.maximum(_mm(x, we2) + be[1:2, :], 0.0)
    e_out = _mm(x, we3) + be[2:3, :HID_P]
    # moduleA_positional | moduleA_convolutional as one block-diagonal 256-wide chain
    pc = jnp.concatenate([p, c], axis=1)
    y = _mm(pc, wpc1) + bpc[0:1, :]
    y = jnp.concatenate([jax.nn.sigmoid(y[:, :HID_P]),        # positional layer 1: Sigmoid
                         jnp.maximum(y[:, HID_P:], 0.0)],     # convolutional layer 1: ReLU
                        axis=1)
    y = jnp.maximum(_mm(y, wpc2) + bpc[1:2, :], 0.0)          # layer 2: ReLU | ReLU
    y = _mm(y, wpc3) + bpc[2:3, :]                            # layer 3: no activation
    # moduleA_project_down over concat([emb|pos|conv]) as ONE [*,384]@[384,128] MXU pass
    u = _mm(jnp.concatenate([e_out, y], axis=1), wproj) + bproj
    return jnp.maximum(u, 0.0)                                # project_down: 'R'


def _iter_math(ww, hh, wih, whh, bgru, wbo1, wbo2, wbo3, bbo, wcd, bcd):
    # Gate-concatenated GRUCell (PyTorch semantics, gate order r|z|n), 2 matmuls total.
    gi = _mm(ww, wih) + bgru[0:1, :]
    gh = _mm(hh, whh) + bgru[1:2, :]
    H = HID_P
    r = jax.nn.sigmoid(gi[:, :H] + gh[:, :H])
    z = jax.nn.sigmoid(gi[:, H:2 * H] + gh[:, H:2 * H])
    n = jnp.tanh(gi[:, 2 * H:] + r * gh[:, 2 * H:])
    bb = (1.0 - z) * n + z * hh
    # moduleBO_1 | moduleBO_2 fused as 256-wide block-diagonal chain.
    x = jnp.concatenate([bb, bb], axis=1)     # layer-1 weight rows 128:256 are zero
    for w, l in ((wbo1, 0), (wbo2, 1), (wbo3, 2)):
        x = jnp.maximum(_mm(x, w) + bbo[l:l + 1, :], 0.0)
    hn = x[:, H:]                             # moduleBO_2 output == new hidden state
    # moduleC | moduleD fused as one 256-wide block-diagonal matmul.
    cd = _mm(x, wcd) + bcd
    ll = cd[:, :H]                            # moduleC: Linear (no activation)
    uu = jnp.maximum(cd[:, H:], 0.0)          # moduleD: Linear + ReLU
    return ll, hn, uu


# --------------------------------------------------------------------------------------
# Pallas kernels
# --------------------------------------------------------------------------------------
def _stage_a_kernel(emb_ref, pos_ref, conv_ref,
                    we1, we2, we3, be, wpc1, wpc23, bpc, wproj, bproj,
                    uu_ref):
    uu = _stage_a_math(emb_ref[...], pos_ref[...], conv_ref[...],
                       we1[...], we2[...], we3[...], be[...],
                       wpc1[...], wpc23[0], wpc23[1], bpc[...],
                       wproj[...], bproj[...])
    uu_ref[...] = uu.astype(uu_ref.dtype)     # uu carried in bf16


def _iter_kernel(ww_ref, hh_ref,
                 wih, whh, bgru, wbo, bbo, wcd, bcd,
                 ll_ref, hh_out_ref, uu_out_ref):
    ll, hn, uu = _iter_math(ww_ref[...], hh_ref[...],
                            wih[...], whh[...], bgru[...],
                            wbo[0], wbo[1], wbo[2], bbo[...], wcd[...], bcd[...])
    ll_ref[...] = ll
    hh_out_ref[...] = hn
    uu_out_ref[...] = uu.astype(uu_out_ref.dtype)   # uu carried in bf16


def _fused_kernel(iterations, idx_ref, emb_ref, pos_ref, conv_ref,
                  we1, we2, we3, be, wpc1, wpc23, bpc, wproj, bproj,
                  wih, whh, bgru, wbo, bbo, wcd, bcd,
                  ll_ref):
    """Small-N path: stage A + in-VMEM one-hot MXU gather + all iterations, one launch."""
    uu = _stage_a_math(emb_ref[...], pos_ref[...], conv_ref[...],
                       we1[...], we2[...], we3[...], be[...],
                       wpc1[...], wpc23[0], wpc23[1], bpc[...],
                       wproj[...], bproj[...])
    n_pad = uu.shape[0]
    iw = (wih[...], whh[...], bgru[...], wbo[0], wbo[1], wbo[2],
          bbo[...], wcd[...], bcd[...])
    hh = jnp.zeros_like(uu)
    col_ids = jax.lax.broadcasted_iota(jnp.int32, (n_pad, n_pad), 1)
    ll = None
    for _ in range(iterations):
        uu_b = uu.astype(jnp.bfloat16)
        parts = []
        for k in range(NEIGHBORS):
            # not-found / padded rows carry index -1 -> all-zero selector row -> zero gather.
            sel = jnp.where(col_ids == idx_ref[k], 1.0, 0.0).astype(jnp.bfloat16)
            parts.append(jnp.dot(sel, uu_b, preferred_element_type=jnp.float32))
        ww_b = jnp.concatenate(parts, axis=1).astype(jnp.bfloat16)
        ll, hh, uu = _iter_math(ww_b, hh, *iw)
    ll_ref[...] = ll


# --------------------------------------------------------------------------------------
# pallas_call wrappers
# --------------------------------------------------------------------------------------
def _stage_a_call(pp, emb, pos, conv, row_tile):
    n_pad = emb.shape[0]
    grid = (n_pad // row_tile,)
    weights = [pp[k] for k in _STAGE_A_KEYS]
    in_specs = ([pl.BlockSpec((row_tile, emb.shape[1]), lambda i: (i, 0)),
                 pl.BlockSpec((row_tile, pos.shape[1]), lambda i: (i, 0)),
                 pl.BlockSpec((row_tile, conv.shape[1]), lambda i: (i, 0))]
                + [_const_spec(w) for w in weights])
    return pl.pallas_call(
        _stage_a_kernel,
        out_shape=jax.ShapeDtypeStruct((n_pad, HID_P), jnp.bfloat16),
        grid=grid,
        in_specs=in_specs,
        out_specs=pl.BlockSpec((row_tile, HID_P), lambda i: (i, 0)),
        compiler_params=_params(parallel=True),
    )(emb, pos, conv, *weights)


def _iteration_call(pp, ww, hh, row_tile):
    n_pad = ww.shape[0]
    grid = (n_pad // row_tile,)
    weights = [pp[k] for k in _ITER_KEYS]
    in_specs = ([pl.BlockSpec((row_tile, ww.shape[1]), lambda i: (i, 0)),
                 pl.BlockSpec((row_tile, HID_P), lambda i: (i, 0))]
                + [_const_spec(w) for w in weights])
    out_shape = (jax.ShapeDtypeStruct((n_pad, HID_P), jnp.float32),   # ll
                 jax.ShapeDtypeStruct((n_pad, HID_P), jnp.float32),   # hh (next)
                 jax.ShapeDtypeStruct((n_pad, HID_P), jnp.bfloat16))  # uu (next, bf16)
    out_specs = (pl.BlockSpec((row_tile, HID_P), lambda i: (i, 0)),
                 pl.BlockSpec((row_tile, HID_P), lambda i: (i, 0)),
                 pl.BlockSpec((row_tile, HID_P), lambda i: (i, 0)))
    return pl.pallas_call(
        _iter_kernel,
        out_shape=out_shape,
        grid=grid,
        in_specs=in_specs,
        out_specs=out_specs,
        compiler_params=_params(parallel=True),
    )(ww, hh, *weights)


def _fused_call(pp, idx5, emb, pos, conv, iterations):
    n_pad = emb.shape[0]
    args = [idx5, emb, pos, conv] + [pp[k] for k in _STAGE_A_KEYS] + [pp[k] for k in _ITER_KEYS]
    in_specs = [_const_spec(a) for a in args]
    return pl.pallas_call(
        functools.partial(_fused_kernel, iterations),
        out_shape=jax.ShapeDtypeStruct((n_pad, HID_P), jnp.float32),
        grid=(1,),
        in_specs=in_specs,
        out_specs=pl.BlockSpec((n_pad, HID_P), lambda i: (0, 0)),
        compiler_params=_params(parallel=False),
    )(*args)


# --------------------------------------------------------------------------------------
# Parameters: logical (f32, PyTorch shapes) + padded/packed version for the kernels
# --------------------------------------------------------------------------------------
def dense_init(key, in_dim, config):
    specs = []
    idx = 0
    while idx < len(config):
        out = config[idx]
        act = None
        if idx + 1 < len(config) and isinstance(config[idx + 1], str):
            act = {"R": "relu", "S": "sigmoid"}[config[idx + 1]]
            idx += 2
        else:
            idx += 1
        specs.append((out, act))

    params = []
    prev = in_dim
    for out, act in specs:
        key, kw, kb = jax.random.split(key, 3)
        bound = 1.0 / (prev ** 0.5)
        w = jax.random.uniform(kw, (prev, out), jnp.float32, -bound, bound)
        b = jax.random.uniform(kb, (1, out), jnp.float32, -bound, bound)
        params.append((w, b, act))
        prev = out
    return params


def init_table_detect(key, num_embeddings, num_positional, num_convolutional):
    keys = jax.random.split(key, 12)
    gru_in = NEIGHBORS * HID
    bound = 1.0 / (HID ** 0.5)
    return {
        "A_emb": dense_init(keys[0], num_embeddings, [300, "R", 300, "R", 100]),
        "A_pos": dense_init(keys[1], num_positional, [20, "S", 20, "R", 100]),
        "A_conv": dense_init(keys[2], num_convolutional, [100, "R", 100, "R", 100]),
        "A_proj": dense_init(keys[3], 300, [100, "R"]),
        # GRUCell(500, 100): weights stored transposed as [in, hidden], stacked (r, z, n)
        "gru_wih": jax.random.uniform(keys[4], (3, gru_in, HID), jnp.float32, -bound, bound),
        "gru_whh": jax.random.uniform(keys[5], (3, HID, HID), jnp.float32, -bound, bound),
        "gru_bih": jax.random.uniform(keys[6], (3, 1, HID), jnp.float32, -bound, bound),
        "gru_bhh": jax.random.uniform(keys[7], (3, 1, HID), jnp.float32, -bound, bound),
        "BO_1": dense_init(keys[8], 100, [100, "R", 100, "R", 100, "R"]),
        "BO_2": dense_init(keys[9], 100, [100, "R", 100, "R", 100, "R"]),
        "C": dense_init(keys[10], 100, [100]),
        "D": dense_init(keys[11], 100, [100, "R"]),
    }


def pad_params(lp, num_embeddings, num_positional, num_convolutional):
    """Zero-pad / block-pack every weight to lane-dense layouts; weights bf16, biases f32."""
    E_p = _round_up(num_embeddings, LANE)
    P_p = _round_up(num_positional, LANE)
    C_p = _round_up(num_convolutional, LANE)

    def put(shape, *blocks):
        out = jnp.zeros(shape, jnp.float32)
        for r0, c0, a in blocks:
            out = out.at[r0:r0 + a.shape[0], c0:c0 + a.shape[1]].set(a)
        return out

    # --- A_embeddings chain (384-wide padded) ---
    (we1, be1, _), (we2, be2, _), (we3, be3, _) = lp["A_emb"]
    We1 = put((E_p, 3 * LANE), (0, 0, we1)).astype(jnp.bfloat16)
    We2 = put((3 * LANE, 3 * LANE), (0, 0, we2)).astype(jnp.bfloat16)
    We3 = put((3 * LANE, LANE), (0, 0, we3)).astype(jnp.bfloat16)
    be = put((3, 3 * LANE), (0, 0, be1), (1, 0, be2), (2, 0, be3))

    # --- A_positional | A_convolutional block-diagonal 256-wide chain ---
    (wp1, bp1, _), (wp2, bp2, _), (wp3, bp3, _) = lp["A_pos"]
    (wc1, bc1, _), (wc2, bc2, _), (wc3, bc3, _) = lp["A_conv"]
    Wpc1 = put((P_p + C_p, 2 * LANE), (0, 0, wp1), (P_p, LANE, wc1)).astype(jnp.bfloat16)
    Wpc2 = put((2 * LANE, 2 * LANE), (0, 0, wp2), (LANE, LANE, wc2))
    Wpc3 = put((2 * LANE, 2 * LANE), (0, 0, wp3), (LANE, LANE, wc3))
    Wpc23 = jnp.stack([Wpc2, Wpc3]).astype(jnp.bfloat16)
    bpc = put((3, 2 * LANE),
              (0, 0, bp1), (0, LANE, bc1),
              (1, 0, bp2), (1, LANE, bc2),
              (2, 0, bp3), (2, LANE, bc3))

    # --- project-down: rows blocked [emb | pos | conv] -> one [384,128] weight ---
    wA, bA, _ = lp["A_proj"][0]
    Wproj = put((3 * LANE, LANE),
                (0, 0, wA[0:HID]),
                (LANE, 0, wA[HID:2 * HID]),
                (2 * LANE, 0, wA[2 * HID:3 * HID])).astype(jnp.bfloat16)
    bproj = put((1, LANE), (0, 0, bA))

    # --- GRU: gate-concatenated (r|z|n), neighbour-blocked padded layout ---
    Wih = jnp.zeros((GRU_IN_P, GATES_P), jnp.float32)
    Whh = jnp.zeros((HID_P, GATES_P), jnp.float32)
    bgru = jnp.zeros((2, GATES_P), jnp.float32)
    for g in range(3):
        c0 = g * HID_P
        for k in range(NEIGHBORS):
            Wih = Wih.at[k * HID_P:k * HID_P + HID, c0:c0 + HID].set(
                lp["gru_wih"][g, k * HID:(k + 1) * HID, :])
        Whh = Whh.at[:HID, c0:c0 + HID].set(lp["gru_whh"][g])
        bgru = bgru.at[0, c0:c0 + HID].set(lp["gru_bih"][g, 0])
        bgru = bgru.at[1, c0:c0 + HID].set(lp["gru_bhh"][g, 0])
    Wih = Wih.astype(jnp.bfloat16)
    Whh = Whh.astype(jnp.bfloat16)

    # --- BO_1 | BO_2 block-diagonal 256-wide chain ---
    Wbo_layers = []
    bbo = jnp.zeros((3, 2 * LANE), jnp.float32)
    for l in range(3):
        w1, b1, _ = lp["BO_1"][l]
        w2, b2, _ = lp["BO_2"][l]
        if l == 0:
            # both halves read bb (cols 0:128 of x = [bb|bb]); rows 128:256 stay zero
            Wl = put((2 * LANE, 2 * LANE), (0, 0, w1), (0, LANE, w2))
        else:
            Wl = put((2 * LANE, 2 * LANE), (0, 0, w1), (LANE, LANE, w2))
        Wbo_layers.append(Wl)
        bbo = bbo.at[l, :HID].set(b1[0]).at[l, LANE:LANE + HID].set(b2[0])
    Wbo = jnp.stack(Wbo_layers).astype(jnp.bfloat16)

    # --- C | D block-diagonal ---
    wc, bcc, _ = lp["C"][0]
    wd, bd, _ = lp["D"][0]
    Wcd = put((2 * LANE, 2 * LANE), (0, 0, wc), (LANE, LANE, wd)).astype(jnp.bfloat16)
    bcd = put((1, 2 * LANE), (0, 0, bcc), (0, LANE, bd))

    return {
        "We1": We1, "We2": We2, "We3": We3, "be": be,
        "Wpc1": Wpc1, "Wpc23": Wpc23, "bpc": bpc, "Wproj": Wproj, "bproj": bproj,
        "Wih": Wih, "Whh": Whh, "bgru": bgru,
        "Wbo": Wbo, "bbo": bbo, "Wcd": Wcd, "bcd": bcd,
    }


# --------------------------------------------------------------------------------------
# Forward pass (Pallas) — mirrors TableDetect.forward
# --------------------------------------------------------------------------------------
def table_detect_forward_pallas(pp, indices, indices_not_found, word_embeddings,
                                positional_features, convolutional_features,
                                *, num_words, iterations=1, force_path=None):
    E_p = _round_up(word_embeddings.shape[1], LANE)
    P_p = _round_up(positional_features.shape[1], LANE)
    C_p = _round_up(convolutional_features.shape[1], LANE)
    assert pp["We1"].shape[0] == E_p and pp["Wpc1"].shape[0] == P_p + C_p, \
        "padded params do not match input feature widths"

    n8 = _round_up(max(num_words, 1), 8)
    use_fused = (n8 <= FUSED_MAX_ROWS) if force_path is None else (force_path == "fused")

    def prep(n_pad):
        emb = _pad2d(word_embeddings, n_pad, E_p)
        pos = _pad2d(positional_features, n_pad, P_p)
        conv = _pad2d(convolutional_features, n_pad, C_p)
        # not-found rows and padded rows get index -1 -> gathered as zeros.
        idx = jnp.where(indices_not_found[:, None], -1, indices).astype(jnp.int32)
        idx = jnp.pad(idx, ((0, n_pad - num_words), (0, 0)), constant_values=-1)
        return emb, pos, conv, idx

    if use_fused:
        # single fused kernel: stage A + in-kernel one-hot gather + all iterations.
        n_pad = n8
        emb, pos, conv, idx = prep(n_pad)
        idx5 = jnp.transpose(idx, (1, 0))[:, :, None]         # [5, n_pad, 1]
        ll = _fused_call(pp, idx5, emb, pos, conv, iterations)
        return ll[:num_words, :HID]

    # tiled two-kernel path for large N (gather stays in XLA, carried in bf16).
    row_tile, n_pad = _row_tiling(n8)
    emb, pos, conv, idx = prep(n_pad)
    uu = _stage_a_call(pp, emb, pos, conv, row_tile)          # bf16 [n_pad, 128]
    hh = jnp.zeros((n_pad, HID_P), jnp.float32)
    ll = None
    for _ in range(iterations):
        ww = jnp.take(uu, idx, axis=0, mode="fill", fill_value=0)
        ww = ww.reshape(n_pad, NEIGHBORS * HID_P)             # bf16 [n_pad, 640]
        ll, hh, uu = _iteration_call(pp, ww, hh, row_tile)
    return ll[:num_words, :HID]


# --------------------------------------------------------------------------------------
# References (for correctness checks only)
# --------------------------------------------------------------------------------------
def table_detect_forward_mirror(pp, indices, indices_not_found, word_embeddings,
                                positional_features, convolutional_features,
                                *, num_words, iterations=1):
    """Pure-JAX mirror of the padded/bf16 kernel math (validates the Pallas lowering)."""
    E_p = _round_up(word_embeddings.shape[1], LANE)
    P_p = _round_up(positional_features.shape[1], LANE)
    C_p = _round_up(convolutional_features.shape[1], LANE)
    emb = _pad2d(word_embeddings, num_words, E_p)
    pos = _pad2d(positional_features, num_words, P_p)
    conv = _pad2d(convolutional_features, num_words, C_p)

    uu = _stage_a_math(emb, pos, conv,
                       pp["We1"], pp["We2"], pp["We3"], pp["be"],
                       pp["Wpc1"], pp["Wpc23"][0], pp["Wpc23"][1], pp["bpc"],
                       pp["Wproj"], pp["bproj"])
    hh = jnp.zeros((num_words, HID_P), jnp.float32)
    idx = jnp.where(indices_not_found[:, None], -1, indices).astype(jnp.int32)
    ll = None
    for _ in range(iterations):
        ww = jnp.take(uu.astype(jnp.bfloat16), idx, axis=0, mode="fill", fill_value=0)
        ww = ww.reshape(num_words, NEIGHBORS * HID_P)
        ll, hh, uu = _iter_math(ww, hh,
                                pp["Wih"], pp["Whh"], pp["bgru"],
                                pp["Wbo"][0], pp["Wbo"][1], pp["Wbo"][2],
                                pp["bbo"], pp["Wcd"], pp["bcd"])
    return ll[:, :HID]


def _apply_act(y, act):
    if act == "relu":
        return jnp.maximum(y, 0.0)
    if act == "sigmoid":
        return jax.nn.sigmoid(y)
    return y


def dense_apply_ref(layers, x):
    for w, b, act in layers:
        x = _apply_act(jnp.dot(x, w, precision=jax.lax.Precision.HIGHEST) + b, act)
    return x


def gru_ref(x, h, wih, whh, bih, bhh):
    def gates(k):
        gi = jnp.dot(x, wih[k], precision=jax.lax.Precision.HIGHEST) + bih[k]
        gh = jnp.dot(h, whh[k], precision=jax.lax.Precision.HIGHEST) + bhh[k]
        return gi, gh

    i_r, h_r = gates(0)
    i_z, h_z = gates(1)
    i_n, h_n = gates(2)
    r = jax.nn.sigmoid(i_r + h_r)
    z = jax.nn.sigmoid(i_z + h_z)
    n = jnp.tanh(i_n + r * h_n)
    return (1.0 - z) * n + z * h


def table_detect_forward_ref(lp, indices, indices_not_found, emb, pos, conv,
                             num_words, iterations=1):
    """Unpadded f32 reference with the original module semantics."""
    uu_e = dense_apply_ref(lp["A_emb"], emb)
    uu_p = dense_apply_ref(lp["A_pos"], pos)
    uu_c = dense_apply_ref(lp["A_conv"], conv)
    uu = dense_apply_ref(lp["A_proj"], jnp.concatenate([uu_e, uu_p, uu_c], axis=1))
    hh = jnp.zeros((num_words, HID), jnp.float32)
    ll = None
    for _ in range(iterations):
        parts = [jnp.take(uu, indices[:, k], axis=0) for k in range(NEIGHBORS)]
        ww = jnp.where(indices_not_found[:, None], 0.0, jnp.concatenate(parts, axis=1))
        bb = gru_ref(ww, hh, lp["gru_wih"], lp["gru_whh"], lp["gru_bih"], lp["gru_bhh"])
        oo = dense_apply_ref(lp["BO_1"], bb)
        hh = dense_apply_ref(lp["BO_2"], bb)
        ll = dense_apply_ref(lp["C"], oo)
        uu = dense_apply_ref(lp["D"], hh)
    return ll


# --------------------------------------------------------------------------------------
if __name__ == "__main__":
    key = jax.random.PRNGKey(0)
    num_words = 16
    num_embeddings, num_positional, num_convolutional = 32, 16, 8

    k_params, k_emb, k_pos, k_conv, k_idx, k_nf = jax.random.split(key, 6)
    lp = init_table_detect(k_params, num_embeddings, num_positional, num_convolutional)
    pp = pad_params(lp, num_embeddings, num_positional, num_convolutional)

    word_embeddings = jax.random.normal(k_emb, (num_words, num_embeddings), jnp.float32)
    positional_features = jax.random.normal(k_pos, (num_words, num_positional), jnp.float32)
    convolutional_features = jax.random.normal(k_conv, (num_words, num_convolutional), jnp.float32)
    indices = jax.random.randint(k_idx, (num_words, NEIGHBORS), 0, num_words, jnp.int32)
    indices_not_found = jax.random.bernoulli(k_nf, 0.2, (num_words,))

    fwd = jax.jit(table_detect_forward_pallas,
                  static_argnames=("num_words", "iterations", "force_path"))

    def check(iterations, force_path):
        ll = fwd(pp, indices, indices_not_found, word_embeddings, positional_features,
                 convolutional_features, num_words=num_words, iterations=iterations,
                 force_path=force_path)
        ll = jax.block_until_ready(ll)
        assert ll.shape == (num_words, HID)
        # 1) strict check against an exact JAX mirror of the padded/bf16 kernel math
        ll_mirror = table_detect_forward_mirror(
            pp, indices, indices_not_found, word_embeddings, positional_features,
            convolutional_features, num_words=num_words, iterations=iterations)
        if not jnp.allclose(ll, ll_mirror, atol=1e-2, rtol=1e-2):
            raise AssertionError(
                f"Pallas ({force_path}, it={iterations}) != padded bf16 JAX mirror")
        # 2) loose check against the unpadded f32 reference (original module semantics);
        #    tolerance covers bf16 matmul operands only.
        ll_ref = table_detect_forward_ref(
            lp, indices, indices_not_found, word_embeddings, positional_features,
            convolutional_features, num_words, iterations=iterations)
        if not jnp.allclose(ll, ll_ref, atol=1e-1, rtol=1e-1):
            raise AssertionError(
                f"Pallas ({force_path}, it={iterations}) diverges from f32 reference")

    check(1, "fused")   # fully fused single-kernel path (default for N <= 512)
    check(1, "tiled")   # row-tiled two-kernel path (default for large N), grid exercised
    check(2, "fused")   # multi-iteration in-kernel loop (set_iterations semantics)
    print("KERNEL_OK")
</pallas_src>

<mosaic_0001>
module attributes {stable_mosaic.version = 11 : i64} {
  func.func @_fused_kernel(%arg0: i32, %arg1: memref<5x16x1xi32, #tpu.memory_space<vmem>>, %arg2: memref<16x128xf32, #tpu.memory_space<vmem>>, %arg3: memref<16x128xf32, #tpu.memory_space<vmem>>, %arg4: memref<16x128xf32, #tpu.memory_space<vmem>>, %arg5: memref<128x384xbf16, #tpu.memory_space<vmem>>, %arg6: memref<384x384xbf16, #tpu.memory_space<vmem>>, %arg7: memref<384x128xbf16, #tpu.memory_space<vmem>>, %arg8: memref<3x384xf32, #tpu.memory_space<vmem>>, %arg9: memref<256x256xbf16, #tpu.memory_space<vmem>>, %arg10: memref<2x256x256xbf16, #tpu.memory_space<vmem>>, %arg11: memref<3x256xf32, #tpu.memory_space<vmem>>, %arg12: memref<384x128xbf16, #tpu.memory_space<vmem>>, %arg13: memref<1x128xf32, #tpu.memory_space<vmem>>, %arg14: memref<640x384xbf16, #tpu.memory_space<vmem>>, %arg15: memref<128x384xbf16, #tpu.memory_space<vmem>>, %arg16: memref<2x384xf32, #tpu.memory_space<vmem>>, %arg17: memref<3x256x256xbf16, #tpu.memory_space<vmem>>, %arg18: memref<3x256xf32, #tpu.memory_space<vmem>>, %arg19: memref<256x256xbf16, #tpu.memory_space<vmem>>, %arg20: memref<1x256xf32, #tpu.memory_space<vmem>>, %arg21: memref<16x128xf32, #tpu.memory_space<vmem>>) attributes {dimension_semantics = [#tpu.dimension_semantics<arbitrary>], iteration_bounds = array<i64: 1>, scalar_prefetch = 0 : i64, scratch_operands = 0 : i64, tpu.core_type = #tpu.core_type<tc>, window_params = [{pipeline_mode = #tpu.pipeline_mode<synchronous>, transform_indices = @transform_0, window_bounds = array<i64: 5, 16, 1>}, {pipeline_mode = #tpu.pipeline_mode<synchronous>, transform_indices = @transform_1, window_bounds = array<i64: 16, 128>}, {pipeline_mode = #tpu.pipeline_mode<synchronous>, transform_indices = @transform_2, window_bounds = array<i64: 16, 128>}, {pipeline_mode = #tpu.pipeline_mode<synchronous>, transform_indices = @transform_3, window_bounds = array<i64: 16, 128>}, {pipeline_mode = #tpu.pipeline_mode<synchronous>, transform_indices = @transform_4, window_bounds = array<i64: 128, 384>}, {pipeline_mode = #tpu.pipeline_mode<synchronous>, transform_indices = @transform_5, window_bounds = array<i64: 384, 384>}, {pipeline_mode = #tpu.pipeline_mode<synchronous>, transform_indices = @transform_6, window_bounds = array<i64: 384, 128>}, {pipeline_mode = #tpu.pipeline_mode<synchronous>, transform_indices = @transform_7, window_bounds = array<i64: 3, 384>}, {pipeline_mode = #tpu.pipeline_mode<synchronous>, transform_indices = @transform_8, window_bounds = array<i64: 256, 256>}, {pipeline_mode = #tpu.pipeline_mode<synchronous>, transform_indices = @transform_9, window_bounds = array<i64: 2, 256, 256>}, {pipeline_mode = #tpu.pipeline_mode<synchronous>, transform_indices = @transform_10, window_bounds = array<i64: 3, 256>}, {pipeline_mode = #tpu.pipeline_mode<synchronous>, transform_indices = @transform_11, window_bounds = array<i64: 384, 128>}, {pipeline_mode = #tpu.pipeline_mode<synchronous>, transform_indices = @transform_12, window_bounds = array<i64: 1, 128>}, {pipeline_mode = #tpu.pipeline_mode<synchronous>, transform_indices = @transform_13, window_bounds = array<i64: 640, 384>}, {pipeline_mode = #tpu.pipeline_mode<synchronous>, transform_indices = @transform_14, window_bounds = array<i64: 128, 384>}, {pipeline_mode = #tpu.pipeline_mode<synchronous>, transform_indices = @transform_15, window_bounds = array<i64: 2, 384>}, {pipeline_mode = #tpu.pipeline_mode<synchronous>, transform_indices = @transform_16, window_bounds = array<i64: 3, 256, 256>}, {pipeline_mode = #tpu.pipeline_mode<synchronous>, transform_indices = @transform_17, window_bounds = array<i64: 3, 256>}, {pipeline_mode = #tpu.pipeline_mode<synchronous>, transform_indices = @transform_18, window_bounds = array<i64: 256, 256>}, {pipeline_mode = #tpu.pipeline_mode<synchronous>, transform_indices = @transform_19, window_bounds = array<i64: 1, 256>}, {pipeline_mode = #tpu.pipeline_mode<synchronous>, transform_indices = @transform_20, window_bounds = array<i64: 16, 128>}]} {
    %c0 = arith.constant 0 : index
    %c0_0 = arith.constant 0 : index
    %0 = vector.load %arg2[%c0, %c0_0] : memref<16x128xf32, #tpu.memory_space<vmem>>, vector<16x128xf32>
    %c0_1 = arith.constant 0 : index
    %c0_2 = arith.constant 0 : index
    %1 = vector.load %arg3[%c0_1, %c0_2] : memref<16x128xf32, #tpu.memory_space<vmem>>, vector<16x128xf32>
    %c0_3 = arith.constant 0 : index
    %c0_4 = arith.constant 0 : index
    %2 = vector.load %arg4[%c0_3, %c0_4] : memref<16x128xf32, #tpu.memory_space<vmem>>, vector<16x128xf32>
    %c0_5 = arith.constant 0 : index
    %c0_6 = arith.constant 0 : index
    %3 = vector.load %arg5[%c0_5, %c0_6] : memref<128x384xbf16, #tpu.memory_space<vmem>>, vector<128x384xbf16>
    %c0_7 = arith.constant 0 : index
    %c0_8 = arith.constant 0 : index
    %4 = vector.load %arg6[%c0_7, %c0_8] : memref<384x384xbf16, #tpu.memory_space<vmem>>, vector<384x384xbf16>
    %c0_9 = arith.constant 0 : index
    %c0_10 = arith.constant 0 : index
    %5 = vector.load %arg7[%c0_9, %c0_10] : memref<384x128xbf16, #tpu.memory_space<vmem>>, vector<384x128xbf16>
    %c0_11 = arith.constant 0 : index
    %c0_12 = arith.constant 0 : index
    %6 = vector.load %arg8[%c0_11, %c0_12] : memref<3x384xf32, #tpu.memory_space<vmem>>, vector<3x384xf32>
    %c0_13 = arith.constant 0 : index
    %c0_14 = arith.constant 0 : index
    %7 = vector.load %arg9[%c0_13, %c0_14] : memref<256x256xbf16, #tpu.memory_space<vmem>>, vector<256x256xbf16>
    %c0_15 = arith.constant 0 : index
    %c0_16 = arith.constant 0 : index
    %c0_17 = arith.constant 0 : index
    %8 = vector.load %arg10[%c0_15, %c0_16, %c0_17] : memref<2x256x256xbf16, #tpu.memory_space<vmem>>, vector<1x256x256xbf16>
    %9 = vector.shape_cast %8 : vector<1x256x256xbf16> to vector<256x256xbf16>
    %c1 = arith.constant 1 : index
    %c0_18 = arith.constant 0 : index
    %c0_19 = arith.constant 0 : index
    %10 = vector.load %arg10[%c1, %c0_18, %c0_19] : memref<2x256x256xbf16, #tpu.memory_space<vmem>>, vector<1x256x256xbf16>
    %11 = vector.shape_cast %10 : vector<1x256x256xbf16> to vector<256x256xbf16>
    %c0_20 = arith.constant 0 : index
    %c0_21 = arith.constant 0 : index
    %12 = vector.load %arg11[%c0_20, %c0_21] : memref<3x256xf32, #tpu.memory_space<vmem>>, vector<3x256xf32>
    %c0_22 = arith.constant 0 : index
    %c0_23 = arith.constant 0 : index
    %13 = vector.load %arg12[%c0_22, %c0_23] : memref<384x128xbf16, #tpu.memory_space<vmem>>, vector<384x128xbf16>
    %c0_24 = arith.constant 0 : index
    %c0_25 = arith.constant 0 : index
    %14 = vector.load %arg13[%c0_24, %c0_25] : memref<1x128xf32, #tpu.memory_space<vmem>>, vector<1x128xf32>
    %15 = arith.truncf %0 : vector<16x128xf32> to vector<16x128xbf16>
    %cst = arith.constant dense<0.000000e+00> : vector<16x384xf32>
    %16 = tpu.matmul %15, %3, %cst {dimension_numbers = #tpu.dot_dimension_numbers<[1], [0], [0], [1], [0, 0, 1, 1], [], []>} : vector<16x128xbf16>, vector<128x384xbf16>, vector<16x384xf32> -> vector<16x384xf32>
    %17 = vector.extract_strided_slice %6 {offsets = [0, 0], sizes = [1, 384], strides = [1, 1]} : vector<3x384xf32> to vector<1x384xf32>
    %18 = vector.broadcast %17 : vector<1x384xf32> to vector<16x384xf32>
    %19 = arith.addf %16, %18 : vector<16x384xf32>
    %cst_26 = arith.constant 0.000000e+00 : f32
    %20 = vector.broadcast %cst_26 : f32 to vector<16x384xf32>
    %21 = arith.maximumf %19, %20 : vector<16x384xf32>
    %22 = arith.truncf %21 : vector<16x384xf32> to vector<16x384xbf16>
    %cst_27 = arith.constant dense<0.000000e+00> : vector<16x384xf32>
    %23 = tpu.matmul %22, %4, %cst_27 {dimension_numbers = #tpu.dot_dimension_numbers<[1], [0], [0], [1], [0, 0, 1, 1], [], []>} : vector<16x384xbf16>, vector<384x384xbf16>, vector<16x384xf32> -> vector<16x384xf32>
    %24 = vector.extract_strided_slice %6 {offsets = [1, 0], sizes = [1, 384], strides = [1, 1]} : vector<3x384xf32> to vector<1x384xf32>
    %25 = vector.broadcast %24 : vector<1x384xf32> to vector<16x384xf32>
    %26 = arith.addf %23, %25 : vector<16x384xf32>
    %cst_28 = arith.constant 0.000000e+00 : f32
    %27 = vector.broadcast %cst_28 : f32 to vector<16x384xf32>
    %28 = arith.maximumf %26, %27 : vector<16x384xf32>
    %29 = arith.truncf %28 : vector<16x384xf32> to vector<16x384xbf16>
    %cst_29 = arith.constant dense<0.000000e+00> : vector<16x128xf32>
    %30 = tpu.matmul %29, %5, %cst_29 {dimension_numbers = #tpu.dot_dimension_numbers<[1], [0], [0], [1], [0, 0, 1, 1], [], []>} : vector<16x384xbf16>, vector<384x128xbf16>, vector<16x128xf32> -> vector<16x128xf32>
    %31 = vector.extract_strided_slice %6 {offsets = [2, 0], sizes = [1, 128], strides = [1, 1]} : vector<3x384xf32> to vector<1x128xf32>
    %32 = vector.broadcast %31 : vector<1x128xf32> to vector<16x128xf32>
    %33 = arith.addf %30, %32 : vector<16x128xf32>
    %34 = tpu.concatenate %1, %2 in 1 : vector<16x128xf32>, vector<16x128xf32> -> vector<16x256xf32>
    %35 = arith.truncf %34 : vector<16x256xf32> to vector<16x256xbf16>
    %cst_30 = arith.constant dense<0.000000e+00> : vector<16x256xf32>
    %36 = tpu.matmul %35, %7, %cst_30 {dimension_numbers = #tpu.dot_dimension_numbers<[1], [0], [0], [1], [0, 0, 1, 1], [], []>} : vector<16x256xbf16>, vector<256x256xbf16>, vector<16x256xf32> -> vector<16x256xf32>
    %37 = vector.extract_strided_slice %12 {offsets = [0, 0], sizes = [1, 256], strides = [1, 1]} : vector<3x256xf32> to vector<1x256xf32>
    %38 = vector.broadcast %37 : vector<1x256xf32> to vector<16x256xf32>
    %39 = arith.addf %36, %38 : vector<16x256xf32>
    %40 = vector.extract_strided_slice %39 {offsets = [0, 0], sizes = [16, 128], strides = [1, 1]} : vector<16x256xf32> to vector<16x128xf32>
    %41 = arith.negf %40 : vector<16x128xf32>
    %42 = math.exp %41 : vector<16x128xf32>
    %cst_31 = arith.constant 1.000000e+00 : f32
    %43 = vector.broadcast %cst_31 : f32 to vector<16x128xf32>
    %44 = arith.addf %43, %42 : vector<16x128xf32>
    %45 = arith.divf %43, %44 : vector<16x128xf32>
    %46 = vector.extract_strided_slice %39 {offsets = [0, 128], sizes = [16, 128], strides = [1, 1]} : vector<16x256xf32> to vector<16x128xf32>
    %cst_32 = arith.constant 0.000000e+00 : f32
    %47 = vector.broadcast %cst_32 : f32 to vector<16x128xf32>
    %48 = arith.maximumf %46, %47 : vector<16x128xf32>
    %49 = tpu.concatenate %45, %48 in 1 : vector<16x128xf32>, vector<16x128xf32> -> vector<16x256xf32>
    %50 = arith.truncf %49 : vector<16x256xf32> to vector<16x256xbf16>
    %cst_33 = arith.constant dense<0.000000e+00> : vector<16x256xf32>
    %51 = tpu.matmul %50, %9, %cst_33 {dimension_numbers = #tpu.dot_dimension_numbers<[1], [0], [0], [1], [0, 0, 1, 1], [], []>} : vector<16x256xbf16>, vector<256x256xbf16>, vector<16x256xf32> -> vector<16x256xf32>
    %52 = vector.extract_strided_slice %12 {offsets = [1, 0], sizes = [1, 256], strides = [1, 1]} : vector<3x256xf32> to vector<1x256xf32>
    %53 = vector.broadcast %52 : vector<1x256xf32> to vector<16x256xf32>
    %54 = arith.addf %51, %53 : vector<16x256xf32>
    %cst_34 = arith.constant 0.000000e+00 : f32
    %55 = vector.broadcast %cst_34 : f32 to vector<16x256xf32>
    %56 = arith.maximumf %54, %55 : vector<16x256xf32>
    %57 = arith.truncf %56 : vector<16x256xf32> to vector<16x256xbf16>
    %cst_35 = arith.constant dense<0.000000e+00> : vector<16x256xf32>
    %58 = tpu.matmul %57, %11, %cst_35 {dimension_numbers = #tpu.dot_dimension_numbers<[1], [0], [0], [1], [0, 0, 1, 1], [], []>} : vector<16x256xbf16>, vector<256x256xbf16>, vector<16x256xf32> -> vector<16x256xf32>
    %59 = vector.extract_strided_slice %12 {offsets = [2, 0], sizes = [1, 256], strides = [1, 1]} : vector<3x256xf32> to vector<1x256xf32>
    %60 = vector.broadcast %59 : vector<1x256xf32> to vector<16x256xf32>
    %61 = arith.addf %58, %60 : vector<16x256xf32>
    %62 = tpu.concatenate %33, %61 in 1 : vector<16x128xf32>, vector<16x256xf32> -> vector<16x384xf32>
    %63 = arith.truncf %62 : vector<16x384xf32> to vector<16x384xbf16>
    %cst_36 = arith.constant dense<0.000000e+00> : vector<16x128xf32>
    %64 = tpu.matmul %63, %13, %cst_36 {dimension_numbers = #tpu.dot_dimension_numbers<[1], [0], [0], [1], [0, 0, 1, 1], [], []>} : vector<16x384xbf16>, vector<384x128xbf16>, vector<16x128xf32> -> vector<16x128xf32>
    %65 = vector.broadcast %14 : vector<1x128xf32> to vector<16x128xf32>
    %66 = arith.addf %64, %65 : vector<16x128xf32>
    %cst_37 = arith.constant 0.000000e+00 : f32
    %67 = vector.broadcast %cst_37 : f32 to vector<16x128xf32>
    %68 = arith.maximumf %66, %67 : vector<16x128xf32>
    %c0_38 = arith.constant 0 : index
    %c0_39 = arith.constant 0 : index
    %69 = vector.load %arg14[%c0_38, %c0_39] : memref<640x384xbf16, #tpu.memory_space<vmem>>, vector<640x384xbf16>
    %c0_40 = arith.constant 0 : index
    %c0_41 = arith.constant 0 : index
    %70 = vector.load %arg15[%c0_40, %c0_41] : memref<128x384xbf16, #tpu.memory_space<vmem>>, vector<128x384xbf16>
    %c0_42 = arith.constant 0 : index
    %c0_43 = arith.constant 0 : index
    %71 = vector.load %arg16[%c0_42, %c0_43] : memref<2x384xf32, #tpu.memory_space<vmem>>, vector<2x384xf32>
    %c0_44 = arith.constant 0 : index
    %c0_45 = arith.constant 0 : index
    %c0_46 = arith.constant 0 : index
    %72 = vector.load %arg17[%c0_44, %c0_45, %c0_46] : memref<3x256x256xbf16, #tpu.memory_space<vmem>>, vector<1x256x256xbf16>
    %73 = vector.shape_cast %72 : vector<1x256x256xbf16> to vector<256x256xbf16>
    %c1_47 = arith.constant 1 : index
    %c0_48 = arith.constant 0 : index
    %c0_49 = arith.constant 0 : index
    %74 = vector.load %arg17[%c1_47, %c0_48, %c0_49] : memref<3x256x256xbf16, #tpu.memory_space<vmem>>, vector<1x256x256xbf16>
    %75 = vector.shape_cast %74 : vector<1x256x256xbf16> to vector<256x256xbf16>
    %c2 = arith.constant 2 : index
    %c0_50 = arith.constant 0 : index
    %c0_51 = arith.constant 0 : index
    %76 = vector.load %arg17[%c2, %c0_50, %c0_51] : memref<3x256x256xbf16, #tpu.memory_space<vmem>>, vector<1x256x256xbf16>
    %77 = vector.shape_cast %76 : vector<1x256x256xbf16> to vector<256x256xbf16>
    %c0_52 = arith.constant 0 : index
    %c0_53 = arith.constant 0 : index
    %78 = vector.load %arg18[%c0_52, %c0_53] : memref<3x256xf32, #tpu.memory_space<vmem>>, vector<3x256xf32>
    %c0_54 = arith.constant 0 : index
    %c0_55 = arith.constant 0 : index
    %79 = vector.load %arg19[%c0_54, %c0_55] : memref<256x256xbf16, #tpu.memory_space<vmem>>, vector<256x256xbf16>
    %c0_56 = arith.constant 0 : index
    %c0_57 = arith.constant 0 : index
    %80 = vector.load %arg20[%c0_56, %c0_57] : memref<1x256xf32, #tpu.memory_space<vmem>>, vector<1x256xf32>
    %cst_58 = arith.constant 0.000000e+00 : f32
    %81 = vector.broadcast %cst_58 : f32 to vector<16x128xf32>
    %82 = tpu.iota {dimensions = array<i32: 1>} : vector<16x16xi32>
    %83 = arith.truncf %68 : vector<16x128xf32> to vector<16x128xbf16>
    %c0_59 = arith.constant 0 : index
    %c0_60 = arith.constant 0 : index
    %c0_61 = arith.constant 0 : index
    %84 = vector.load %arg1[%c0_59, %c0_60, %c0_61] : memref<5x16x1xi32, #tpu.memory_space<vmem>>, vector<1x16x1xi32>
    %85 = vector.shape_cast %84 : vector<1x16x1xi32> to vector<16x1xi32>
    %86 = vector.broadcast %85 : vector<16x1xi32> to vector<16x16xi32>
    %87 = arith.cmpi eq, %82, %86 : vector<16x16xi32>
    %cst_62 = arith.constant 1.000000e+00 : f32
    %cst_63 = arith.constant 0.000000e+00 : f32
    %88 = vector.broadcast %cst_62 : f32 to vector<16x16xf32>
    %89 = vector.broadcast %cst_63 : f32 to vector<16x16xf32>
    %90 = arith.select %87, %88, %89 : vector<16x16xi1>, vector<16x16xf32>
    %91 = arith.truncf %90 : vector<16x16xf32> to vector<16x16xbf16>
    %cst_64 = arith.constant dense<0.000000e+00> : vector<16x128xf32>
    %92 = tpu.matmul %91, %83, %cst_64 {dimension_numbers = #tpu.dot_dimension_numbers<[1], [0], [0], [1], [0, 0, 1, 1], [], []>} : vector<16x16xbf16>, vector<16x128xbf16>, vector<16x128xf32> -> vector<16x128xf32>
    %c1_65 = arith.constant 1 : index
    %c0_66 = arith.constant 0 : index
    %c0_67 = arith.constant 0 : index
    %93 = vector.load %arg1[%c1_65, %c0_66, %c0_67] : memref<5x16x1xi32, #tpu.memory_space<vmem>>, vector<1x16x1xi32>
    %94 = vector.shape_cast %93 : vector<1x16x1xi32> to vector<16x1xi32>
    %95 = vector.broadcast %94 : vector<16x1xi32> to vector<16x16xi32>
    %96 = arith.cmpi eq, %82, %95 : vector<16x16xi32>
    %cst_68 = arith.constant 1.000000e+00 : f32
    %cst_69 = arith.constant 0.000000e+00 : f32
    %97 = vector.broadcast %cst_68 : f32 to vector<16x16xf32>
    %98 = vector.broadcast %cst_69 : f32 to vector<16x16xf32>
    %99 = arith.select %96, %97, %98 : vector<16x16xi1>, vector<16x16xf32>
    %100 = arith.truncf %99 : vector<16x16xf32> to vector<16x16xbf16>
    %cst_70 = arith.constant dense<0.000000e+00> : vector<16x128xf32>
    %101 = tpu.matmul %100, %83, %cst_70 {dimension_numbers = #tpu.dot_dimension_numbers<[1], [0], [0], [1], [0, 0, 1, 1], [], []>} : vector<16x16xbf16>, vector<16x128xbf16>, vector<16x128xf32> -> vector<16x128xf32>
    %c2_71 = arith.constant 2 : index
    %c0_72 = arith.constant 0 : index
    %c0_73 = arith.constant 0 : index
    %102 = vector.load %arg1[%c2_71, %c0_72, %c0_73] : memref<5x16x1xi32, #tpu.memory_space<vmem>>, vector<1x16x1xi32>
    %103 = vector.shape_cast %102 : vector<1x16x1xi32> to vector<16x1xi32>
    %104 = vector.broadcast %103 : vector<16x1xi32> to vector<16x16xi32>
    %105 = arith.cmpi eq, %82, %104 : vector<16x16xi32>
    %cst_74 = arith.constant 1.000000e+00 : f32
    %cst_75 = arith.constant 0.000000e+00 : f32
    %106 = vector.broadcast %cst_74 : f32 to vector<16x16xf32>
    %107 = vector.broadcast %cst_75 : f32 to vector<16x16xf32>
    %108 = arith.select %105, %106, %107 : vector<16x16xi1>, vector<16x16xf32>
    %109 = arith.truncf %108 : vector<16x16xf32> to vector<16x16xbf16>
    %cst_76 = arith.constant dense<0.000000e+00> : vector<16x128xf32>
    %110 = tpu.matmul %109, %83, %cst_76 {dimension_numbers = #tpu.dot_dimension_numbers<[1], [0], [0], [1], [0, 0, 1, 1], [], []>} : vector<16x16xbf16>, vector<16x128xbf16>, vector<16x128xf32> -> vector<16x128xf32>
    %c3 = arith.constant 3 : index
    %c0_77 = arith.constant 0 : index
    %c0_78 = arith.constant 0 : index
    %111 = vector.load %arg1[%c3, %c0_77, %c0_78] : memref<5x16x1xi32, #tpu.memory_space<vmem>>, vector<1x16x1xi32>
    %112 = vector.shape_cast %111 : vector<1x16x1xi32> to vector<16x1xi32>
    %113 = vector.broadcast %112 : vector<16x1xi32> to vector<16x16xi32>
    %114 = arith.cmpi eq, %82, %113 : vector<16x16xi32>
    %cst_79 = arith.constant 1.000000e+00 : f32
    %cst_80 = arith.constant 0.000000e+00 : f32
    %115 = vector.broadcast %cst_79 : f32 to vector<16x16xf32>
    %116 = vector.broadcast %cst_80 : f32 to vector<16x16xf32>
    %117 = arith.select %114, %115, %116 : vector<16x16xi1>, vector<16x16xf32>
    %118 = arith.truncf %117 : vector<16x16xf32> to vector<16x16xbf16>
    %cst_81 = arith.constant dense<0.000000e+00> : vector<16x128xf32>
    %119 = tpu.matmul %118, %83, %cst_81 {dimension_numbers = #tpu.dot_dimension_numbers<[1], [0], [0], [1], [0, 0, 1, 1], [], []>} : vector<16x16xbf16>, vector<16x128xbf16>, vector<16x128xf32> -> vector<16x128xf32>
    %c4 = arith.constant 4 : index
    %c0_82 = arith.constant 0 : index
    %c0_83 = arith.constant 0 : index
    %120 = vector.load %arg1[%c4, %c0_82, %c0_83] : memref<5x16x1xi32, #tpu.memory_space<vmem>>, vector<1x16x1xi32>
    %121 = vector.shape_cast %120 : vector<1x16x1xi32> to vector<16x1xi32>
    %122 = vector.broadcast %121 : vector<16x1xi32> to vector<16x16xi32>
    %123 = arith.cmpi eq, %82, %122 : vector<16x16xi32>
    %cst_84 = arith.constant 1.000000e+00 : f32
    %cst_85 = arith.constant 0.000000e+00 : f32
    %124 = vector.broadcast %cst_84 : f32 to vector<16x16xf32>
    %125 = vector.broadcast %cst_85 : f32 to vector<16x16xf32>
    %126 = arith.select %123, %124, %125 : vector<16x16xi1>, vector<16x16xf32>
    %127 = arith.truncf %126 : vector<16x16xf32> to vector<16x16xbf16>
    %cst_86 = arith.constant dense<0.000000e+00> : vector<16x128xf32>
    %128 = tpu.matmul %127, %83, %cst_86 {dimension_numbers = #tpu.dot_dimension_numbers<[1], [0], [0], [1], [0, 0, 1, 1], [], []>} : vector<16x16xbf16>, vector<16x128xbf16>, vector<16x128xf32> -> vector<16x128xf32>
    %129 = tpu.concatenate %92, %101, %110, %119, %128 in 1 : vector<16x128xf32>, vector<16x128xf32>, vector<16x128xf32>, vector<16x128xf32>, vector<16x128xf32> -> vector<16x640xf32>
    %130 = arith.truncf %129 : vector<16x640xf32> to vector<16x640xbf16>
    %cst_87 = arith.constant dense<0.000000e+00> : vector<16x384xf32>
    %131 = tpu.matmul %130, %69, %cst_87 {dimension_numbers = #tpu.dot_dimension_numbers<[1], [0], [0], [1], [0, 0, 1, 1], [], []>} : vector<16x640xbf16>, vector<640x384xbf16>, vector<16x384xf32> -> vector<16x384xf32>
    %132 = vector.extract_strided_slice %71 {offsets = [0, 0], sizes = [1, 384], strides = [1, 1]} : vector<2x384xf32> to vector<1x384xf32>
    %133 = vector.broadcast %132 : vector<1x384xf32> to vector<16x384xf32>
    %134 = arith.addf %131, %133 : vector<16x384xf32>
    %135 = arith.truncf %81 : vector<16x128xf32> to vector<16x128xbf16>
    %cst_88 = arith.constant dense<0.000000e+00> : vector<16x384xf32>
    %136 = tpu.matmul %135, %70, %cst_88 {dimension_numbers = #tpu.dot_dimension_numbers<[1], [0], [0], [1], [0, 0, 1, 1], [], []>} : vector<16x128xbf16>, vector<128x384xbf16>, vector<16x384xf32> -> vector<16x384xf32>
    %137 = vector.extract_strided_slice %71 {offsets = [1, 0], sizes = [1, 384], strides = [1, 1]} : vector<2x384xf32> to vector<1x384xf32>
    %138 = vector.broadcast %137 : vector<1x384xf32> to vector<16x384xf32>
    %139 = arith.addf %136, %138 : vector<16x384xf32>
    %140 = vector.extract_strided_slice %134 {offsets = [0, 0], sizes = [16, 128], strides = [1, 1]} : vector<16x384xf32> to vector<16x128xf32>
    %141 = vector.extract_strided_slice %139 {offsets = [0, 0], sizes = [16, 128], strides = [1, 1]} : vector<16x384xf32> to vector<16x128xf32>
    %142 = arith.addf %140, %141 : vector<16x128xf32>
    %143 = arith.negf %142 : vector<16x128xf32>
    %144 = math.exp %143 : vector<16x128xf32>
    %cst_89 = arith.constant 1.000000e+00 : f32
    %145 = vector.broadcast %cst_89 : f32 to vector<16x128xf32>
    %146 = arith.addf %145, %144 : vector<16x128xf32>
    %147 = arith.divf %145, %146 : vector<16x128xf32>
    %148 = vector.extract_strided_slice %134 {offsets = [0, 128], sizes = [16, 128], strides = [1, 1]} : vector<16x384xf32> to vector<16x128xf32>
    %149 = vector.extract_strided_slice %139 {offsets = [0, 128], sizes = [16, 128], strides = [1, 1]} : vector<16x384xf32> to vector<16x128xf32>
    %150 = arith.addf %148, %149 : vector<16x128xf32>
    %151 = arith.negf %150 : vector<16x128xf32>
    %152 = math.exp %151 : vector<16x128xf32>
    %cst_90 = arith.constant 1.000000e+00 : f32
    %153 = vector.broadcast %cst_90 : f32 to vector<16x128xf32>
    %154 = arith.addf %153, %152 : vector<16x128xf32>
    %155 = arith.divf %153, %154 : vector<16x128xf32>
    %156 = vector.extract_strided_slice %134 {offsets = [0, 256], sizes = [16, 128], strides = [1, 1]} : vector<16x384xf32> to vector<16x128xf32>
    %157 = vector.extract_strided_slice %139 {offsets = [0, 256], sizes = [16, 128], strides = [1, 1]} : vector<16x384xf32> to vector<16x128xf32>
    %158 = arith.mulf %147, %157 : vector<16x128xf32>
    %159 = arith.addf %156, %158 : vector<16x128xf32>
    %160 = math.tanh %159 : vector<16x128xf32>
    %cst_91 = arith.constant 1.000000e+00 : f32
    %161 = vector.broadcast %cst_91 : f32 to vector<16x128xf32>
    %162 = arith.subf %161, %155 : vector<16x128xf32>
    %163 = arith.mulf %162, %160 : vector<16x128xf32>
    %164 = arith.mulf %155, %81 : vector<16x128xf32>
    %165 = arith.addf %163, %164 : vector<16x128xf32>
    %166 = tpu.concatenate %165, %165 in 1 : vector<16x128xf32>, vector<16x128xf32> -> vector<16x256xf32>
    %167 = arith.truncf %166 : vector<16x256xf32> to vector<16x256xbf16>
    %cst_92 = arith.constant dense<0.000000e+00> : vector<16x256xf32>
    %168 = tpu.matmul %167, %73, %cst_92 {dimension_numbers = #tpu.dot_dimension_numbers<[1], [0], [0], [1], [0, 0, 1, 1], [], []>} : vector<16x256xbf16>, vector<256x256xbf16>, vector<16x256xf32> -> vector<16x256xf32>
    %169 = vector.extract_strided_slice %78 {offsets = [0, 0], sizes = [1, 256], strides = [1, 1]} : vector<3x256xf32> to vector<1x256xf32>
    %170 = vector.broadcast %169 : vector<1x256xf32> to vector<16x256xf32>
    %171 = arith.addf %168, %170 : vector<16x256xf32>
    %cst_93 = arith.constant 0.000000e+00 : f32
    %172 = vector.broadcast %cst_93 : f32 to vector<16x256xf32>
    %173 = arith.maximumf %171, %172 : vector<16x256xf32>
    %174 = arith.truncf %173 : vector<16x256xf32> to vector<16x256xbf16>
    %cst_94 = arith.constant dense<0.000000e+00> : vector<16x256xf32>
    %175 = tpu.matmul %174, %75, %cst_94 {dimension_numbers = #tpu.dot_dimension_numbers<[1], [0], [0], [1], [0, 0, 1, 1], [], []>} : vector<16x256xbf16>, vector<256x256xbf16>, vector<16x256xf32> -> vector<16x256xf32>
    %176 = vector.extract_strided_slice %78 {offsets = [1, 0], sizes = [1, 256], strides = [1, 1]} : vector<3x256xf32> to vector<1x256xf32>
    %177 = vector.broadcast %176 : vector<1x256xf32> to vector<16x256xf32>
    %178 = arith.addf %175, %177 : vector<16x256xf32>
    %cst_95 = arith.constant 0.000000e+00 : f32
    %179 = vector.broadcast %cst_95 : f32 to vector<16x256xf32>
    %180 = arith.maximumf %178, %179 : vector<16x256xf32>
    %181 = arith.truncf %180 : vector<16x256xf32> to vector<16x256xbf16>
    %cst_96 = arith.constant dense<0.000000e+00> : vector<16x256xf32>
    %182 = tpu.matmul %181, %77, %cst_96 {dimension_numbers = #tpu.dot_dimension_numbers<[1], [0], [0], [1], [0, 0, 1, 1], [], []>} : vector<16x256xbf16>, vector<256x256xbf16>, vector<16x256xf32> -> vector<16x256xf32>
    %183 = vector.extract_strided_slice %78 {offsets = [2, 0], sizes = [1, 256], strides = [1, 1]} : vector<3x256xf32> to vector<1x256xf32>
    %184 = vector.broadcast %183 : vector<1x256xf32> to vector<16x256xf32>
    %185 = arith.addf %182, %184 : vector<16x256xf32>
    %cst_97 = arith.constant 0.000000e+00 : f32
    %186 = vector.broadcast %cst_97 : f32 to vector<16x256xf32>
    %187 = arith.maximumf %185, %186 : vector<16x256xf32>
    %188 = arith.truncf %187 : vector<16x256xf32> to vector<16x256xbf16>
    %cst_98 = arith.constant dense<0.000000e+00> : vector<16x256xf32>
    %189 = tpu.matmul %188, %79, %cst_98 {dimension_numbers = #tpu.dot_dimension_numbers<[1], [0], [0], [1], [0, 0, 1, 1], [], []>} : vector<16x256xbf16>, vector<256x256xbf16>, vector<16x256xf32> -> vector<16x256xf32>
    %190 = vector.broadcast %80 : vector<1x256xf32> to vector<16x256xf32>
    %191 = arith.addf %189, %190 : vector<16x256xf32>
    %192 = vector.extract_strided_slice %191 {offsets = [0, 0], sizes = [16, 128], strides = [1, 1]} : vector<16x256xf32> to vector<16x128xf32>
    %c0_99 = arith.constant 0 : index
    %c0_100 = arith.constant 0 : index
    %193 = vector.load %arg21[%c0_99, %c0_100] : memref<16x128xf32, #tpu.memory_space<vmem>>, vector<16x128xf32>
    tpu.vector_store %arg21[%c0_99, %c0_100], %192 {strides = array<i32>} : memref<16x128xf32, #tpu.memory_space<vmem>>, vector<16x128xf32>,
    return
  }
  func.func @transform_0(%arg0: i32) -> (i32, i32, i32) {
    %c0_i32 = arith.constant 0 : i32
    %c0_i32_0 = arith.constant 0 : i32
    %c0_i32_1 = arith.constant 0 : i32
    %c0_i32_2 = arith.constant 0 : i32
    return %c0_i32, %c0_i32_0, %c0_i32_1 : i32, i32, i32
  }
  func.func @transform_1(%arg0: i32) -> (i32, i32) {
    %c0_i32 = arith.constant 0 : i32
    %c0_i32_0 = arith.constant 0 : i32
    %c0_i32_1 = arith.constant 0 : i32
    return %c0_i32, %c0_i32_0 : i32, i32
  }
  func.func @transform_2(%arg0: i32) -> (i32, i32) {
    %c0_i32 = arith.constant 0 : i32
    %c0_i32_0 = arith.constant 0 : i32
    %c0_i32_1 = arith.constant 0 : i32
    return %c0_i32, %c0_i32_0 : i32, i32
  }
  func.func @transform_3(%arg0: i32) -> (i32, i32) {
    %c0_i32 = arith.constant 0 : i32
    %c0_i32_0 = arith.constant 0 : i32
    %c0_i32_1 = arith.constant 0 : i32
    return %c0_i32, %c0_i32_0 : i32, i32
  }
  func.func @transform_4(%arg0: i32) -> (i32, i32) {
    %c0_i32 = arith.constant 0 : i32
    %c0_i32_0 = arith.constant 0 : i32
    %c0_i32_1 = arith.constant 0 : i32
    return %c0_i32, %c0_i32_0 : i32, i32
  }
  func.func @transform_5(%arg0: i32) -> (i32, i32) {
    %c0_i32 = arith.constant 0 : i32
    %c0_i32_0 = arith.constant 0 : i32
    %c0_i32_1 = arith.constant 0 : i32
    return %c0_i32, %c0_i32_0 : i32, i32
  }
  func.func @transform_6(%arg0: i32) -> (i32, i32) {
    %c0_i32 = arith.constant 0 : i32
    %c0_i32_0 = arith.constant 0 : i32
    %c0_i32_1 = arith.constant 0 : i32
    return %c0_i32, %c0_i32_0 : i32, i32
  }
  func.func @transform_7(%arg0: i32) -> (i32, i32) {
    %c0_i32 = arith.constant 0 : i32
    %c0_i32_0 = arith.constant 0 : i32
    %c0_i32_1 = arith.constant 0 : i32
    return %c0_i32, %c0_i32_0 : i32, i32
  }
  func.func @transform_8(%arg0: i32) -> (i32, i32) {
    %c0_i32 = arith.constant 0 : i32
    %c0_i32_0 = arith.constant 0 : i32
    %c0_i32_1 = arith.constant 0 : i32
    return %c0_i32, %c0_i32_0 : i32, i32
  }
  func.func @transform_9(%arg0: i32) -> (i32, i32, i32) {
    %c0_i32 = arith.constant 0 : i32
    %c0_i32_0 = arith.constant 0 : i32
    %c0_i32_1 = arith.constant 0 : i32
    %c0_i32_2 = arith.constant 0 : i32
    return %c0_i32, %c0_i32_0, %c0_i32_1 : i32, i32, i32
  }
  func.func @transform_10(%arg0: i32) -> (i32, i32) {
    %c0_i32 = arith.constant 0 : i32
    %c0_i32_0 = arith.constant 0 : i32
    %c0_i32_1 = arith.constant 0 : i32
    return %c0_i32, %c0_i32_0 : i32, i32
  }
  func.func @transform_11(%arg0: i32) -> (i32, i32) {
    %c0_i32 = arith.constant 0 : i32
    %c0_i32_0 = arith.constant 0 : i32
    %c0_i32_1 = arith.constant 0 : i32
    return %c0_i32, %c0_i32_0 : i32, i32
  }
  func.func @transform_12(%arg0: i32) -> (i32, i32) {
    %c0_i32 = arith.constant 0 : i32
    %c0_i32_0 = arith.constant 0 : i32
    %c0_i32_1 = arith.constant 0 : i32
    return %c0_i32, %c0_i32_0 : i32, i32
  }
  func.func @transform_13(%arg0: i32) -> (i32, i32) {
    %c0_i32 = arith.constant 0 : i32
    %c0_i32_0 = arith.constant 0 : i32
    %c0_i32_1 = arith.constant 0 : i32
    return %c0_i32, %c0_i32_0 : i32, i32
  }
  func.func @transform_14(%arg0: i32) -> (i32, i32) {
    %c0_i32 = arith.constant 0 : i32
    %c0_i32_0 = arith.constant 0 : i32
    %c0_i32_1 = arith.constant 0 : i32
    return %c0_i32, %c0_i32_0 : i32, i32
  }
  func.func @transform_15(%arg0: i32) -> (i32, i32) {
    %c0_i32 = arith.constant 0 : i32
    %c0_i32_0 = arith.constant 0 : i32
    %c0_i32_1 = arith.constant 0 : i32
    return %c0_i32, %c0_i32_0 : i32, i32
  }
  func.func @transform_16(%arg0: i32) -> (i32, i32, i32) {
    %c0_i32 = arith.constant 0 : i32
    %c0_i32_0 = arith.constant 0 : i32
    %c0_i32_1 = arith.constant 0 : i32
    %c0_i32_2 = arith.constant 0 : i32
    return %c0_i32, %c0_i32_0, %c0_i32_1 : i32, i32, i32
  }
  func.func @transform_17(%arg0: i32) -> (i32, i32) {
    %c0_i32 = arith.constant 0 : i32
    %c0_i32_0 = arith.constant 0 : i32
    %c0_i32_1 = arith.constant 0 : i32
    return %c0_i32, %c0_i32_0 : i32, i32
  }
  func.func @transform_18(%arg0: i32) -> (i32, i32) {
    %c0_i32 = arith.constant 0 : i32
    %c0_i32_0 = arith.constant 0 : i32
    %c0_i32_1 = arith.constant 0 : i32
    return %c0_i32, %c0_i32_0 : i32, i32
  }
  func.func @transform_19(%arg0: i32) -> (i32, i32) {
    %c0_i32 = arith.constant 0 : i32
    %c0_i32_0 = arith.constant 0 : i32
    %c0_i32_1 = arith.constant 0 : i32
    return %c0_i32, %c0_i32_0 : i32, i32
  }
  func.func @transform_20(%arg0: i32) -> (i32, i32) {
    %c0_i32 = arith.constant 0 : i32
    %c0_i32_0 = arith.constant 0 : i32
    %c0_i32_1 = arith.constant 0 : i32
    return %c0_i32, %c0_i32_0 : i32, i32
  }
}

</mosaic_0001>

<llo_original>
// kernel: table_detect_forward_pallas.1
$region0: #{table_detect_forward_pallas.1}
  #allocation0 [shape = 'u32[]', space=smem, size = 0x4, offset = 0x4, fixed_abs, tag = 'smem constant byte address 0x4 - core index']
  #allocation1 [shape = 'u32[144,128]{1,0:T(1,128)}', space=vmem, size = 0x12000, scoped, tag = 'internal scratch']
  %s0 = inlined_call_operand.vmem [shape: s32[5,16,1], index: 0, kind: input, shape index: {}]
  %s1 = inlined_call_operand.vmem [shape: f32[16,128], index: 1, kind: input, shape index: {}]
  %s2 = inlined_call_operand.vmem [shape: f32[16,128], index: 2, kind: input, shape index: {}]
  %s3 = inlined_call_operand.vmem [shape: f32[16,128], index: 3, kind: input, shape index: {}]
  %s4 = inlined_call_operand.vmem [shape: bf16[128,384], index: 4, kind: input, shape index: {}]
  %s5 = inlined_call_operand.hbm [shape: bf16[384,384], index: 5, kind: input, shape index: {}]
  %s6 = inlined_call_operand.hbm [shape: bf16[384,128], index: 6, kind: input, shape index: {}]
  %s7 = inlined_call_operand.vmem [shape: f32[3,384], index: 7, kind: input, shape index: {}]
  %s8 = inlined_call_operand.hbm [shape: bf16[256,256], index: 8, kind: input, shape index: {}]
  %s9 = inlined_call_operand.hbm [shape: bf16[2,256,256], index: 9, kind: input, shape index: {}]
  %s10 = inlined_call_operand.vmem [shape: f32[3,256], index: 10, kind: input, shape index: {}]
  %s11 = inlined_call_operand.hbm [shape: bf16[384,128], index: 11, kind: input, shape index: {}]
  %s12 = inlined_call_operand.vmem [shape: f32[1,128], index: 12, kind: input, shape index: {}]
  %s13 = inlined_call_operand.hbm [shape: bf16[640,384], index: 13, kind: input, shape index: {}]
  %s14 = inlined_call_operand.hbm [shape: bf16[128,384], index: 14, kind: input, shape index: {}]
  %s15 = inlined_call_operand.vmem [shape: f32[2,384], index: 15, kind: input, shape index: {}]
  %s16 = inlined_call_operand.hbm [shape: bf16[3,256,256], index: 16, kind: input, shape index: {}]
  %s17 = inlined_call_operand.vmem [shape: f32[3,256], index: 17, kind: input, shape index: {}]
  %s18 = inlined_call_operand.hbm [shape: bf16[256,256], index: 18, kind: input, shape index: {}]
  %s19 = inlined_call_operand.hbm [shape: f32[1,256], index: 19, kind: input, shape index: {}]
  %s20 = inlined_call_operand.hbm [shape: f32[16,128], index: 20, kind: output, shape index: {}]
  %s21 = sld [smem:[#allocation0]]
  $region130: #{table_detect_forward_pallas.1} parent=0
    _
  %s23 = ssub.s32 1, %s21
  %s24 = scalar_select 0, %s23, %s21
  $region1: #{table_detect_forward_pallas.1} parent=0
    #allocation2 [shape = 'u8[294912]{0}', space=vmem, size = 0x48000, scoped, tag = 'input window, operand 5, single buffered']
    #allocation3 [shape = 's32[1]{0}', space=sflag, size = 0x4, scoped, tag = 'scoped memory for table_detect_forward_pallas.1']
    #allocation4 [shape = 's32[1]{0}', space=sflag, size = 0x4, scoped, tag = 'scoped memory for table_detect_forward_pallas.1']
    #allocation5 [shape = 'u8[98304]{0}', space=vmem, size = 0x18000, scoped, tag = 'input window, operand 6, single buffered']
    #allocation6 [shape = 's32[1]{0}', space=sflag, size = 0x4, scoped, tag = 'scoped memory for table_detect_forward_pallas.1']
    #allocation7 [shape = 'u8[131072]{0}', space=vmem, size = 0x20000, scoped, tag = 'input window, operand 8, single buffered']
    #allocation8 [shape = 'u8[262144]{0}', space=vmem, size = 0x40000, scoped, tag = 'input window, operand 9, single buffered']
    #allocation9 [shape = 's32[1]{0}', space=sflag, size = 0x4, scoped, tag = 'scoped memory for table_detect_forward_pallas.1']
    #allocation10 [shape = 'u8[98304]{0}', space=vmem, size = 0x18000, scoped, tag = 'input window, operand 11, single buffered']
    #allocation11 [shape = 'u8[491520]{0}', space=vmem, size = 0x78000, scoped, tag = 'input window, operand 13, single buffered']
    #allocation12 [shape = 's32[1]{0}', space=sflag, size = 0x4, scoped, tag = 'scoped memory for table_detect_forward_pallas.1']
    #allocation13 [shape = 'u8[98304]{0}', space=vmem, size = 0x18000, scoped, tag = 'input window, operand 14, single buffered']
    #allocation14 [shape = 'u8[393216]{0}', space=vmem, size = 0x60000, scoped, tag = 'input window, operand 16, single buffered']
    #allocation15 [shape = 's32[1]{0}', space=sflag, size = 0x4, scoped, tag = 'scoped memory for table_detect_forward_pallas.1']
    #allocation16 [shape = 'u8[131072]{0}', space=vmem, size = 0x20000, scoped, tag = 'input window, operand 18, single buffered']
    #allocation17 [shape = 'u8[1024]{0}', space=vmem, size = 0x400, scoped, tag = 'input window, operand 19, single buffered']
    #allocation18 [shape = 's32[1]{0}', space=sflag, size = 0x4, scoped, tag = 'scoped memory for table_detect_forward_pallas.1']
    #allocation19 [shape = 'u8[8192]{0}', space=vmem, size = 0x2000, scoped, tag = 'output window, operand 0, single buffered']
    %25 = vsyncpa [#allocation3], 0
    %26 = vsyncpa [#allocation6], 0
    %27 = vsyncpa [#allocation9], 0
    %28 = vsyncpa [#allocation12], 0
    %29 = vsyncpa [#allocation15], 0
    %30 = vsyncpa [#allocation18], 0
    %31 = vsyncpa [#allocation4], 0
    // Predicated region
    $region2: #{table_detect_forward_pallas.1} parent=1 // pred_check
      _
    $region3: #{table_detect_forward_pallas.1} parent=1 // pred_check_branch
      %33 = sbr.rel (0) target = $region5
    $region4: #{table_detect_forward_pallas.1} parent=1 // pred_region
      _
    $region5: #{table_detect_forward_pallas.1} parent=1 // pred_fallthru
      _
    // Predicated region
    $region6: #{table_detect_forward_pallas.1} parent=1 // pred_check
      _
    $region7: #{table_detect_forward_pallas.1} parent=1 // pred_check_branch
      %35 = sbr.rel (0) target = $region9
    $region8: #{table_detect_forward_pallas.1} parent=1 // pred_region
      _
    $region9: #{table_detect_forward_pallas.1} parent=1 // pred_fallthru
      _
    // Predicated region
    $region10: #{table_detect_forward_pallas.1} parent=1 // pred_check
      _
    $region11: #{table_detect_forward_pallas.1} parent=1 // pred_check_branch
      %37 = sbr.rel (0) target = $region13
    $region12: #{table_detect_forward_pallas.1} parent=1 // pred_region
      _
    $region13: #{table_detect_forward_pallas.1} parent=1 // pred_fallthru
      _
    // Predicated region
    $region14: #{table_detect_forward_pallas.1} parent=1 // pred_check
      _
    $region15: #{table_detect_forward_pallas.1} parent=1 // pred_check_branch
      %39 = sbr.rel (0) target = $region17
    $region16: #{table_detect_forward_pallas.1} parent=1 // pred_region
      _
    $region17: #{table_detect_forward_pallas.1} parent=1 // pred_fallthru
      _
    // Predicated region
    $region18: #{table_detect_forward_pallas.1} parent=1 // pred_check
      _
    $region19: #{table_detect_forward_pallas.1} parent=1 // pred_check_branch
      %41 = sbr.rel (0) target = $region21
    $region20: #{table_detect_forward_pallas.1} parent=1 // pred_region
      _
    $region21: #{table_detect_forward_pallas.1} parent=1 // pred_fallthru
      _
    // Predicated region
    $region22: #{table_detect_forward_pallas.1} parent=1 // pred_check
      _
    $region23: #{table_detect_forward_pallas.1} parent=1 // pred_check_branch
      %43 = sbr.rel (0) target = $region25
    $region24: #{table_detect_forward_pallas.1} parent=1 // pred_region
      %s45 = ssub.s32 9216, 9216
      %46 = vsyncadd [#allocation3], %s45
      %s47 = sshll.u32 [#allocation2], 4
      %s48 = int_to_ptr.vmem [resolvable:$true] %s47
      %53 = dma.hbm_to_vmem [thread:$0]  %s5, 9216, %s48, [#allocation3], 192, 192, 12
    $region25: #{table_detect_forward_pallas.1} parent=1 // pred_fallthru
      _
    // Predicated region
    $region26: #{table_detect_forward_pallas.1} parent=1 // pred_check
      _
    $region27: #{table_detect_forward_pallas.1} parent=1 // pred_check_branch
      %55 = sbr.rel (0) target = $region29
    $region28: #{table_detect_forward_pallas.1} parent=1 // pred_region
      %s57 = ssub.s32 3072, 3072
      %58 = vsyncadd [#allocation6], %s57
      %s59 = sshll.u32 [#allocation5], 4
      %s60 = int_to_ptr.vmem [resolvable:$true] %s59
      %65 = dma.hbm_to_vmem [thread:$0]  %s6, 3072, %s60, [#allocation6], 64, 64, 4
    $region29: #{table_detect_forward_pallas.1} parent=1 // pred_fallthru
      _
    // Predicated region
    $region30: #{table_detect_forward_pallas.1} parent=1 // pred_check
      _
    $region31: #{table_detect_forward_pallas.1} parent=1 // pred_check_branch
      %67 = sbr.rel (0) target = $region33
    $region32: #{table_detect_forward_pallas.1} parent=1 // pred_region
      _
    $region33: #{table_detect_forward_pallas.1} parent=1 // pred_fallthru
      _
    // Predicated region
    $region34: #{table_detect_forward_pallas.1} parent=1 // pred_check
      _
    $region35: #{table_detect_forward_pallas.1} parent=1 // pred_check_branch
      %69 = sbr.rel (0) target = $region37
    $region36: #{table_detect_forward_pallas.1} parent=1 // pred_region
      %s71 = ssub.s32 4096, 4096
      %72 = vsyncadd [#allocation6], %s71
      %s73 = sshll.u32 [#allocation7], 4
      %s74 = int_to_ptr.vmem [resolvable:$true] %s73
      %79 = dma.hbm_to_vmem [thread:$0]  %s8, 4096, %s74, [#allocation6], 128, 128, 8
    $region37: #{table_detect_forward_pallas.1} parent=1 // pred_fallthru
      _
    // Predicated region
    $region38: #{table_detect_forward_pallas.1} parent=1 // pred_check
      _
    $region39: #{table_detect_forward_pallas.1} parent=1 // pred_check_branch
      %81 = sbr.rel (0) target = $region41
    $region40: #{table_detect_forward_pallas.1} parent=1 // pred_region
      %s83 = ssub.s32 8192, 8192
      %84 = vsyncadd [#allocation9], %s83
      %s85 = sshll.u32 [#allocation8], 4
      %s86 = int_to_ptr.vmem [resolvable:$true] %s85
      %91 = dma.hbm_to_vmem [thread:$0]  %s9, 8192, %s86, [#allocation9], 128, 128, 8
    $region41: #{table_detect_forward_pallas.1} parent=1 // pred_fallthru
      _
    // Predicated region
    $region42: #{table_detect_forward_pallas.1} parent=1 // pred_check
      _
    $region43: #{table_detect_forward_pallas.1} parent=1 // pred_check_branch
      %93 = sbr.rel (0) target = $region45
    $region44: #{table_detect_forward_pallas.1} parent=1 // pred_region
      _
    $region45: #{table_detect_forward_pallas.1} parent=1 // pred_fallthru
      _
    // Predicated region
    $region46: #{table_detect_forward_pallas.1} parent=1 // pred_check
      _
    $region47: #{table_detect_forward_pallas.1} parent=1 // pred_check_branch
      %95 = sbr.rel (0) target = $region49
    $region48: #{table_detect_forward_pallas.1} parent=1 // pred_region
      %s97 = ssub.s32 3072, 3072
      %98 = vsyncadd [#allocation9], %s97
      %s99 = sshll.u32 [#allocation10], 4
      %s100 = int_to_ptr.vmem [resolvable:$true] %s99
      %105 = dma.hbm_to_vmem [thread:$0]  %s11, 3072, %s100, [#allocation9], 64, 64, 4
    $region49: #{table_detect_forward_pallas.1} parent=1 // pred_fallthru
      _
    // Predicated region
    $region50: #{table_detect_forward_pallas.1} parent=1 // pred_check
      _
    $region51: #{table_detect_forward_pallas.1} parent=1 // pred_check_branch
      %107 = sbr.rel (0) target = $region53
    $region52: #{table_detect_forward_pallas.1} parent=1 // pred_region
      _
    $region53: #{table_detect_forward_pallas.1} parent=1 // pred_fallthru
      _
    // Predicated region
    $region54: #{table_detect_forward_pallas.1} parent=1 // pred_check
      _
    $region55: #{table_detect_forward_pallas.1} parent=1 // pred_check_branch
      %109 = sbr.rel (0) target = $region57
    $region56: #{table_detect_forward_pallas.1} parent=1 // pred_region
      %s111 = ssub.s32 15360, 15360
      %112 = vsyncadd [#allocation12], %s111
      %s113 = sshll.u32 [#allocation11], 4
      %s114 = int_to_ptr.vmem [resolvable:$true] %s113
      %119 = dma.hbm_to_vmem [thread:$0]  %s13, 15360, %s114, [#allocation12], 192, 192, 12
    $region57: #{table_detect_forward_pallas.1} parent=1 // pred_fallthru
      _
    // Predicated region
    $region58: #{table_detect_forward_pallas.1} parent=1 // pred_check
      _
    $region59: #{table_detect_forward_pallas.1} parent=1 // pred_check_branch
      %121 = sbr.rel (0) target = $region61
    $region60: #{table_detect_forward_pallas.1} parent=1 // pred_region
      %s123 = ssub.s32 3072, 3072
      %124 = vsyncadd [#allocation12], %s123
      %s125 = sshll.u32 [#allocation13], 4
      %s126 = int_to_ptr.vmem [resolvable:$true] %s125
      %131 = dma.hbm_to_vmem [thread:$0]  %s14, 3072, %s126, [#allocation12], 192, 192, 12
    $region61: #{table_detect_forward_pallas.1} parent=1 // pred_fallthru
      _
    // Predicated region
    $region62: #{table_detect_forward_pallas.1} parent=1 // pred_check
      _
    $region63: #{table_detect_forward_pallas.1} parent=1 // pred_check_branch
      %133 = sbr.rel (0) target = $region65
    $region64: #{table_detect_forward_pallas.1} parent=1 // pred_region
      _
    $region65: #{table_detect_forward_pallas.1} parent=1 // pred_fallthru
      _
    // Predicated region
    $region66: #{table_detect_forward_pallas.1} parent=1 // pred_check
      _
    $region67: #{table_detect_forward_pallas.1} parent=1 // pred_check_branch
      %135 = sbr.rel (0) target = $region69
    $region68: #{table_detect_forward_pallas.1} parent=1 // pred_region
      %s137 = ssub.s32 12288, 12288
      %138 = vsyncadd [#allocation15], %s137
      %s139 = sshll.u32 [#allocation14], 4
      %s140 = int_to_ptr.vmem [resolvable:$true] %s139
      %145 = dma.hbm_to_vmem [thread:$0]  %s16, 12288, %s140, [#allocation15], 128, 128, 8
    $region69: #{table_detect_forward_pallas.1} parent=1 // pred_fallthru
      _
    // Predicated region
    $region70: #{table_detect_forward_pallas.1} parent=1 // pred_check
      _
    $region71: #{table_detect_forward_pallas.1} parent=1 // pred_check_branch
      %147 = sbr.rel (0) target = $region73
    $region72: #{table_detect_forward_pallas.1} parent=1 // pred_region
      _
    $region73: #{table_detect_forward_pallas.1} parent=1 // pred_fallthru
      _
    // Predicated region
    $region74: #{table_detect_forward_pallas.1} parent=1 // pred_check
      _
    $region75: #{table_detect_forward_pallas.1} parent=1 // pred_check_branch
      %149 = sbr.rel (0) target = $region77
    $region76: #{table_detect_forward_pallas.1} parent=1 // pred_region
      %s151 = ssub.s32 4096, 4096
      %152 = vsyncadd [#allocation15], %s151
      %s153 = sshll.u32 [#allocation16], 4
      %s154 = int_to_ptr.vmem [resolvable:$true] %s153
      %159 = dma.hbm_to_vmem [thread:$0]  %s18, 4096, %s154, [#allocation15], 128, 128, 8
    $region77: #{table_detect_forward_pallas.1} parent=1 // pred_fallthru
      _
    // Predicated region
    $region78: #{table_detect_forward_pallas.1} parent=1 // pred_check
      _
    $region79: #{table_detect_forward_pallas.1} parent=1 // pred_check_branch
      %161 = sbr.rel (0) target = $region81
    $region80: #{table_detect_forward_pallas.1} parent=1 // pred_region
      %s163 = ssub.s32 32, 32
      %164 = vsyncadd [#allocation18], %s163
      %s166 = sshll.u32 [#allocation17], 4
      %s167 = int_to_ptr.vmem [resolvable:$true] %s166
      %169 = dma.hbm_to_vmem [thread:$0]  %s19, 32, %s167, [#allocation18]
    $region81: #{table_detect_forward_pallas.1} parent=1 // pred_fallthru
      _
    // Predicated region
    $region82: #{table_detect_forward_pallas.1} parent=1 // pred_check
      _
    $region83: #{table_detect_forward_pallas.1} parent=1 // pred_check_branch
      %171 = sbr.rel (0) target = $region85
    $region84: #{table_detect_forward_pallas.1} parent=1 // pred_region
      %172 = dma.done [#allocation3], 9216
    $region85: #{table_detect_forward_pallas.1} parent=1 // pred_fallthru
      _
    // Predicated region
    $region86: #{table_detect_forward_pallas.1} parent=1 // pred_check
      _
    $region87: #{table_detect_forward_pallas.1} parent=1 // pred_check_branch
      %174 = sbr.rel (0) target = $region89
    $region88: #{table_detect_forward_pallas.1} parent=1 // pred_region
      %175 = dma.done [#allocation6], 3072
    $region89: #{table_detect_forward_pallas.1} parent=1 // pred_fallthru
      _
    // Predicated region
    $region90: #{table_detect_forward_pallas.1} parent=1 // pred_check
      _
    $region91: #{table_detect_forward_pallas.1} parent=1 // pred_check_branch
      %177 = sbr.rel (0) target = $region93
    $region92: #{table_detect_forward_pallas.1} parent=1 // pred_region
      %178 = dma.done [#allocation6], 4096
    $region93: #{table_detect_forward_pallas.1} parent=1 // pred_fallthru
      _
    // Predicated region
    $region94: #{table_detect_forward_pallas.1} parent=1 // pred_check
      _
    $region95: #{table_detect_forward_pallas.1} parent=1 // pred_check_branch
      %180 = sbr.rel (0) target = $region97
    $region96: #{table_detect_forward_pallas.1} parent=1 // pred_region
      %181 = dma.done [#allocation9], 8192
    $region97: #{table_detect_forward_pallas.1} parent=1 // pred_fallthru
      _
    // Predicated region
    $region98: #{table_detect_forward_pallas.1} parent=1 // pred_check
      _
    $region99: #{table_detect_forward_pallas.1} parent=1 // pred_check_branch
      %183 = sbr.rel (0) target = $region101
    $region100: #{table_detect_forward_pallas.1} parent=1 // pred_region
      %184 = dma.done [#allocation9], 3072
    $region101: #{table_detect_forward_pallas.1} parent=1 // pred_fallthru
      _
    // Predicated region
    $region102: #{table_detect_forward_pallas.1} parent=1 // pred_check
      _
    $region103: #{table_detect_forward_pallas.1} parent=1 // pred_check_branch
      %186 = sbr.rel (0) target = $region105
    $region104: #{table_detect_forward_pallas.1} parent=1 // pred_region
      %187 = dma.done [#allocation12], 15360
    $region105: #{table_detect_forward_pallas.1} parent=1 // pred_fallthru
      _
    // Predicated region
    $region106: #{table_detect_forward_pallas.1} parent=1 // pred_check
      _
    $region107: #{table_detect_forward_pallas.1} parent=1 // pred_check_branch
      %189 = sbr.rel (0) target = $region109
    $region108: #{table_detect_forward_pallas.1} parent=1 // pred_region
      %190 = dma.done [#allocation12], 3072
    $region109: #{table_detect_forward_pallas.1} parent=1 // pred_fallthru
      _
    // Predicated region
    $region110: #{table_detect_forward_pallas.1} parent=1 // pred_check
      _
    $region111: #{table_detect_forward_pallas.1} parent=1 // pred_check_branch
      %192 = sbr.rel (0) target = $region113
    $region112: #{table_detect_forward_pallas.1} parent=1 // pred_region
      %193 = dma.done [#allocation15], 12288
    $region113: #{table_detect_forward_pallas.1} parent=1 // pred_fallthru
      _
    // Predicated region
    $region114: #{table_detect_forward_pallas.1} parent=1 // pred_check
      _
    $region115: #{table_detect_forward_pallas.1} parent=1 // pred_check_branch
      %195 = sbr.rel (0) target = $region117
    $region116: #{table_detect_forward_pallas.1} parent=1 // pred_region
      %196 = dma.done [#allocation15], 4096
    $region117: #{table_detect_forward_pallas.1} parent=1 // pred_fallthru
      _
    // Predicated region
    $region118: #{table_detect_forward_pallas.1} parent=1 // pred_check
      _
    $region119: #{table_detect_forward_pallas.1} parent=1 // pred_check_branch
      %198 = sbr.rel (0) target = $region121
    $region120: #{table_detect_forward_pallas.1} parent=1 // pred_region
      %199 = dma.done [#allocation18], 32
    $region121: #{table_detect_forward_pallas.1} parent=1 // pred_fallthru
      _
    %v201 = vld [vmem:[%s1] sm:$0xff]
    %v202 = vld [vmem:[%s1 + $0x8] sm:$0xff]
    %v203 = vld [vmem:[%s2] sm:$0xff]
    %v204 = vld [vmem:[%s2 + $0x8] sm:$0xff]
    %v205 = vld [vmem:[%s3] sm:$0xff]
    %v206 = vld [vmem:[%s3 + $0x8] sm:$0xff]
    %v207 = vld [vmem:[%s4] sm:$0xff]
    %v208 = vld [vmem:[%s4 + $0x8] sm:$0xf]
    %v209 = vld [vmem:[%s4 + $0xc] sm:$0xff]
    %v210 = vld [vmem:[%s4 + $0x14] sm:$0xf]
    %v211 = vld [vmem:[%s4 + $0x18] sm:$0xff]
    %v212 = vld [vmem:[%s4 + $0x20] sm:$0xf]
    %v213 = vld [vmem:[%s4 + $0x24] sm:$0xff]
    %v214 = vld [vmem:[%s4 + $0x2c] sm:$0xf]
    %v215 = vld [vmem:[%s4 + $0x30] sm:$0xff]
    %v216 = vld [vmem:[%s4 + $0x38] sm:$0xf]
    %v217 = vld [vmem:[%s4 + $0x3c] sm:$0xff]
    %v218 = vld [vmem:[%s4 + $0x44] sm:$0xf]
    %v219 = vld [vmem:[%s4 + $0x48] sm:$0xff]
    %v220 = vld [vmem:[%s4 + $0x50] sm:$0xf]
    %v221 = vld [vmem:[%s4 + $0x54] sm:$0xff]
    %v222 = vld [vmem:[%s4 + $0x5c] sm:$0xf]
    %v223 = vld [vmem:[%s4 + $0x60] sm:$0xff]
    %v224 = vld [vmem:[%s4 + $0x68] sm:$0xf]
    %v225 = vld [vmem:[%s4 + $0x6c] sm:$0xff]
    %v226 = vld [vmem:[%s4 + $0x74] sm:$0xf]
    %v227 = vld [vmem:[%s4 + $0x78] sm:$0xff]
    %v228 = vld [vmem:[%s4 + $0x80] sm:$0xf]
    %v229 = vld [vmem:[%s4 + $0x84] sm:$0xff]
    %v230 = vld [vmem:[%s4 + $0x8c] sm:$0xf]
    %v231 = vld [vmem:[%s4 + $0x90] sm:$0xff]
    %v232 = vld [vmem:[%s4 + $0x98] sm:$0xf]
    %v233 = vld [vmem:[%s4 + $0x9c] sm:$0xff]
    %v234 = vld [vmem:[%s4 + $0xa4] sm:$0xf]
    %v235 = vld [vmem:[%s4 + $0xa8] sm:$0xff]
    %v236 = vld [vmem:[%s4 + $0xb0] sm:$0xf]
    %v237 = vld [vmem:[%s4 + $0xb4] sm:$0xff]
    %v238 = vld [vmem:[%s4 + $0xbc] sm:$0xf]
    %v239 = vld [vmem:[#allocation2] sm:$0xff]
    %v240 = vld [vmem:[#allocation2 + $0x8] sm:$0xf]
    %v241 = vld [vmem:[#allocation2 + $0xc] sm:$0xff]
    %v242 = vld [vmem:[#allocation2 + $0x14] sm:$0xf]
    %v243 = vld [vmem:[#allocation2 + $0x18] sm:$0xff]
    %v244 = vld [vmem:[#allocation2 + $0x20] sm:$0xf]
    %v245 = vld [vmem:[#allocation2 + $0x24] sm:$0xff]
    %v246 = vld [vmem:[#allocation2 + $0x2c] sm:$0xf]
    %v247 = vld [vmem:[#allocation2 + $0x30] sm:$0xff]
    %v248 = vld [vmem:[#allocation2 + $0x38] sm:$0xf]
    %v249 = vld [vmem:[#allocation2 + $0x3c] sm:$0xff]
    %v250 = vld [vmem:[#allocation2 + $0x44] sm:$0xf]
    %v251 = vld [vmem:[#allocation2 + $0x48] sm:$0xff]
    %v252 = vld [vmem:[#allocation2 + $0x50] sm:$0xf]
    %v253 = vld [vmem:[#allocation2 + $0x54] sm:$0xff]
    %v254 = vld [vmem:[#allocation2 + $0x5c] sm:$0xf]
    %v255 = vld [vmem:[#allocation2 + $0x60] sm:$0xff]
    %v256 = vld [vmem:[#allocation2 + $0x68] sm:$0xf]
    %v257 = vld [vmem:[#allocation2 + $0x6c] sm:$0xff]
    %v258 = vld [vmem:[#allocation2 + $0x74] sm:$0xf]
    %v259 = vld [vmem:[#allocation2 + $0x78] sm:$0xff]
    %v260 = vld [vmem:[#allocation2 + $0x80] sm:$0xf]
    %v261 = vld [vmem:[#allocation2 + $0x84] sm:$0xff]
    %v262 = vld [vmem:[#allocation2 + $0x8c] sm:$0xf]
    %v263 = vld [vmem:[#allocation2 + $0x90] sm:$0xff]
    %v264 = vld [vmem:[#allocation2 + $0x98] sm:$0xf]
    %v265 = vld [vmem:[#allocation2 + $0x9c] sm:$0xff]
    %v266 = vld [vmem:[#allocation2 + $0xa4] sm:$0xf]
    %v267 = vld [vmem:[#allocation2 + $0xa8] sm:$0xff]
    %v268 = vld [vmem:[#allocation2 + $0xb0] sm:$0xf]
    %v269 = vld [vmem:[#allocation2 + $0xb4] sm:$0xff]
    %v270 = vld [vmem:[#allocation2 + $0xbc] sm:$0xf]
    %v271 = vld [vmem:[#allocation2 + $0xc0] sm:$0xff]
    %v272 = vld [vmem:[#allocation2 + $0xc8] sm:$0xf]
    %v273 = vld [vmem:[#allocation2 + $0xcc] sm:$0xff]
    %v274 = vld [vmem:[#allocation2 + $0xd4] sm:$0xf]
    %v275 = vld [vmem:[#allocation2 + $0xd8] sm:$0xff]
    %v276 = vld [vmem:[#allocation2 + $0xe0] sm:$0xf]
    %v277 = vld [vmem:[#allocation2 + $0xe4] sm:$0xff]
    %v278 = vld [vmem:[#allocation2 + $0xec] sm:$0xf]
    %v279 = vld [vmem:[#allocation2 + $0xf0] sm:$0xff]
    %v280 = vld [vmem:[#allocation2 + $0xf8] sm:$0xf]
    %v281 = vld [vmem:[#allocation2 + $0xfc] sm:$0xff]
    %v282 = vld [vmem:[#allocation2 + $0x104] sm:$0xf]
    %v283 = vld [vmem:[#allocation2 + $0x108] sm:$0xff]
    %v284 = vld [vmem:[#allocation2 + $0x110] sm:$0xf]
    %v285 = vld [vmem:[#allocation2 + $0x114] sm:$0xff]
    %v286 = vld [vmem:[#allocation2 + $0x11c] sm:$0xf]
    %v287 = vld [vmem:[#allocation2 + $0x120] sm:$0xff]
    %v288 = vld [vmem:[#allocation2 + $0x128] sm:$0xf]
    %v289 = vld [vmem:[#allocation2 + $0x12c] sm:$0xff]
    %v290 = vld [vmem:[#allocation2 + $0x134] sm:$0xf]
    %v291 = vld [vmem:[#allocation2 + $0x138] sm:$0xff]
    %v292 = vld [vmem:[#allocation2 + $0x140] sm:$0xf]
    %v293 = vld [vmem:[#allocation2 + $0x144] sm:$0xff]
    %v294 = vld [vmem:[#allocation2 + $0x14c] sm:$0xf]
    %v295 = vld [vmem:[#allocation2 + $0x150] sm:$0xff]
    %v296 = vld [vmem:[#allocation2 + $0x158] sm:$0xf]
    %v297 = vld [vmem:[#allocation2 + $0x15c] sm:$0xff]
    %v298 = vld [vmem:[#allocation2 + $0x164] sm:$0xf]
    %v299 = vld [vmem:[#allocation2 + $0x168] sm:$0xff]
    %v300 = vld [vmem:[#allocation2 + $0x170] sm:$0xf]
    %v301 = vld [vmem:[#allocation2 + $0x174] sm:$0xff]
    %v302 = vld [vmem:[#allocation2 + $0x17c] sm:$0xf]
    %v303 = vld [vmem:[#allocation2 + $0x180] sm:$0xff]
    %v304 = vld [vmem:[#allocation2 + $0x188] sm:$0xf]
    %v305 = vld [vmem:[#allocation2 + $0x18c] sm:$0xff]
    %v306 = vld [vmem:[#allocation2 + $0x194] sm:$0xf]
    %v307 = vld [vmem:[#allocation2 + $0x198] sm:$0xff]
    %v308 = vld [vmem:[#allocation2 + $0x1a0] sm:$0xf]
    %v309 = vld [vmem:[#allocation2 + $0x1a4] sm:$0xff]
    %v310 = vld [vmem:[#allocation2 + $0x1ac] sm:$0xf]
    %v311 = vld [vmem:[#allocation2 + $0x1b0] sm:$0xff]
    %v312 = vld [vmem:[#allocation2 + $0x1b8] sm:$0xf]
    %v313 = vld [vmem:[#allocation2 + $0x1bc] sm:$0xff]
    %v314 = vld [vmem:[#allocation2 + $0x1c4] sm:$0xf]
    %v315 = vld [vmem:[#allocation2 + $0x1c8] sm:$0xff]
    %v316 = vld [vmem:[#allocation2 + $0x1d0] sm:$0xf]
    %v317 = vld [vmem:[#allocation2 + $0x1d4] sm:$0xff]
    %v318 = vld [vmem:[#allocation2 + $0x1dc] sm:$0xf]
    %v319 = vld [vmem:[#allocation2 + $0x1e0] sm:$0xff]
    %v320 = vld [vmem:[#allocation2 + $0x1e8] sm:$0xf]
    %v321 = vld [vmem:[#allocation2 + $0x1ec] sm:$0xff]
    %v322 = vld [vmem:[#allocation2 + $0x1f4] sm:$0xf]
    %v323 = vld [vmem:[#allocation2 + $0x1f8] sm:$0xff]
    %v324 = vld [vmem:[#allocation2 + $0x200] sm:$0xf]
    %v325 = vld [vmem:[#allocation2 + $0x204] sm:$0xff]
    %v326 = vld [vmem:[#allocation2 + $0x20c] sm:$0xf]
    %v327 = vld [vmem:[#allocation2 + $0x210] sm:$0xff]
    %v328 = vld [vmem:[#allocation2 + $0x218] sm:$0xf]
    %v329 = vld [vmem:[#allocation2 + $0x21c] sm:$0xff]
    %v330 = vld [vmem:[#allocation2 + $0x224] sm:$0xf]
    %v331 = vld [vmem:[#allocation2 + $0x228] sm:$0xff]
    %v332 = vld [vmem:[#allocation2 + $0x230] sm:$0xf]
    %v333 = vld [vmem:[#allocation2 + $0x234] sm:$0xff]
    %v334 = vld [vmem:[#allocation2 + $0x23c] sm:$0xf]
    %v335 = vld [vmem:[#allocation5] sm:$0xf]
    %v336 = vld [vmem:[#allocation5 + $0x4] sm:$0xf]
    %v337 = vld [vmem:[#allocation5 + $0x8] sm:$0xf]
    %v338 = vld [vmem:[#allocation5 + $0xc] sm:$0xf]
    %v339 = vld [vmem:[#allocation5 + $0x10] sm:$0xf]
    %v340 = vld [vmem:[#allocation5 + $0x14] sm:$0xf]
    %v341 = vld [vmem:[#allocation5 + $0x18] sm:$0xf]
    %v342 = vld [vmem:[#allocation5 + $0x1c] sm:$0xf]
    %v343 = vld [vmem:[#allocation5 + $0x20] sm:$0xf]
    %v344 = vld [vmem:[#allocation5 + $0x24] sm:$0xf]
    %v345 = vld [vmem:[#allocation5 + $0x28] sm:$0xf]
    %v346 = vld [vmem:[#allocation5 + $0x2c] sm:$0xf]
    %v347 = vld [vmem:[#allocation5 + $0x30] sm:$0xf]
    %v348 = vld [vmem:[#allocation5 + $0x34] sm:$0xf]
    %v349 = vld [vmem:[#allocation5 + $0x38] sm:$0xf]
    %v350 = vld [vmem:[#allocation5 + $0x3c] sm:$0xf]
    %v351 = vld [vmem:[#allocation5 + $0x40] sm:$0xf]
    %v352 = vld [vmem:[#allocation5 + $0x44] sm:$0xf]
    %v353 = vld [vmem:[#allocation5 + $0x48] sm:$0xf]
    %v354 = vld [vmem:[#allocation5 + $0x4c] sm:$0xf]
    %v355 = vld [vmem:[#allocation5 + $0x50] sm:$0xf]
    %v356 = vld [vmem:[#allocation5 + $0x54] sm:$0xf]
    %v357 = vld [vmem:[#allocation5 + $0x58] sm:$0xf]
    %v358 = vld [vmem:[#allocation5 + $0x5c] sm:$0xf]
    %v359 = vld [vmem:[#allocation5 + $0x60] sm:$0xf]
    %v360 = vld [vmem:[#allocation5 + $0x64] sm:$0xf]
    %v361 = vld [vmem:[#allocation5 + $0x68] sm:$0xf]
    %v362 = vld [vmem:[#allocation5 + $0x6c] sm:$0xf]
    %v363 = vld [vmem:[#allocation5 + $0x70] sm:$0xf]
    %v364 = vld [vmem:[#allocation5 + $0x74] sm:$0xf]
    %v365 = vld [vmem:[#allocation5 + $0x78] sm:$0xf]
    %v366 = vld [vmem:[#allocation5 + $0x7c] sm:$0xf]
    %v367 = vld [vmem:[#allocation5 + $0x80] sm:$0xf]
    %v368 = vld [vmem:[#allocation5 + $0x84] sm:$0xf]
    %v369 = vld [vmem:[#allocation5 + $0x88] sm:$0xf]
    %v370 = vld [vmem:[#allocation5 + $0x8c] sm:$0xf]
    %v371 = vld [vmem:[#allocation5 + $0x90] sm:$0xf]
    %v372 = vld [vmem:[#allocation5 + $0x94] sm:$0xf]
    %v373 = vld [vmem:[#allocation5 + $0x98] sm:$0xf]
    %v374 = vld [vmem:[#allocation5 + $0x9c] sm:$0xf]
    %v375 = vld [vmem:[#allocation5 + $0xa0] sm:$0xf]
    %v376 = vld [vmem:[#allocation5 + $0xa4] sm:$0xf]
    %v377 = vld [vmem:[#allocation5 + $0xa8] sm:$0xf]
    %v378 = vld [vmem:[#allocation5 + $0xac] sm:$0xf]
    %v379 = vld [vmem:[#allocation5 + $0xb0] sm:$0xf]
    %v380 = vld [vmem:[#allocation5 + $0xb4] sm:$0xf]
    %v381 = vld [vmem:[#allocation5 + $0xb8] sm:$0xf]
    %v382 = vld [vmem:[#allocation5 + $0xbc] sm:$0xf]
    %v383 = vld [vmem:[%s7] sm:$0x77]
    %v384 = vld [vmem:[%s7 + $0x8] sm:$0x7]
    %v385 = vld [vmem:[#allocation7] sm:$0xff]
    %v386 = vld [vmem:[#allocation7 + $0x8] sm:$0xff]
    %v387 = vld [vmem:[#allocation7 + $0x10] sm:$0xff]
    %v388 = vld [vmem:[#allocation7 + $0x18] sm:$0xff]
    %v389 = vld [vmem:[#allocation7 + $0x20] sm:$0xff]
    %v390 = vld [vmem:[#allocation7 + $0x28] sm:$0xff]
    %v391 = vld [vmem:[#allocation7 + $0x30] sm:$0xff]
    %v392 = vld [vmem:[#allocation7 + $0x38] sm:$0xff]
    %v393 = vld [vmem:[#allocation7 + $0x40] sm:$0xff]
    %v394 = vld [vmem:[#allocation7 + $0x48] sm:$0xff]
    %v395 = vld [vmem:[#allocation7 + $0x50] sm:$0xff]
    %v396 = vld [vmem:[#allocation7 + $0x58] sm:$0xff]
    %v397 = vld [vmem:[#allocation7 + $0x60] sm:$0xff]
    %v398 = vld [vmem:[#allocation7 + $0x68] sm:$0xff]
    %v399 = vld [vmem:[#allocation7 + $0x70] sm:$0xff]
    %v400 = vld [vmem:[#allocation7 + $0x78] sm:$0xff]
    %v401 = vld [vmem:[#allocation7 + $0x80] sm:$0xff]
    %v402 = vld [vmem:[#allocation7 + $0x88] sm:$0xff]
    %v403 = vld [vmem:[#allocation7 + $0x90] sm:$0xff]
    %v404 = vld [vmem:[#allocation7 + $0x98] sm:$0xff]
    %v405 = vld [vmem:[#allocation7 + $0xa0] sm:$0xff]
    %v406 = vld [vmem:[#allocation7 + $0xa8] sm:$0xff]
    %v407 = vld [vmem:[#allocation7 + $0xb0] sm:$0xff]
    %v408 = vld [vmem:[#allocation7 + $0xb8] sm:$0xff]
    %v409 = vld [vmem:[#allocation7 + $0xc0] sm:$0xff]
    %v410 = vld [vmem:[#allocation7 + $0xc8] sm:$0xff]
    %v411 = vld [vmem:[#allocation7 + $0xd0] sm:$0xff]
    %v412 = vld [vmem:[#allocation7 + $0xd8] sm:$0xff]
    %v413 = vld [vmem:[#allocation7 + $0xe0] sm:$0xff]
    %v414 = vld [vmem:[#allocation7 + $0xe8] sm:$0xff]
    %v415 = vld [vmem:[#allocation7 + $0xf0] sm:$0xff]
    %v416 = vld [vmem:[#allocation7 + $0xf8] sm:$0xff]
    %v417 = vld [vmem:[#allocation8] sm:$0xff]
    %v418 = vld [vmem:[#allocation8 + $0x8] sm:$0xff]
    %v419 = vld [vmem:[#allocation8 + $0x10] sm:$0xff]
    %v420 = vld [vmem:[#allocation8 + $0x18] sm:$0xff]
    %v421 = vld [vmem:[#allocation8 + $0x20] sm:$0xff]
    %v422 = vld [vmem:[#allocation8 + $0x28] sm:$0xff]
    %v423 = vld [vmem:[#allocation8 + $0x30] sm:$0xff]
    %v424 = vld [vmem:[#allocation8 + $0x38] sm:$0xff]
    %v425 = vld [vmem:[#allocation8 + $0x40] sm:$0xff]
    %v426 = vld [vmem:[#allocation8 + $0x48] sm:$0xff]
    %v427 = vld [vmem:[#allocation8 + $0x50] sm:$0xff]
    %v428 = vld [vmem:[#allocation8 + $0x58] sm:$0xff]
    %v429 = vld [vmem:[#allocation8 + $0x60] sm:$0xff]
    %v430 = vld [vmem:[#allocation8 + $0x68] sm:$0xff]
    %v431 = vld [vmem:[#allocation8 + $0x70] sm:$0xff]
    %v432 = vld [vmem:[#allocation8 + $0x78] sm:$0xff]
    %v433 = vld [vmem:[#allocation8 + $0x80] sm:$0xff]
    %v434 = vld [vmem:[#allocation8 + $0x88] sm:$0xff]
    %v435 = vld [vmem:[#allocation8 + $0x90] sm:$0xff]
    %v436 = vld [vmem:[#allocation8 + $0x98] sm:$0xff]
    %v437 = vld [vmem:[#allocation8 + $0xa0] sm:$0xff]
    %v438 = vld [vmem:[#allocation8 + $0xa8] sm:$0xff]
    %v439 = vld [vmem:[#allocation8 + $0xb0] sm:$0xff]
    %v440 = vld [vmem:[#allocation8 + $0xb8] sm:$0xff]
    %v441 = vld [vmem:[#allocation8 + $0xc0] sm:$0xff]
    %v442 = vld [vmem:[#allocation8 + $0xc8] sm:$0xff]
    %v443 = vld [vmem:[#allocation8 + $0xd0] sm:$0xff]
    %v444 = vld [vmem:[#allocation8 + $0xd8] sm:$0xff]
    %v445 = vld [vmem:[#allocation8 + $0xe0] sm:$0xff]
    %v446 = vld [vmem:[#allocation8 + $0xe8] sm:$0xff]
    %v447 = vld [vmem:[#allocation8 + $0xf0] sm:$0xff]
    %v448 = vld [vmem:[#allocation8 + $0xf8] sm:$0xff]
    %s449 = scalar_lea.vmem [#allocation8], 256
    %v450 = vld [vmem:[%s449] sm:$0xff]
    %v451 = vld [vmem:[%s449 + $0x8] sm:$0xff]
    %v452 = vld [vmem:[%s449 + $0x10] sm:$0xff]
    %v453 = vld [vmem:[%s449 + $0x18] sm:$0xff]
    %v454 = vld [vmem:[%s449 + $0x20] sm:$0xff]
    %v455 = vld [vmem:[%s449 + $0x28] sm:$0xff]
    %v456 = vld [vmem:[%s449 + $0x30] sm:$0xff]
    %v457 = vld [vmem:[%s449 + $0x38] sm:$0xff]
    %v458 = vld [vmem:[%s449 + $0x40] sm:$0xff]
    %v459 = vld [vmem:[%s449 + $0x48] sm:$0xff]
    %v460 = vld [vmem:[%s449 + $0x50] sm:$0xff]
    %v461 = vld [vmem:[%s449 + $0x58] sm:$0xff]
    %v462 = vld [vmem:[%s449 + $0x60] sm:$0xff]
    %v463 = vld [vmem:[%s449 + $0x68] sm:$0xff]
    %v464 = vld [vmem:[%s449 + $0x70] sm:$0xff]
    %v465 = vld [vmem:[%s449 + $0x78] sm:$0xff]
    %v466 = vld [vmem:[%s449 + $0x80] sm:$0xff]
    %v467 = vld [vmem:[%s449 + $0x88] sm:$0xff]
    %v468 = vld [vmem:[%s449 + $0x90] sm:$0xff]
    %v469 = vld [vmem:[%s449 + $0x98] sm:$0xff]
    %v470 = vld [vmem:[%s449 + $0xa0] sm:$0xff]
    %v471 = vld [vmem:[%s449 + $0xa8] sm:$0xff]
    %v472 = vld [vmem:[%s449 + $0xb0] sm:$0xff]
    %v473 = vld [vmem:[%s449 + $0xb8] sm:$0xff]
    %v474 = vld [vmem:[%s449 + $0xc0] sm:$0xff]
    %v475 = vld [vmem:[%s449 + $0xc8] sm:$0xff]
    %v476 = vld [vmem:[%s449 + $0xd0] sm:$0xff]
    %v477 = vld [vmem:[%s449 + $0xd8] sm:$0xff]
    %v478 = vld [vmem:[%s449 + $0xe0] sm:$0xff]
    %v479 = vld [vmem:[%s449 + $0xe8] sm:$0xff]
    %v480 = vld [vmem:[%s449 + $0xf0] sm:$0xff]
    %v481 = vld [vmem:[%s449 + $0xf8] sm:$0xff]
    %v482 = vld [vmem:[%s10] sm:$0x77]
    %v483 = vld [vmem:[#allocation10] sm:$0xf]
    %v484 = vld [vmem:[#allocation10 + $0x4] sm:$0xf]
    %v485 = vld [vmem:[#allocation10 + $0x8] sm:$0xf]
    %v486 = vld [vmem:[#allocation10 + $0xc] sm:$0xf]
    %v487 = vld [vmem:[#allocation10 + $0x10] sm:$0xf]
    %v488 = vld [vmem:[#allocation10 + $0x14] sm:$0xf]
    %v489 = vld [vmem:[#allocation10 + $0x18] sm:$0xf]
    %v490 = vld [vmem:[#allocation10 + $0x1c] sm:$0xf]
    %v491 = vld [vmem:[#allocation10 + $0x20] sm:$0xf]
    %v492 = vld [vmem:[#allocation10 + $0x24] sm:$0xf]
    %v493 = vld [vmem:[#allocation10 + $0x28] sm:$0xf]
    %v494 = vld [vmem:[#allocation10 + $0x2c] sm:$0xf]
    %v495 = vld [vmem:[#allocation10 + $0x30] sm:$0xf]
    %v496 = vld [vmem:[#allocation10 + $0x34] sm:$0xf]
    %v497 = vld [vmem:[#allocation10 + $0x38] sm:$0xf]
    %v498 = vld [vmem:[#allocation10 + $0x3c] sm:$0xf]
    %v499 = vld [vmem:[#allocation10 + $0x40] sm:$0xf]
    %v500 = vld [vmem:[#allocation10 + $0x44] sm:$0xf]
    %v501 = vld [vmem:[#allocation10 + $0x48] sm:$0xf]
    %v502 = vld [vmem:[#allocation10 + $0x4c] sm:$0xf]
    %v503 = vld [vmem:[#allocation10 + $0x50] sm:$0xf]
    %v504 = vld [vmem:[#allocation10 + $0x54] sm:$0xf]
    %v505 = vld [vmem:[#allocation10 + $0x58] sm:$0xf]
    %v506 = vld [vmem:[#allocation10 + $0x5c] sm:$0xf]
    %v507 = vld [vmem:[#allocation10 + $0x60] sm:$0xf]
    %v508 = vld [vmem:[#allocation10 + $0x64] sm:$0xf]
    %v509 = vld [vmem:[#allocation10 + $0x68] sm:$0xf]
    %v510 = vld [vmem:[#allocation10 + $0x6c] sm:$0xf]
    %v511 = vld [vmem:[#allocation10 + $0x70] sm:$0xf]
    %v512 = vld [vmem:[#allocation10 + $0x74] sm:$0xf]
    %v513 = vld [vmem:[#allocation10 + $0x78] sm:$0xf]
    %v514 = vld [vmem:[#allocation10 + $0x7c] sm:$0xf]
    %v515 = vld [vmem:[#allocation10 + $0x80] sm:$0xf]
    %v516 = vld [vmem:[#allocation10 + $0x84] sm:$0xf]
    %v517 = vld [vmem:[#allocation10 + $0x88] sm:$0xf]
    %v518 = vld [vmem:[#allocation10 + $0x8c] sm:$0xf]
    %v519 = vld [vmem:[#allocation10 + $0x90] sm:$0xf]
    %v520 = vld [vmem:[#allocation10 + $0x94] sm:$0xf]
    %v521 = vld [vmem:[#allocation10 + $0x98] sm:$0xf]
    %v522 = vld [vmem:[#allocation10 + $0x9c] sm:$0xf]
    %v523 = vld [vmem:[#allocation10 + $0xa0] sm:$0xf]
    %v524 = vld [vmem:[#allocation10 + $0xa4] sm:$0xf]
    %v525 = vld [vmem:[#allocation10 + $0xa8] sm:$0xf]
    %v526 = vld [vmem:[#allocation10 + $0xac] sm:$0xf]
    %v527 = vld [vmem:[#allocation10 + $0xb0] sm:$0xf]
    %v528 = vld [vmem:[#allocation10 + $0xb4] sm:$0xf]
    %v529 = vld [vmem:[#allocation10 + $0xb8] sm:$0xf]
    %v530 = vld [vmem:[#allocation10 + $0xbc] sm:$0xf]
    %v531 = vld [vmem:[%s12] sm:$0x1]
    %v532 = vpack.c.bf16 %v202, %v201
    %v535 = vlaneseq
    %v536 = vshrl.u32 %v535, 7
    %v537 = vsub.s32 0, %v536
    %v538 = vrot.slane %v383, %v537
    %v539 = vlaneseq
    %v540 = vshrl.u32 %v539, 7
    %v541 = vsub.s32 4, %v540
    %v542 = vrot.slane %v383, %v541
    %v543 = vlaneseq
    %v544 = vshrl.u32 %v543, 7
    %v545 = vsub.s32 0, %v544
    %v546 = vrot.slane %v384, %v545
    %v550 = vlaneseq
    %v551 = vshrl.u32 %v550, 7
    %v552 = vsub.s32 0, %v551
    %v553 = vrot.slane %v538, %v552
    %v554 = vlaneseq
    %v555 = vshrl.u32 %v554, 7
    %v556 = vsub.s32 0, %v555
    %v557 = vrot.slane %v542, %v556
    %v558 = vlaneseq
    %v559 = vshrl.u32 %v558, 7
    %v560 = vsub.s32 0, %v559
    %v561 = vrot.slane %v546, %v560
    %v594 = vunpack.c.l.b16 %v207
    %v595 = vunpack.c.h.b16 %v207
    %v596 = vunpack.c.l.b16 %v208
    %v597 = vunpack.c.l.b16 %v209
    %v598 = vunpack.c.h.b16 %v209
    %v599 = vunpack.c.l.b16 %v210
    %v600 = vunpack.c.l.b16 %v211
    %v601 = vunpack.c.h.b16 %v211
    %v602 = vunpack.c.l.b16 %v212
    %v603 = vunpack.c.l.b16 %v213
    %v604 = vunpack.c.h.b16 %v213
    %v605 = vunpack.c.l.b16 %v214
    %v606 = vunpack.c.l.b16 %v215
    %v607 = vunpack.c.h.b16 %v215
    %v608 = vunpack.c.l.b16 %v216
    %v609 = vunpack.c.l.b16 %v217
    %v610 = vunpack.c.h.b16 %v217
    %v611 = vunpack.c.l.b16 %v218
    %v612 = vunpack.c.l.b16 %v219
    %v613 = vunpack.c.h.b16 %v219
    %v614 = vunpack.c.l.b16 %v220
    %v615 = vunpack.c.l.b16 %v221
    %v616 = vunpack.c.h.b16 %v221
    %v617 = vunpack.c.l.b16 %v222
    %v618 = vunpack.c.l.b16 %v223
    %v619 = vunpack.c.h.b16 %v223
    %v620 = vunpack.c.l.b16 %v224
    %v621 = vunpack.c.l.b16 %v225
    %v622 = vunpack.c.h.b16 %v225
    %v623 = vunpack.c.l.b16 %v226
    %v624 = vunpack.c.l.b16 %v227
    %v625 = vunpack.c.h.b16 %v227
    %v626 = vunpack.c.l.b16 %v228
    %v627 = vunpack.c.l.b16 %v229
    %v628 = vunpack.c.h.b16 %v229
    %v629 = vunpack.c.l.b16 %v230
    %v630 = vunpack.c.l.b16 %v231
    %v631 = vunpack.c.h.b16 %v231
    %v632 = vunpack.c.l.b16 %v232
    %v633 = vunpack.c.l.b16 %v233
    %v634 = vunpack.c.h.b16 %v233
    %v635 = vunpack.c.l.b16 %v234
    %v636 = vunpack.c.l.b16 %v235
    %v637 = vunpack.c.h.b16 %v235
    %v638 = vunpack.c.l.b16 %v236
    %v639 = vunpack.c.l.b16 %v237
    %v640 = vunpack.c.h.b16 %v237
    %v641 = vunpack.c.l.b16 %v238
    %v642 = vpack.c.b16 %v597, %v594
    %v643 = vpack.c.b16 %v598, %v595
    %v644 = vpack.c.b16 %v599, %v596
    %v645 = vpack.c.b16 %v603, %v600
    %v646 = vpack.c.b16 %v604, %v601
    %v647 = vpack.c.b16 %v605, %v602
    %v648 = vpack.c.b16 %v609, %v606
    %v649 = vpack.c.b16 %v610, %v607
    %v650 = vpack.c.b16 %v611, %v608
    %v651 = vpack.c.b16 %v615, %v612
    %v652 = vpack.c.b16 %v616, %v613
    %v653 = vpack.c.b16 %v617, %v614
    %v654 = vpack.c.b16 %v621, %v618
    %v655 = vpack.c.b16 %v622, %v619
    %v656 = vpack.c.b16 %v623, %v620
    %v657 = vpack.c.b16 %v627, %v624
    %v658 = vpack.c.b16 %v628, %v625
    %v659 = vpack.c.b16 %v629, %v626
    %v660 = vpack.c.b16 %v633, %v630
    %v661 = vpack.c.b16 %v634, %v631
    %v662 = vpack.c.b16 %v635, %v632
    %v663 = vpack.c.b16 %v639, %v636
    %v664 = vpack.c.b16 %v640, %v637
    %v665 = vpack.c.b16 %v641, %v638
    %690 = vmatprep.subr.bf16.mxu0 %v643
    %691 = vmatpush1.bf16.msra.mxu0 %v642
    %692 = vmatprep.subr.bf16.mxu0 %v646
    %693 = vmatpush1.bf16.msra.mxu0 %v645
    %694 = vmatprep.subr.bf16.mxu0 %v649
    %695 = vmatpush1.bf16.msra.mxu0 %v648
    %696 = vmatprep.subr.bf16.mxu0 %v652
    %697 = vmatpush1.bf16.msra.mxu0 %v651
    %698 = vmatprep.subr.bf16.mxu0 %v655
    %699 = vmatpush1.bf16.msra.mxu0 %v654
    %700 = vmatprep.subr.bf16.mxu0 %v658
    %701 = vmatpush1.bf16.msra.mxu0 %v657
    %702 = vmatprep.subr.bf16.mxu0 %v661
    %703 = vmatpush1.bf16.msra.mxu0 %v660
    %704 = vmatprep.subr.bf16.mxu0 %v664
    %705 = vmatpush1.bf16.msra.mxu0 %v663
    %706 = vmatprep.subr.bf16.mxu0 0
    %707 = vmatpush1.bf16.msra.mxu0 0
    %708 = vmatprep.subr.bf16.mxu0 0
    %709 = vmatpush1.bf16.msra.mxu0 0
    %710 = vmatprep.subr.bf16.mxu0 0
    %711 = vmatpush1.bf16.msra.mxu0 0
    %712 = vmatprep.subr.bf16.mxu0 0
    %713 = vmatpush1.bf16.msra.mxu0 0
    %714 = vmatprep.subr.bf16.mxu0 0
    %715 = vmatpush1.bf16.msra.mxu0 0
    %716 = vmatprep.subr.bf16.mxu0 0
    %717 = vmatpush1.bf16.msra.mxu0 0
    %718 = vmatprep.subr.bf16.mxu0 0
    %719 = vmatpush1.bf16.msra.mxu0 0
    %720 = vmatprep.subr.bf16.mxu0 0
    %721 = vmatpush1.bf16.msra.mxu0 0
    %722 = vmatprep.mubr.bf16.mxu0 0
    %723 = vmatmul.mubr.bf16.gmra.mrb[0].mxu0 %v532
    %v724 = vpop.f32.mrb[0].mxu0
    %v725 = vadd.f32 %v553, %v724
    %v726 = vpop.f32.mrb[0].mxu0
    %v727 = vadd.f32 %v557, %v726
    %v728 = vpop.f32.mrb[0].mxu0
    %v729 = vadd.f32 %v553, %v728
    %v730 = vpop.f32.mrb[0].mxu0
    %v731 = vadd.f32 %v557, %v730
    %732 = vdwg.mxu0
    %733 = vmatprep.subr.bf16.mxu0 0
    %734 = vmatpush1.bf16.msra.mxu0 %v644
    %735 = vmatprep.subr.bf16.mxu0 0
    %736 = vmatpush1.bf16.msra.mxu0 %v647
    %737 = vmatprep.subr.bf16.mxu0 0
    %738 = vmatpush1.bf16.msra.mxu0 %v650
    %739 = vmatprep.subr.bf16.mxu0 0
    %740 = vmatpush1.bf16.msra.mxu0 %v653
    %741 = vmatprep.subr.bf16.mxu0 0
    %742 = vmatpush1.bf16.msra.mxu0 %v656
    %743 = vmatprep.subr.bf16.mxu0 0
    %744 = vmatpush1.bf16.msra.mxu0 %v659
    %745 = vmatprep.subr.bf16.mxu0 0
    %746 = vmatpush1.bf16.msra.mxu0 %v662
    %747 = vmatprep.subr.bf16.mxu0 0
    %748 = vmatpush1.bf16.msra.mxu0 %v665
    %749 = vmatprep.subr.bf16.mxu0 0
    %750 = vmatpush1.bf16.msra.mxu0 0
    %751 = vmatprep.subr.bf16.mxu0 0
    %752 = vmatpush1.bf16.msra.mxu0 0
    %753 = vmatprep.subr.bf16.mxu0 0
    %754 = vmatpush1.bf16.msra.mxu0 0
    %755 = vmatprep.subr.bf16.mxu0 0
    %756 = vmatpush1.bf16.msra.mxu0 0
    %757 = vmatprep.subr.bf16.mxu0 0
    %758 = vmatpush1.bf16.msra.mxu0 0
    %759 = vmatprep.subr.bf16.mxu0 0
    %760 = vmatpush1.bf16.msra.mxu0 0
    %761 = vmatprep.subr.bf16.mxu0 0
    %762 = vmatpush1.bf16.msra.mxu0 0
    %763 = vmatprep.subr.bf16.mxu0 0
    %764 = vmatpush1.bf16.msra.mxu0 0
    %765 = vmatprep.mubr.bf16.mxu0 0
    %766 = vmatmul.mubr.bf16.gmra.mrb[0].mxu0 %v532
    %v767 = vpop.f32.mrb[0].mxu0
    %v768 = vadd.f32 %v561, %v767
    %v769 = vpop.f32.mrb[0].mxu0
    %v770 = vpop.f32.mrb[0].mxu0
    %v771 = vadd.f32 %v561, %v770
    %v772 = vpop.f32.mrb[0].mxu0
    %773 = vdwg.mxu0
    %v774 = vmax.f32 %v725, 0.0
    %v775 = vmax.f32 %v727, 0.0
    %v776 = vmax.f32 %v768, 0.0
    %v777 = vmax.f32 %v729, 0.0
    %v778 = vmax.f32 %v731, 0.0
    %v779 = vmax.f32 %v771, 0.0
    %v780 = vpack.c.bf16 %v777, %v774
    %v781 = vpack.c.bf16 %v778, %v775
    %v782 = vpack.c.bf16 %v779, %v776
    %v783 = vlaneseq
    %v784 = vshrl.u32 %v783, 7
    %v785 = vsub.s32 1, %v784
    %v786 = vrot.slane %v383, %v785
    %v787 = vlaneseq
    %v788 = vshrl.u32 %v787, 7
    %v789 = vsub.s32 5, %v788
    %v790 = vrot.slane %v383, %v789
    %v791 = vlaneseq
    %v792 = vshrl.u32 %v791, 7
    %v793 = vsub.s32 1, %v792
    %v794 = vrot.slane %v384, %v793
    %v798 = vlaneseq
    %v799 = vshrl.u32 %v798, 7
    %v800 = vsub.s32 1, %v799
    %v801 = vrot.slane %v786, %v800
    %v802 = vlaneseq
    %v803 = vshrl.u32 %v802, 7
    %v804 = vsub.s32 1, %v803
    %v805 = vrot.slane %v790, %v804
    %v806 = vlaneseq
    %v807 = vshrl.u32 %v806, 7
    %v808 = vsub.s32 1, %v807
    %v809 = vrot.slane %v794, %v808
    %v906 = vunpack.c.l.b16 %v239
    %v907 = vunpack.c.h.b16 %v239
    %v908 = vunpack.c.l.b16 %v240
    %v909 = vunpack.c.l.b16 %v241
    %v910 = vunpack.c.h.b16 %v241
    %v911 = vunpack.c.l.b16 %v242
    %v912 = vunpack.c.l.b16 %v243
    %v913 = vunpack.c.h.b16 %v243
    %v914 = vunpack.c.l.b16 %v244
    %v915 = vunpack.c.l.b16 %v245
    %v916 = vunpack.c.h.b16 %v245
    %v917 = vunpack.c.l.b16 %v246
    %v918 = vunpack.c.l.b16 %v247
    %v919 = vunpack.c.h.b16 %v247
    %v920 = vunpack.c.l.b16 %v248
    %v921 = vunpack.c.l.b16 %v249
    %v922 = vunpack.c.h.b16 %v249
    %v923 = vunpack.c.l.b16 %v250
    %v924 = vunpack.c.l.b16 %v251
    %v925 = vunpack.c.h.b16 %v251
    %v926 = vunpack.c.l.b16 %v252
    %v927 = vunpack.c.l.b16 %v253
    %v928 = vunpack.c.h.b16 %v253
    %v929 = vunpack.c.l.b16 %v254
    %v930 = vunpack.c.l.b16 %v255
    %v931 = vunpack.c.h.b16 %v255
    %v932 = vunpack.c.l.b16 %v256
    %v933 = vunpack.c.l.b16 %v257
    %v934 = vunpack.c.h.b16 %v257
    %v935 = vunpack.c.l.b16 %v258
    %v936 = vunpack.c.l.b16 %v259
    %v937 = vunpack.c.h.b16 %v259
    %v938 = vunpack.c.l.b16 %v260
    %v939 = vunpack.c.l.b16 %v261
    %v940 = vunpack.c.h.b16 %v261
    %v941 = vunpack.c.l.b16 %v262
    %v942 = vunpack.c.l.b16 %v263
    %v943 = vunpack.c.h.b16 %v263
    %v944 = vunpack.c.l.b16 %v264
    %v945 = vunpack.c.l.b16 %v265
    %v946 = vunpack.c.h.b16 %v265
    %v947 = vunpack.c.l.b16 %v266
    %v948 = vunpack.c.l.b16 %v267
    %v949 = vunpack.c.h.b16 %v267
    %v950 = vunpack.c.l.b16 %v268
    %v951 = vunpack.c.l.b16 %v269
    %v952 = vunpack.c.h.b16 %v269
    %v953 = vunpack.c.l.b16 %v270
    %v954 = vunpack.c.l.b16 %v271
    %v955 = vunpack.c.h.b16 %v271
    %v956 = vunpack.c.l.b16 %v272
    %v957 = vunpack.c.l.b16 %v273
    %v958 = vunpack.c.h.b16 %v273
    %v959 = vunpack.c.l.b16 %v274
    %v960 = vunpack.c.l.b16 %v275
    %v961 = vunpack.c.h.b16 %v275
    %v962 = vunpack.c.l.b16 %v276
    %v963 = vunpack.c.l.b16 %v277
    %v964 = vunpack.c.h.b16 %v277
    %v965 = vunpack.c.l.b16 %v278
    %v966 = vunpack.c.l.b16 %v279
    %v967 = vunpack.c.h.b16 %v279
    %v968 = vunpack.c.l.b16 %v280
    %v969 = vunpack.c.l.b16 %v281
    %v970 = vunpack.c.h.b16 %v281
    %v971 = vunpack.c.l.b16 %v282
    %v972 = vunpack.c.l.b16 %v283
    %v973 = vunpack.c.h.b16 %v283
    %v974 = vunpack.c.l.b16 %v284
    %v975 = vunpack.c.l.b16 %v285
    %v976 = vunpack.c.h.b16 %v285
    %v977 = vunpack.c.l.b16 %v286
    %v978 = vunpack.c.l.b16 %v287
    %v979 = vunpack.c.h.b16 %v287
    %v980 = vunpack.c.l.b16 %v288
    %v981 = vunpack.c.l.b16 %v289
    %v982 = vunpack.c.h.b16 %v289
    %v983 = vunpack.c.l.b16 %v290
    %v984 = vunpack.c.l.b16 %v291
    %v985 = vunpack.c.h.b16 %v291
    %v986 = vunpack.c.l.b16 %v292
    %v987 = vunpack.c.l.b16 %v293
    %v988 = vunpack.c.h.b16 %v293
    %v989 = vunpack.c.l.b16 %v294
    %v990 = vunpack.c.l.b16 %v295
    %v991 = vunpack.c.h.b16 %v295
    %v992 = vunpack.c.l.b16 %v296
    %v993 = vunpack.c.l.b16 %v297
    %v994 = vunpack.c.h.b16 %v297
    %v995 = vunpack.c.l.b16 %v298
    %v996 = vunpack.c.l.b16 %v299
    %v997 = vunpack.c.h.b16 %v299
    %v998 = vunpack.c.l.b16 %v300
    %v999 = vunpack.c.l.b16 %v301
    %v1000 = vunpack.c.h.b16 %v301
    %v1001 = vunpack.c.l.b16 %v302
    %v1002 = vunpack.c.l.b16 %v303
    %v1003 = vunpack.c.h.b16 %v303
    %v1004 = vunpack.c.l.b16 %v304
    %v1005 = vunpack.c.l.b16 %v305
    %v1006 = vunpack.c.h.b16 %v305
    %v1007 = vunpack.c.l.b16 %v306
    %v1008 = vunpack.c.l.b16 %v307
    %v1009 = vunpack.c.h.b16 %v307
    %v1010 = vunpack.c.l.b16 %v308
    %v1011 = vunpack.c.l.b16 %v309
    %v1012 = vunpack.c.h.b16 %v309
    %v1013 = vunpack.c.l.b16 %v310
    %v1014 = vunpack.c.l.b16 %v311
    %v1015 = vunpack.c.h.b16 %v311
    %v1016 = vunpack.c.l.b16 %v312
    %v1017 = vunpack.c.l.b16 %v313
    %v1018 = vunpack.c.h.b16 %v313
    %v1019 = vunpack.c.l.b16 %v314
    %v1020 = vunpack.c.l.b16 %v315
    %v1021 = vunpack.c.h.b16 %v315
    %v1022 = vunpack.c.l.b16 %v316
    %v1023 = vunpack.c.l.b16 %v317
    %v1024 = vunpack.c.h.b16 %v317
    %v1025 = vunpack.c.l.b16 %v318
    %v1026 = vunpack.c.l.b16 %v319
    %v1027 = vunpack.c.h.b16 %v319
    %v1028 = vunpack.c.l.b16 %v320
    %v1029 = vunpack.c.l.b16 %v321
    %v1030 = vunpack.c.h.b16 %v321
    %v1031 = vunpack.c.l.b16 %v322
    %v1032 = vunpack.c.l.b16 %v323
    %v1033 = vunpack.c.h.b16 %v323
    %v1034 = vunpack.c.l.b16 %v324
    %v1035 = vunpack.c.l.b16 %v325
    %v1036 = vunpack.c.h.b16 %v325
    %v1037 = vunpack.c.l.b16 %v326
    %v1038 = vunpack.c.l.b16 %v327
    %v1039 = vunpack.c.h.b16 %v327
    %v1040 = vunpack.c.l.b16 %v328
    %v1041 = vunpack.c.l.b16 %v329
    %v1042 = vunpack.c.h.b16 %v329
    %v1043 = vunpack.c.l.b16 %v330
    %v1044 = vunpack.c.l.b16 %v331
    %v1045 = vunpack.c.h.b16 %v331
    %v1046 = vunpack.c.l.b16 %v332
    %v1047 = vunpack.c.l.b16 %v333
    %v1048 = vunpack.c.h.b16 %v333
    %v1049 = vunpack.c.l.b16 %v334
    %v1050 = vpack.c.b16 %v909, %v906
    %v1051 = vpack.c.b16 %v910, %v907
    %v1052 = vpack.c.b16 %v911, %v908
    %v1053 = vpack.c.b16 %v915, %v912
    %v1054 = vpack.c.b16 %v916, %v913
    %v1055 = vpack.c.b16 %v917, %v914
    %v1056 = vpack.c.b16 %v921, %v918
    %v1057 = vpack.c.b16 %v922, %v919
    %v1058 = vpack.c.b16 %v923, %v920
    %v1059 = vpack.c.b16 %v927, %v924
    %v1060 = vpack.c.b16 %v928, %v925
    %v1061 = vpack.c.b16 %v929, %v926
    %v1062 = vpack.c.b16 %v933, %v930
    %v1063 = vpack.c.b16 %v934, %v931
    %v1064 = vpack.c.b16 %v935, %v932
    %v1065 = vpack.c.b16 %v939, %v936
    %v1066 = vpack.c.b16 %v940, %v937
    %v1067 = vpack.c.b16 %v941, %v938
    %v1068 = vpack.c.b16 %v945, %v942
    %v1069 = vpack.c.b16 %v946, %v943
    %v1070 = vpack.c.b16 %v947, %v944
    %v1071 = vpack.c.b16 %v951, %v948
    %v1072 = vpack.c.b16 %v952, %v949
    %v1073 = vpack.c.b16 %v953, %v950
    %v1074 = vpack.c.b16 %v957, %v954
    %v1075 = vpack.c.b16 %v958, %v955
    %v1076 = vpack.c.b16 %v959, %v956
    %v1077 = vpack.c.b16 %v963, %v960
    %v1078 = vpack.c.b16 %v964, %v961
    %v1079 = vpack.c.b16 %v965, %v962
    %v1080 = vpack.c.b16 %v969, %v966
    %v1081 = vpack.c.b16 %v970, %v967
    %v1082 = vpack.c.b16 %v971, %v968
    %v1083 = vpack.c.b16 %v975, %v972
    %v1084 = vpack.c.b16 %v976, %v973
    %v1085 = vpack.c.b16 %v977, %v974
    %v1086 = vpack.c.b16 %v981, %v978
    %v1087 = vpack.c.b16 %v982, %v979
    %v1088 = vpack.c.b16 %v983, %v980
    %v1089 = vpack.c.b16 %v987, %v984
    %v1090 = vpack.c.b16 %v988, %v985
    %v1091 = vpack.c.b16 %v989, %v986
    %v1092 = vpack.c.b16 %v993, %v990
    %v1093 = vpack.c.b16 %v994, %v991
    %v1094 = vpack.c.b16 %v995, %v992
    %v1095 = vpack.c.b16 %v999, %v996
    %v1096 = vpack.c.b16 %v1000, %v997
    %v1097 = vpack.c.b16 %v1001, %v998
    %v1098 = vpack.c.b16 %v1005, %v1002
    %v1099 = vpack.c.b16 %v1006, %v1003
    %v1100 = vpack.c.b16 %v1007, %v1004
    %v1101 = vpack.c.b16 %v1011, %v1008
    %v1102 = vpack.c.b16 %v1012, %v1009
    %v1103 = vpack.c.b16 %v1013, %v1010
    %v1104 = vpack.c.b16 %v1017, %v1014
    %v1105 = vpack.c.b16 %v1018, %v1015
    %v1106 = vpack.c.b16 %v1019, %v1016
    %v1107 = vpack.c.b16 %v1023, %v1020
    %v1108 = vpack.c.b16 %v1024, %v1021
    %v1109 = vpack.c.b16 %v1025, %v1022
    %v1110 = vpack.c.b16 %v1029, %v1026
    %v1111 = vpack.c.b16 %v1030, %v1027
    %v1112 = vpack.c.b16 %v1031, %v1028
    %v1113 = vpack.c.b16 %v1035, %v1032
    %v1114 = vpack.c.b16 %v1036, %v1033
    %v1115 = vpack.c.b16 %v1037, %v1034
    %v1116 = vpack.c.b16 %v1041, %v1038
    %v1117 = vpack.c.b16 %v1042, %v1039
    %v1118 = vpack.c.b16 %v1043, %v1040
    %v1119 = vpack.c.b16 %v1047, %v1044
    %v1120 = vpack.c.b16 %v1048, %v1045
    %v1121 = vpack.c.b16 %v1049, %v1046
    %1194 = vmatprep.subr.bf16.mxu0 %v1051
    %1195 = vmatpush1.bf16.msra.mxu0 %v1050
    %1196 = vmatprep.subr.bf16.mxu0 %v1054
    %1197 = vmatpush1.bf16.msra.mxu0 %v1053
    %1198 = vmatprep.subr.bf16.mxu0 %v1057
    %1199 = vmatpush1.bf16.msra.mxu0 %v1056
    %1200 = vmatprep.subr.bf16.mxu0 %v1060
    %1201 = vmatpush1.bf16.msra.mxu0 %v1059
    %1202 = vmatprep.subr.bf16.mxu0 %v1063
    %1203 = vmatpush1.bf16.msra.mxu0 %v1062
    %1204 = vmatprep.subr.bf16.mxu0 %v1066
    %1205 = vmatpush1.bf16.msra.mxu0 %v1065
    %1206 = vmatprep.subr.bf16.mxu0 %v1069
    %1207 = vmatpush1.bf16.msra.mxu0 %v1068
    %1208 = vmatprep.subr.bf16.mxu0 %v1072
    %1209 = vmatpush1.bf16.msra.mxu0 %v1071
    %1210 = vmatprep.subr.bf16.mxu0 %v1075
    %1211 = vmatpush1.bf16.msra.mxu0 %v1074
    %1212 = vmatprep.subr.bf16.mxu0 %v1078
    %1213 = vmatpush1.bf16.msra.mxu0 %v1077
    %1214 = vmatprep.subr.bf16.mxu0 %v1081
    %1215 = vmatpush1.bf16.msra.mxu0 %v1080
    %1216 = vmatprep.subr.bf16.mxu0 %v1084
    %1217 = vmatpush1.bf16.msra.mxu0 %v1083
    %1218 = vmatprep.subr.bf16.mxu0 %v1087
    %1219 = vmatpush1.bf16.msra.mxu0 %v1086
    %1220 = vmatprep.subr.bf16.mxu0 %v1090
    %1221 = vmatpush1.bf16.msra.mxu0 %v1089
    %1222 = vmatprep.subr.bf16.mxu0 %v1093
    %1223 = vmatpush1.bf16.msra.mxu0 %v1092
    %1224 = vmatprep.subr.bf16.mxu0 %v1096
    %1225 = vmatpush1.bf16.msra.mxu0 %v1095
    %1226 = vmatprep.mubr.bf16.mxu0 %v781
    %1227 = vmatmul.mubr.bf16.gmra.mrb[0].mxu0 %v780
    %v1228 = vpop.f32.mrb[0].mxu0
    %v1229 = vadd.f32 %v801, %v1228
    %v1230 = vpop.f32.mrb[0].mxu0
    %v1231 = vadd.f32 %v805, %v1230
    %v1232 = vpop.f32.mrb[0].mxu0
    %v1233 = vadd.f32 %v801, %v1232
    %v1234 = vpop.f32.mrb[0].mxu0
    %v1235 = vadd.f32 %v805, %v1234
    %1236 = vdwg.mxu0
    %1237 = vmatprep.subr.bf16.mxu0 %v1099
    %1238 = vmatpush1.bf16.msra.mxu0 %v1098
    %1239 = vmatprep.subr.bf16.mxu0 %v1102
    %1240 = vmatpush1.bf16.msra.mxu0 %v1101
    %1241 = vmatprep.subr.bf16.mxu0 %v1105
    %1242 = vmatpush1.bf16.msra.mxu0 %v1104
    %1243 = vmatprep.subr.bf16.mxu0 %v1108
    %1244 = vmatpush1.bf16.msra.mxu0 %v1107
    %1245 = vmatprep.subr.bf16.mxu0 %v1111
    %1246 = vmatpush1.bf16.msra.mxu0 %v1110
    %1247 = vmatprep.subr.bf16.mxu0 %v1114
    %1248 = vmatpush1.bf16.msra.mxu0 %v1113
    %1249 = vmatprep.subr.bf16.mxu0 %v1117
    %1250 = vmatpush1.bf16.msra.mxu0 %v1116
    %1251 = vmatprep.subr.bf16.mxu0 %v1120
    %1252 = vmatpush1.bf16.msra.mxu0 %v1119
    %1253 = vmatprep.subr.bf16.mxu0 0
    %1254 = vmatpush1.bf16.msra.mxu0 0
    %1255 = vmatprep.subr.bf16.mxu0 0
    %1256 = vmatpush1.bf16.msra.mxu0 0
    %1257 = vmatprep.subr.bf16.mxu0 0
    %1258 = vmatpush1.bf16.msra.mxu0 0
    %1259 = vmatprep.subr.bf16.mxu0 0
    %1260 = vmatpush1.bf16.msra.mxu0 0
    %1261 = vmatprep.subr.bf16.mxu0 0
    %1262 = vmatpush1.bf16.msra.mxu0 0
    %1263 = vmatprep.subr.bf16.mxu0 0
    %1264 = vmatpush1.bf16.msra.mxu0 0
    %1265 = vmatprep.subr.bf16.mxu0 0
    %1266 = vmatpush1.bf16.msra.mxu0 0
    %1267 = vmatprep.subr.bf16.mxu0 0
    %1268 = vmatpush1.bf16.msra.mxu0 0
    %1269 = vmatprep.mubr.bf16.mxu0 0
    %1270 = vmatmul.mubr.bf16.gmra.mrb[0].mxu0 %v782
    %v1271 = vpop.f32.mrb[0].mxu0
    %v1272 = vadd.f32 %v1229, %v1271
    %v1273 = vpop.f32.mrb[0].mxu0
    %v1274 = vadd.f32 %v1231, %v1273
    %v1275 = vpop.f32.mrb[0].mxu0
    %v1276 = vadd.f32 %v1233, %v1275
    %v1277 = vpop.f32.mrb[0].mxu0
    %v1278 = vadd.f32 %v1235, %v1277
    %1279 = vdwg.mxu0
    %1280 = vmatprep.subr.bf16.mxu0 0
    %1281 = vmatpush1.bf16.msra.mxu0 %v1052
    %1282 = vmatprep.subr.bf16.mxu0 0
    %1283 = vmatpush1.bf16.msra.mxu0 %v1055
    %1284 = vmatprep.subr.bf16.mxu0 0
    %1285 = vmatpush1.bf16.msra.mxu0 %v1058
    %1286 = vmatprep.subr.bf16.mxu0 0
    %1287 = vmatpush1.bf16.msra.mxu0 %v1061
    %1288 = vmatprep.subr.bf16.mxu0 0
    %1289 = vmatpush1.bf16.msra.mxu0 %v1064
    %1290 = vmatprep.subr.bf16.mxu0 0
    %1291 = vmatpush1.bf16.msra.mxu0 %v1067
    %1292 = vmatprep.subr.bf16.mxu0 0
    %1293 = vmatpush1.bf16.msra.mxu0 %v1070
    %1294 = vmatprep.subr.bf16.mxu0 0
    %1295 = vmatpush1.bf16.msra.mxu0 %v1073
    %1296 = vmatprep.subr.bf16.mxu0 0
    %1297 = vmatpush1.bf16.msra.mxu0 %v1076
    %1298 = vmatprep.subr.bf16.mxu0 0
    %1299 = vmatpush1.bf16.msra.mxu0 %v1079
    %1300 = vmatprep.subr.bf16.mxu0 0
    %1301 = vmatpush1.bf16.msra.mxu0 %v1082
    %1302 = vmatprep.subr.bf16.mxu0 0
    %1303 = vmatpush1.bf16.msra.mxu0 %v1085
    %1304 = vmatprep.subr.bf16.mxu0 0
    %1305 = vmatpush1.bf16.msra.mxu0 %v1088
    %1306 = vmatprep.subr.bf16.mxu0 0
    %1307 = vmatpush1.bf16.msra.mxu0 %v1091
    %1308 = vmatprep.subr.bf16.mxu0 0
    %1309 = vmatpush1.bf16.msra.mxu0 %v1094
    %1310 = vmatprep.subr.bf16.mxu0 0
    %1311 = vmatpush1.bf16.msra.mxu0 %v1097
    %1312 = vmatprep.mubr.bf16.mxu0 %v781
    %1313 = vmatmul.mubr.bf16.gmra.mrb[0].mxu0 %v780
    %v1314 = vpop.f32.mrb[0].mxu0
    %v1315 = vadd.f32 %v809, %v1314
    %v1316 = vpop.f32.mrb[0].mxu0
    %v1317 = vpop.f32.mrb[0].mxu0
    %v1318 = vadd.f32 %v809, %v1317
    %v1319 = vpop.f32.mrb[0].mxu0
    %1320 = vdwg.mxu0
    %1321 = vmatprep.subr.bf16.mxu0 0
    %1322 = vmatpush1.bf16.msra.mxu0 %v1100
    %1323 = vmatprep.subr.bf16.mxu0 0
    %1324 = vmatpush1.bf16.msra.mxu0 %v1103
    %1325 = vmatprep.subr.bf16.mxu0 0
    %1326 = vmatpush1.bf16.msra.mxu0 %v1106
    %1327 = vmatprep.subr.bf16.mxu0 0
    %1328 = vmatpush1.bf16.msra.mxu0 %v1109
    %1329 = vmatprep.subr.bf16.mxu0 0
    %1330 = vmatpush1.bf16.msra.mxu0 %v1112
    %1331 = vmatprep.subr.bf16.mxu0 0
    %1332 = vmatpush1.bf16.msra.mxu0 %v1115
    %1333 = vmatprep.subr.bf16.mxu0 0
    %1334 = vmatpush1.bf16.msra.mxu0 %v1118
    %1335 = vmatprep.subr.bf16.mxu0 0
    %1336 = vmatpush1.bf16.msra.mxu0 %v1121
    %1337 = vmatprep.subr.bf16.mxu0 0
    %1338 = vmatpush1.bf16.msra.mxu0 0
    %1339 = vmatprep.subr.bf16.mxu0 0
    %1340 = vmatpush1.bf16.msra.mxu0 0
    %1341 = vmatprep.subr.bf16.mxu0 0
    %1342 = vmatpush1.bf16.msra.mxu0 0
    %1343 = vmatprep.subr.bf16.mxu0 0
    %1344 = vmatpush1.bf16.msra.mxu0 0
    %1345 = vmatprep.subr.bf16.mxu0 0
    %1346 = vmatpush1.bf16.msra.mxu0 0
    %1347 = vmatprep.subr.bf16.mxu0 0
    %1348 = vmatpush1.bf16.msra.mxu0 0
    %1349 = vmatprep.subr.bf16.mxu0 0
    %1350 = vmatpush1.bf16.msra.mxu0 0
    %1351 = vmatprep.subr.bf16.mxu0 0
    %1352 = vmatpush1.bf16.msra.mxu0 0
    %1353 = vmatprep.mubr.bf16.mxu0 0
    %1354 = vmatmul.mubr.bf16.gmra.mrb[0].mxu0 %v782
    %v1355 = vpop.f32.mrb[0].mxu0
    %v1356 = vadd.f32 %v1315, %v1355
    %v1357 = vpop.f32.mrb[0].mxu0
    %v1358 = vpop.f32.mrb[0].mxu0
    %v1359 = vadd.f32 %v1318, %v1358
    %v1360 = vpop.f32.mrb[0].mxu0
    %1361 = vdwg.mxu0
    %v1362 = vmax.f32 %v1272, 0.0
    %v1363 = vmax.f32 %v1274, 0.0
    %v1364 = vmax.f32 %v1356, 0.0
    %v1365 = vmax.f32 %v1276, 0.0
    %v1366 = vmax.f32 %v1278, 0.0
    %v1367 = vmax.f32 %v1359, 0.0
    %v1368 = vpack.c.bf16 %v1365, %v1362
    %v1369 = vpack.c.bf16 %v1366, %v1363
    %v1370 = vpack.c.bf16 %v1367, %v1364
    %v1371 = vlaneseq
    %v1372 = vshrl.u32 %v1371, 7
    %v1373 = vsub.s32 2, %v1372
    %v1374 = vrot.slane %v383, %v1373
    %v1423 = vunpack.c.l.b16 %v335
    %v1424 = vunpack.c.l.b16 %v336
    %v1425 = vunpack.c.l.b16 %v337
    %v1426 = vunpack.c.l.b16 %v338
    %v1427 = vunpack.c.l.b16 %v339
    %v1428 = vunpack.c.l.b16 %v340
    %v1429 = vunpack.c.l.b16 %v341
    %v1430 = vunpack.c.l.b16 %v342
    %v1431 = vunpack.c.l.b16 %v343
    %v1432 = vunpack.c.l.b16 %v344
    %v1433 = vunpack.c.l.b16 %v345
    %v1434 = vunpack.c.l.b16 %v346
    %v1435 = vunpack.c.l.b16 %v347
    %v1436 = vunpack.c.l.b16 %v348
    %v1437 = vunpack.c.l.b16 %v349
    %v1438 = vunpack.c.l.b16 %v350
    %v1439 = vunpack.c.l.b16 %v351
    %v1440 = vunpack.c.l.b16 %v352
    %v1441 = vunpack.c.l.b16 %v353
    %v1442 = vunpack.c.l.b16 %v354
    %v1443 = vunpack.c.l.b16 %v355
    %v1444 = vunpack.c.l.b16 %v356
    %v1445 = vunpack.c.l.b16 %v357
    %v1446 = vunpack.c.l.b16 %v358
    %v1447 = vunpack.c.l.b16 %v359
    %v1448 = vunpack.c.l.b16 %v360
    %v1449 = vunpack.c.l.b16 %v361
    %v1450 = vunpack.c.l.b16 %v362
    %v1451 = vunpack.c.l.b16 %v363
    %v1452 = vunpack.c.l.b16 %v364
    %v1453 = vunpack.c.l.b16 %v365
    %v1454 = vunpack.c.l.b16 %v366
    %v1455 = vunpack.c.l.b16 %v367
    %v1456 = vunpack.c.l.b16 %v368
    %v1457 = vunpack.c.l.b16 %v369
    %v1458 = vunpack.c.l.b16 %v370
    %v1459 = vunpack.c.l.b16 %v371
    %v1460 = vunpack.c.l.b16 %v372
    %v1461 = vunpack.c.l.b16 %v373
    %v1462 = vunpack.c.l.b16 %v374
    %v1463 = vunpack.c.l.b16 %v375
    %v1464 = vunpack.c.l.b16 %v376
    %v1465 = vunpack.c.l.b16 %v377
    %v1466 = vunpack.c.l.b16 %v378
    %v1467 = vunpack.c.l.b16 %v379
    %v1468 = vunpack.c.l.b16 %v380
    %v1469 = vunpack.c.l.b16 %v381
    %v1470 = vunpack.c.l.b16 %v382
    %v1471 = vpack.c.b16 %v1424, %v1423
    %v1472 = vpack.c.b16 %v1426, %v1425
    %v1473 = vpack.c.b16 %v1428, %v1427
    %v1474 = vpack.c.b16 %v1430, %v1429
    %v1475 = vpack.c.b16 %v1432, %v1431
    %v1476 = vpack.c.b16 %v1434, %v1433
    %v1477 = vpack.c.b16 %v1436, %v1435
    %v1478 = vpack.c.b16 %v1438, %v1437
    %v1479 = vpack.c.b16 %v1440, %v1439
    %v1480 = vpack.c.b16 %v1442, %v1441
    %v1481 = vpack.c.b16 %v1444, %v1443
    %v1482 = vpack.c.b16 %v1446, %v1445
    %v1483 = vpack.c.b16 %v1448, %v1447
    %v1484 = vpack.c.b16 %v1450, %v1449
    %v1485 = vpack.c.b16 %v1452, %v1451
    %v1486 = vpack.c.b16 %v1454, %v1453
    %v1487 = vpack.c.b16 %v1456, %v1455
    %v1488 = vpack.c.b16 %v1458, %v1457
    %v1489 = vpack.c.b16 %v1460, %v1459
    %v1490 = vpack.c.b16 %v1462, %v1461
    %v1491 = vpack.c.b16 %v1464, %v1463
    %v1492 = vpack.c.b16 %v1466, %v1465
    %v1493 = vpack.c.b16 %v1468, %v1467
    %v1494 = vpack.c.b16 %v1470, %v1469
    %1519 = vmatprep.subr.bf16.mxu0 0
    %1520 = vmatpush1.bf16.msra.mxu0 %v1471
    %1521 = vmatprep.subr.bf16.mxu0 0
    %1522 = vmatpush1.bf16.msra.mxu0 %v1472
    %1523 = vmatprep.subr.bf16.mxu0 0
    %1524 = vmatpush1.bf16.msra.mxu0 %v1473
    %1525 = vmatprep.subr.bf16.mxu0 0
    %1526 = vmatpush1.bf16.msra.mxu0 %v1474
    %1527 = vmatprep.subr.bf16.mxu0 0
    %1528 = vmatpush1.bf16.msra.mxu0 %v1475
    %1529 = vmatprep.subr.bf16.mxu0 0
    %1530 = vmatpush1.bf16.msra.mxu0 %v1476
    %1531 = vmatprep.subr.bf16.mxu0 0
    %1532 = vmatpush1.bf16.msra.mxu0 %v1477
    %1533 = vmatprep.subr.bf16.mxu0 0
    %1534 = vmatpush1.bf16.msra.mxu0 %v1478
    %1535 = vmatprep.subr.bf16.mxu0 0
    %1536 = vmatpush1.bf16.msra.mxu0 %v1479
    %1537 = vmatprep.subr.bf16.mxu0 0
    %1538 = vmatpush1.bf16.msra.mxu0 %v1480
    %1539 = vmatprep.subr.bf16.mxu0 0
    %1540 = vmatpush1.bf16.msra.mxu0 %v1481
    %1541 = vmatprep.subr.bf16.mxu0 0
    %1542 = vmatpush1.bf16.msra.mxu0 %v1482
    %1543 = vmatprep.subr.bf16.mxu0 0
    %1544 = vmatpush1.bf16.msra.mxu0 %v1483
    %1545 = vmatprep.subr.bf16.mxu0 0
    %1546 = vmatpush1.bf16.msra.mxu0 %v1484
    %1547 = vmatprep.subr.bf16.mxu0 0
    %1548 = vmatpush1.bf16.msra.mxu0 %v1485
    %1549 = vmatprep.subr.bf16.mxu0 0
    %1550 = vmatpush1.bf16.msra.mxu0 %v1486
    %1551 = vmatprep.mubr.bf16.mxu0 %v1369
    %1552 = vmatmul.mubr.bf16.gmra.mrb[0].mxu0 %v1368
    %v1553 = vpop.f32.mrb[0].mxu0
    %v1554 = vadd.f32 %v1374, %v1553
    %v1555 = vpop.f32.mrb[0].mxu0
    %v1556 = vpop.f32.mrb[0].mxu0
    %v1557 = vadd.f32 %v1374, %v1556
    %v1558 = vpop.f32.mrb[0].mxu0
    %1559 = vdwg.mxu0
    %1560 = vmatprep.subr.bf16.mxu0 0
    %1561 = vmatpush1.bf16.msra.mxu0 %v1487
    %1562 = vmatprep.subr.bf16.mxu0 0
    %1563 = vmatpush1.bf16.msra.mxu0 %v1488
    %1564 = vmatprep.subr.bf16.mxu0 0
    %1565 = vmatpush1.bf16.msra.mxu0 %v1489
    %1566 = vmatprep.subr.bf16.mxu0 0
    %1567 = vmatpush1.bf16.msra.mxu0 %v1490
    %1568 = vmatprep.subr.bf16.mxu0 0
    %1569 = vmatpush1.bf16.msra.mxu0 %v1491
    %1570 = vmatprep.subr.bf16.mxu0 0
    %1571 = vmatpush1.bf16.msra.mxu0 %v1492
    %1572 = vmatprep.subr.bf16.mxu0 0
    %1573 = vmatpush1.bf16.msra.mxu0 %v1493
    %1574 = vmatprep.subr.bf16.mxu0 0
    %1575 = vmatpush1.bf16.msra.mxu0 %v1494
    %1576 = vmatprep.subr.bf16.mxu0 0
    %1577 = vmatpush1.bf16.msra.mxu0 0
    %1578 = vmatprep.subr.bf16.mxu0 0
    %1579 = vmatpush1.bf16.msra.mxu0 0
    %1580 = vmatprep.subr.bf16.mxu0 0
    %1581 = vmatpush1.bf16.msra.mxu0 0
    %1582 = vmatprep.subr.bf16.mxu0 0
    %1583 = vmatpush1.bf16.msra.mxu0 0
    %1584 = vmatprep.subr.bf16.mxu0 0
    %1585 = vmatpush1.bf16.msra.mxu0 0
    %1586 = vmatprep.subr.bf16.mxu0 0
    %1587 = vmatpush1.bf16.msra.mxu0 0
    %1588 = vmatprep.subr.bf16.mxu0 0
    %1589 = vmatpush1.bf16.msra.mxu0 0
    %1590 = vmatprep.subr.bf16.mxu0 0
    %1591 = vmatpush1.bf16.msra.mxu0 0
    %1592 = vmatprep.mubr.bf16.mxu0 0
    %1593 = vmatmul.mubr.bf16.gmra.mrb[0].mxu0 %v1370
    %v1594 = vpop.f32.mrb[0].mxu0
    %v1595 = vadd.f32 %v1554, %v1594
    %v1596 = vpop.f32.mrb[0].mxu0
    %v1597 = vpop.f32.mrb[0].mxu0
    %v1598 = vadd.f32 %v1557, %v1597
    %v1599 = vpop.f32.mrb[0].mxu0
    %1600 = vdwg.mxu0
    %v1601 = vpack.c.bf16 %v204, %v203
    %v1602 = vpack.c.bf16 %v206, %v205
    %v1604 = vlaneseq
    %v1605 = vshrl.u32 %v1604, 7
    %v1606 = vsub.s32 0, %v1605
    %v1607 = vrot.slane %v482, %v1606
    %v1608 = vlaneseq
    %v1609 = vshrl.u32 %v1608, 7
    %v1610 = vsub.s32 4, %v1609
    %v1611 = vrot.slane %v482, %v1610
    %v1614 = vlaneseq
    %v1615 = vshrl.u32 %v1614, 7
    %v1616 = vsub.s32 0, %v1615
    %v1617 = vrot.slane %v1607, %v1616
    %v1618 = vlaneseq
    %v1619 = vshrl.u32 %v1618, 7
    %v1620 = vsub.s32 0, %v1619
    %v1621 = vrot.slane %v1611, %v1620
    %v1654 = vunpack.c.l.b16 %v385
    %v1655 = vunpack.c.h.b16 %v385
    %v1656 = vunpack.c.l.b16 %v386
    %v1657 = vunpack.c.h.b16 %v386
    %v1658 = vunpack.c.l.b16 %v387
    %v1659 = vunpack.c.h.b16 %v387
    %v1660 = vunpack.c.l.b16 %v388
    %v1661 = vunpack.c.h.b16 %v388
    %v1662 = vunpack.c.l.b16 %v389
    %v1663 = vunpack.c.h.b16 %v389
    %v1664 = vunpack.c.l.b16 %v390
    %v1665 = vunpack.c.h.b16 %v390
    %v1666 = vunpack.c.l.b16 %v391
    %v1667 = vunpack.c.h.b16 %v391
    %v1668 = vunpack.c.l.b16 %v392
    %v1669 = vunpack.c.h.b16 %v392
    %v1670 = vunpack.c.l.b16 %v393
    %v1671 = vunpack.c.h.b16 %v393
    %v1672 = vunpack.c.l.b16 %v394
    %v1673 = vunpack.c.h.b16 %v394
    %v1674 = vunpack.c.l.b16 %v395
    %v1675 = vunpack.c.h.b16 %v395
    %v1676 = vunpack.c.l.b16 %v396
    %v1677 = vunpack.c.h.b16 %v396
    %v1678 = vunpack.c.l.b16 %v397
    %v1679 = vunpack.c.h.b16 %v397
    %v1680 = vunpack.c.l.b16 %v398
    %v1681 = vunpack.c.h.b16 %v398
    %v1682 = vunpack.c.l.b16 %v399
    %v1683 = vunpack.c.h.b16 %v399
    %v1684 = vunpack.c.l.b16 %v400
    %v1685 = vunpack.c.h.b16 %v400
    %v1686 = vunpack.c.l.b16 %v401
    %v1687 = vunpack.c.h.b16 %v401
    %v1688 = vunpack.c.l.b16 %v402
    %v1689 = vunpack.c.h.b16 %v402
    %v1690 = vunpack.c.l.b16 %v403
    %v1691 = vunpack.c.h.b16 %v403
    %v1692 = vunpack.c.l.b16 %v404
    %v1693 = vunpack.c.h.b16 %v404
    %v1694 = vunpack.c.l.b16 %v405
    %v1695 = vunpack.c.h.b16 %v405
    %v1696 = vunpack.c.l.b16 %v406
    %v1697 = vunpack.c.h.b16 %v406
    %v1698 = vunpack.c.l.b16 %v407
    %v1699 = vunpack.c.h.b16 %v407
    %v1700 = vunpack.c.l.b16 %v408
    %v1701 = vunpack.c.h.b16 %v408
    %v1702 = vunpack.c.l.b16 %v409
    %v1703 = vunpack.c.h.b16 %v409
    %v1704 = vunpack.c.l.b16 %v410
    %v1705 = vunpack.c.h.b16 %v410
    %v1706 = vunpack.c.l.b16 %v411
    %v1707 = vunpack.c.h.b16 %v411
    %v1708 = vunpack.c.l.b16 %v412
    %v1709 = vunpack.c.h.b16 %v412
    %v1710 = vunpack.c.l.b16 %v413
    %v1711 = vunpack.c.h.b16 %v413
    %v1712 = vunpack.c.l.b16 %v414
    %v1713 = vunpack.c.h.b16 %v414
    %v1714 = vunpack.c.l.b16 %v415
    %v1715 = vunpack.c.h.b16 %v415
    %v1716 = vunpack.c.l.b16 %v416
    %v1717 = vunpack.c.h.b16 %v416
    %v1718 = vpack.c.b16 %v1656, %v1654
    %v1719 = vpack.c.b16 %v1657, %v1655
    %v1720 = vpack.c.b16 %v1660, %v1658
    %v1721 = vpack.c.b16 %v1661, %v1659
    %v1722 = vpack.c.b16 %v1664, %v1662
    %v1723 = vpack.c.b16 %v1665, %v1663
    %v1724 = vpack.c.b16 %v1668, %v1666
    %v1725 = vpack.c.b16 %v1669, %v1667
    %v1726 = vpack.c.b16 %v1672, %v1670
    %v1727 = vpack.c.b16 %v1673, %v1671
    %v1728 = vpack.c.b16 %v1676, %v1674
    %v1729 = vpack.c.b16 %v1677, %v1675
    %v1730 = vpack.c.b16 %v1680, %v1678
    %v1731 = vpack.c.b16 %v1681, %v1679
    %v1732 = vpack.c.b16 %v1684, %v1682
    %v1733 = vpack.c.b16 %v1685, %v1683
    %v1734 = vpack.c.b16 %v1688, %v1686
    %v1735 = vpack.c.b16 %v1689, %v1687
    %v1736 = vpack.c.b16 %v1692, %v1690
    %v1737 = vpack.c.b16 %v1693, %v1691
    %v1738 = vpack.c.b16 %v1696, %v1694
    %v1739 = vpack.c.b16 %v1697, %v1695
    %v1740 = vpack.c.b16 %v1700, %v1698
    %v1741 = vpack.c.b16 %v1701, %v1699
    %v1742 = vpack.c.b16 %v1704, %v1702
    %v1743 = vpack.c.b16 %v1705, %v1703
    %v1744 = vpack.c.b16 %v1708, %v1706
    %v1745 = vpack.c.b16 %v1709, %v1707
    %v1746 = vpack.c.b16 %v1712, %v1710
    %v1747 = vpack.c.b16 %v1713, %v1711
    %v1748 = vpack.c.b16 %v1716, %v1714
    %v1749 = vpack.c.b16 %v1717, %v1715
    %1782 = vmatprep.subr.bf16.mxu0 %v1719
    %1783 = vmatpush1.bf16.msra.mxu0 %v1718
    %1784 = vmatprep.subr.bf16.mxu0 %v1721
    %1785 = vmatpush1.bf16.msra.mxu0 %v1720
    %1786 = vmatprep.subr.bf16.mxu0 %v1723
    %1787 = vmatpush1.bf16.msra.mxu0 %v1722
    %1788 = vmatprep.subr.bf16.mxu0 %v1725
    %1789 = vmatpush1.bf16.msra.mxu0 %v1724
    %1790 = vmatprep.subr.bf16.mxu0 %v1727
    %1791 = vmatpush1.bf16.msra.mxu0 %v1726
    %1792 = vmatprep.subr.bf16.mxu0 %v1729
    %1793 = vmatpush1.bf16.msra.mxu0 %v1728
    %1794 = vmatprep.subr.bf16.mxu0 %v1731
    %1795 = vmatpush1.bf16.msra.mxu0 %v1730
    %1796 = vmatprep.subr.bf16.mxu0 %v1733
    %1797 = vmatpush1.bf16.msra.mxu0 %v1732
    %1798 = vmatprep.subr.bf16.mxu0 %v1735
    %1799 = vmatpush1.bf16.msra.mxu0 %v1734
    %1800 = vmatprep.subr.bf16.mxu0 %v1737
    %1801 = vmatpush1.bf16.msra.mxu0 %v1736
    %1802 = vmatprep.subr.bf16.mxu0 %v1739
    %1803 = vmatpush1.bf16.msra.mxu0 %v1738
    %1804 = vmatprep.subr.bf16.mxu0 %v1741
    %1805 = vmatpush1.bf16.msra.mxu0 %v1740
    %1806 = vmatprep.subr.bf16.mxu0 %v1743
    %1807 = vmatpush1.bf16.msra.mxu0 %v1742
    %1808 = vmatprep.subr.bf16.mxu0 %v1745
    %1809 = vmatpush1.bf16.msra.mxu0 %v1744
    %1810 = vmatprep.subr.bf16.mxu0 %v1747
    %1811 = vmatpush1.bf16.msra.mxu0 %v1746
    %1812 = vmatprep.subr.bf16.mxu0 %v1749
    %1813 = vmatpush1.bf16.msra.mxu0 %v1748
    %1814 = vmatprep.mubr.bf16.mxu0 %v1602
    %1815 = vmatmul.mubr.bf16.gmra.mrb[0].mxu0 %v1601
    %v1816 = vpop.f32.mrb[0].mxu0
    %v1817 = vadd.f32 %v1617, %v1816
    %v1818 = vpop.f32.mrb[0].mxu0
    %v1819 = vadd.f32 %v1621, %v1818
    %v1820 = vpop.f32.mrb[0].mxu0
    %v1821 = vadd.f32 %v1617, %v1820
    %v1822 = vpop.f32.mrb[0].mxu0
    %v1823 = vadd.f32 %v1621, %v1822
    %1824 = vdwg.mxu0
    %v1825 = vxor.u32 %v1817, 2147483648
    %v1826 = vxor.u32 %v1821, 2147483648
    %v1827 = vmul.f32 %v1825, 1.442695
    %v1828 = vpow.pop %v1827
    %v1829 = vmul.f32 %v1826, 1.442695
    %v1830 = vpow.pop %v1829
    %v1831 = vadd.f32 %v1828, 1.0
    %v1832 = vadd.f32 %v1830, 1.0
    %v1833 = vrcp.pop %v1831
    %v1834 = vmul.f32 1.0, %v1833
    %v1835 = vrcp.pop %v1832
    %v1836 = vmul.f32 1.0, %v1835
    %v1837 = vmax.f32 %v1819, 0.0
    %v1838 = vmax.f32 %v1823, 0.0
    %v1839 = vpack.c.bf16 %v1836, %v1834
    %v1840 = vpack.c.bf16 %v1838, %v1837
    %v1841 = vlaneseq
    %v1842 = vshrl.u32 %v1841, 7
    %v1843 = vsub.s32 1, %v1842
    %v1844 = vrot.slane %v482, %v1843
    %v1845 = vlaneseq
    %v1846 = vshrl.u32 %v1845, 7
    %v1847 = vsub.s32 5, %v1846
    %v1848 = vrot.slane %v482, %v1847
    %v1851 = vlaneseq
    %v1852 = vshrl.u32 %v1851, 7
    %v1853 = vsub.s32 1, %v1852
    %v1854 = vrot.slane %v1844, %v1853
    %v1855 = vlaneseq
    %v1856 = vshrl.u32 %v1855, 7
    %v1857 = vsub.s32 1, %v1856
    %v1858 = vrot.slane %v1848, %v1857
    %v1891 = vunpack.c.l.b16 %v417
    %v1892 = vunpack.c.h.b16 %v417
    %v1893 = vunpack.c.l.b16 %v418
    %v1894 = vunpack.c.h.b16 %v418
    %v1895 = vunpack.c.l.b16 %v419
    %v1896 = vunpack.c.h.b16 %v419
    %v1897 = vunpack.c.l.b16 %v420
    %v1898 = vunpack.c.h.b16 %v420
    %v1899 = vunpack.c.l.b16 %v421
    %v1900 = vunpack.c.h.b16 %v421
    %v1901 = vunpack.c.l.b16 %v422
    %v1902 = vunpack.c.h.b16 %v422
    %v1903 = vunpack.c.l.b16 %v423
    %v1904 = vunpack.c.h.b16 %v423
    %v1905 = vunpack.c.l.b16 %v424
    %v1906 = vunpack.c.h.b16 %v424
    %v1907 = vunpack.c.l.b16 %v425
    %v1908 = vunpack.c.h.b16 %v425
    %v1909 = vunpack.c.l.b16 %v426
    %v1910 = vunpack.c.h.b16 %v426
    %v1911 = vunpack.c.l.b16 %v427
    %v1912 = vunpack.c.h.b16 %v427
    %v1913 = vunpack.c.l.b16 %v428
    %v1914 = vunpack.c.h.b16 %v428
    %v1915 = vunpack.c.l.b16 %v429
    %v1916 = vunpack.c.h.b16 %v429
    %v1917 = vunpack.c.l.b16 %v430
    %v1918 = vunpack.c.h.b16 %v430
    %v1919 = vunpack.c.l.b16 %v431
    %v1920 = vunpack.c.h.b16 %v431
    %v1921 = vunpack.c.l.b16 %v432
    %v1922 = vunpack.c.h.b16 %v432
    %v1923 = vunpack.c.l.b16 %v433
    %v1924 = vunpack.c.h.b16 %v433
    %v1925 = vunpack.c.l.b16 %v434
    %v1926 = vunpack.c.h.b16 %v434
    %v1927 = vunpack.c.l.b16 %v435
    %v1928 = vunpack.c.h.b16 %v435
    %v1929 = vunpack.c.l.b16 %v436
    %v1930 = vunpack.c.h.b16 %v436
    %v1931 = vunpack.c.l.b16 %v437
    %v1932 = vunpack.c.h.b16 %v437
    %v1933 = vunpack.c.l.b16 %v438
    %v1934 = vunpack.c.h.b16 %v438
    %v1935 = vunpack.c.l.b16 %v439
    %v1936 = vunpack.c.h.b16 %v439
    %v1937 = vunpack.c.l.b16 %v440
    %v1938 = vunpack.c.h.b16 %v440
    %v1939 = vunpack.c.l.b16 %v441
    %v1940 = vunpack.c.h.b16 %v441
    %v1941 = vunpack.c.l.b16 %v442
    %v1942 = vunpack.c.h.b16 %v442
    %v1943 = vunpack.c.l.b16 %v443
    %v1944 = vunpack.c.h.b16 %v443
    %v1945 = vunpack.c.l.b16 %v444
    %v1946 = vunpack.c.h.b16 %v444
    %v1947 = vunpack.c.l.b16 %v445
    %v1948 = vunpack.c.h.b16 %v445
    %v1949 = vunpack.c.l.b16 %v446
    %v1950 = vunpack.c.h.b16 %v446
    %v1951 = vunpack.c.l.b16 %v447
    %v1952 = vunpack.c.h.b16 %v447
    %v1953 = vunpack.c.l.b16 %v448
    %v1954 = vunpack.c.h.b16 %v448
    %v1955 = vpack.c.b16 %v1893, %v1891
    %v1956 = vpack.c.b16 %v1894, %v1892
    %v1957 = vpack.c.b16 %v1897, %v1895
    %v1958 = vpack.c.b16 %v1898, %v1896
    %v1959 = vpack.c.b16 %v1901, %v1899
    %v1960 = vpack.c.b16 %v1902, %v1900
    %v1961 = vpack.c.b16 %v1905, %v1903
    %v1962 = vpack.c.b16 %v1906, %v1904
    %v1963 = vpack.c.b16 %v1909, %v1907
    %v1964 = vpack.c.b16 %v1910, %v1908
    %v1965 = vpack.c.b16 %v1913, %v1911
    %v1966 = vpack.c.b16 %v1914, %v1912
    %v1967 = vpack.c.b16 %v1917, %v1915
    %v1968 = vpack.c.b16 %v1918, %v1916
    %v1969 = vpack.c.b16 %v1921, %v1919
    %v1970 = vpack.c.b16 %v1922, %v1920
    %v1971 = vpack.c.b16 %v1925, %v1923
    %v1972 = vpack.c.b16 %v1926, %v1924
    %v1973 = vpack.c.b16 %v1929, %v1927
    %v1974 = vpack.c.b16 %v1930, %v1928
    %v1975 = vpack.c.b16 %v1933, %v1931
    %v1976 = vpack.c.b16 %v1934, %v1932
    %v1977 = vpack.c.b16 %v1937, %v1935
    %v1978 = vpack.c.b16 %v1938, %v1936
    %v1979 = vpack.c.b16 %v1941, %v1939
    %v1980 = vpack.c.b16 %v1942, %v1940
    %v1981 = vpack.c.b16 %v1945, %v1943
    %v1982 = vpack.c.b16 %v1946, %v1944
    %v1983 = vpack.c.b16 %v1949, %v1947
    %v1984 = vpack.c.b16 %v1950, %v1948
    %v1985 = vpack.c.b16 %v1953, %v1951
    %v1986 = vpack.c.b16 %v1954, %v1952
    %2019 = vmatprep.subr.bf16.mxu0 %v1956
    %2020 = vmatpush1.bf16.msra.mxu0 %v1955
    %2021 = vmatprep.subr.bf16.mxu0 %v1958
    %2022 = vmatpush1.bf16.msra.mxu0 %v1957
    %2023 = vmatprep.subr.bf16.mxu0 %v1960
    %2024 = vmatpush1.bf16.msra.mxu0 %v1959
    %2025 = vmatprep.subr.bf16.mxu0 %v1962
    %2026 = vmatpush1.bf16.msra.mxu0 %v1961
    %2027 = vmatprep.subr.bf16.mxu0 %v1964
    %2028 = vmatpush1.bf16.msra.mxu0 %v1963
    %2029 = vmatprep.subr.bf16.mxu0 %v1966
    %2030 = vmatpush1.bf16.msra.mxu0 %v1965
    %2031 = vmatprep.subr.bf16.mxu0 %v1968
    %2032 = vmatpush1.bf16.msra.mxu0 %v1967
    %2033 = vmatprep.subr.bf16.mxu0 %v1970
    %2034 = vmatpush1.bf16.msra.mxu0 %v1969
    %2035 = vmatprep.subr.bf16.mxu0 %v1972
    %2036 = vmatpush1.bf16.msra.mxu0 %v1971
    %2037 = vmatprep.subr.bf16.mxu0 %v1974
    %2038 = vmatpush1.bf16.msra.mxu0 %v1973
    %2039 = vmatprep.subr.bf16.mxu0 %v1976
    %2040 = vmatpush1.bf16.msra.mxu0 %v1975
    %2041 = vmatprep.subr.bf16.mxu0 %v1978
    %2042 = vmatpush1.bf16.msra.mxu0 %v1977
    %2043 = vmatprep.subr.bf16.mxu0 %v1980
    %2044 = vmatpush1.bf16.msra.mxu0 %v1979
    %2045 = vmatprep.subr.bf16.mxu0 %v1982
    %2046 = vmatpush1.bf16.msra.mxu0 %v1981
    %2047 = vmatprep.subr.bf16.mxu0 %v1984
    %2048 = vmatpush1.bf16.msra.mxu0 %v1983
    %2049 = vmatprep.subr.bf16.mxu0 %v1986
    %2050 = vmatpush1.bf16.msra.mxu0 %v1985
    %2051 = vmatprep.mubr.bf16.mxu0 %v1840
    %2052 = vmatmul.mubr.bf16.gmra.mrb[0].mxu0 %v1839
    %v2053 = vpop.f32.mrb[0].mxu0
    %v2054 = vadd.f32 %v1854, %v2053
    %v2055 = vpop.f32.mrb[0].mxu0
    %v2056 = vadd.f32 %v1858, %v2055
    %v2057 = vpop.f32.mrb[0].mxu0
    %v2058 = vadd.f32 %v1854, %v2057
    %v2059 = vpop.f32.mrb[0].mxu0
    %v2060 = vadd.f32 %v1858, %v2059
    %2061 = vdwg.mxu0
    %v2062 = vmax.f32 %v2054, 0.0
    %v2063 = vmax.f32 %v2056, 0.0
    %v2064 = vmax.f32 %v2058, 0.0
    %v2065 = vmax.f32 %v2060, 0.0
    %v2066 = vpack.c.bf16 %v2064, %v2062
    %v2067 = vpack.c.bf16 %v2065, %v2063
    %v2068 = vlaneseq
    %v2069 = vshrl.u32 %v2068, 7
    %v2070 = vsub.s32 2, %v2069
    %v2071 = vrot.slane %v482, %v2070
    %v2072 = vlaneseq
    %v2073 = vshrl.u32 %v2072, 7
    %v2074 = vsub.s32 6, %v2073
    %v2075 = vrot.slane %v482, %v2074
    %v2078 = vlaneseq
    %v2079 = vshrl.u32 %v2078, 7
    %v2080 = vsub.s32 2, %v2079
    %v2081 = vrot.slane %v2071, %v2080
    %v2082 = vlaneseq
    %v2083 = vshrl.u32 %v2082, 7
    %v2084 = vsub.s32 2, %v2083
    %v2085 = vrot.slane %v2075, %v2084
    %v2118 = vunpack.c.l.b16 %v450
    %v2119 = vunpack.c.h.b16 %v450
    %v2120 = vunpack.c.l.b16 %v451
    %v2121 = vunpack.c.h.b16 %v451
    %v2122 = vunpack.c.l.b16 %v452
    %v2123 = vunpack.c.h.b16 %v452
    %v2124 = vunpack.c.l.b16 %v453
    %v2125 = vunpack.c.h.b16 %v453
    %v2126 = vunpack.c.l.b16 %v454
    %v2127 = vunpack.c.h.b16 %v454
    %v2128 = vunpack.c.l.b16 %v455
    %v2129 = vunpack.c.h.b16 %v455
    %v2130 = vunpack.c.l.b16 %v456
    %v2131 = vunpack.c.h.b16 %v456
    %v2132 = vunpack.c.l.b16 %v457
    %v2133 = vunpack.c.h.b16 %v457
    %v2134 = vunpack.c.l.b16 %v458
    %v2135 = vunpack.c.h.b16 %v458
    %v2136 = vunpack.c.l.b16 %v459
    %v2137 = vunpack.c.h.b16 %v459
    %v2138 = vunpack.c.l.b16 %v460
    %v2139 = vunpack.c.h.b16 %v460
    %v2140 = vunpack.c.l.b16 %v461
    %v2141 = vunpack.c.h.b16 %v461
    %v2142 = vunpack.c.l.b16 %v462
    %v2143 = vunpack.c.h.b16 %v462
    %v2144 = vunpack.c.l.b16 %v463
    %v2145 = vunpack.c.h.b16 %v463
    %v2146 = vunpack.c.l.b16 %v464
    %v2147 = vunpack.c.h.b16 %v464
    %v2148 = vunpack.c.l.b16 %v465
    %v2149 = vunpack.c.h.b16 %v465
    %v2150 = vunpack.c.l.b16 %v466
    %v2151 = vunpack.c.h.b16 %v466
    %v2152 = vunpack.c.l.b16 %v467
    %v2153 = vunpack.c.h.b16 %v467
    %v2154 = vunpack.c.l.b16 %v468
    %v2155 = vunpack.c.h.b16 %v468
    %v2156 = vunpack.c.l.b16 %v469
    %v2157 = vunpack.c.h.b16 %v469
    %v2158 = vunpack.c.l.b16 %v470
    %v2159 = vunpack.c.h.b16 %v470
    %v2160 = vunpack.c.l.b16 %v471
    %v2161 = vunpack.c.h.b16 %v471
    %v2162 = vunpack.c.l.b16 %v472
    %v2163 = vunpack.c.h.b16 %v472
    %v2164 = vunpack.c.l.b16 %v473
    %v2165 = vunpack.c.h.b16 %v473
    %v2166 = vunpack.c.l.b16 %v474
    %v2167 = vunpack.c.h.b16 %v474
    %v2168 = vunpack.c.l.b16 %v475
    %v2169 = vunpack.c.h.b16 %v475
    %v2170 = vunpack.c.l.b16 %v476
    %v2171 = vunpack.c.h.b16 %v476
    %v2172 = vunpack.c.l.b16 %v477
    %v2173 = vunpack.c.h.b16 %v477
    %v2174 = vunpack.c.l.b16 %v478
    %v2175 = vunpack.c.h.b16 %v478
    %v2176 = vunpack.c.l.b16 %v479
    %v2177 = vunpack.c.h.b16 %v479
    %v2178 = vunpack.c.l.b16 %v480
    %v2179 = vunpack.c.h.b16 %v480
    %v2180 = vunpack.c.l.b16 %v481
    %v2181 = vunpack.c.h.b16 %v481
    %v2182 = vpack.c.b16 %v2120, %v2118
    %v2183 = vpack.c.b16 %v2121, %v2119
    %v2184 = vpack.c.b16 %v2124, %v2122
    %v2185 = vpack.c.b16 %v2125, %v2123
    %v2186 = vpack.c.b16 %v2128, %v2126
    %v2187 = vpack.c.b16 %v2129, %v2127
    %v2188 = vpack.c.b16 %v2132, %v2130
    %v2189 = vpack.c.b16 %v2133, %v2131
    %v2190 = vpack.c.b16 %v2136, %v2134
    %v2191 = vpack.c.b16 %v2137, %v2135
    %v2192 = vpack.c.b16 %v2140, %v2138
    %v2193 = vpack.c.b16 %v2141, %v2139
    %v2194 = vpack.c.b16 %v2144, %v2142
    %v2195 = vpack.c.b16 %v2145, %v2143
    %v2196 = vpack.c.b16 %v2148, %v2146
    %v2197 = vpack.c.b16 %v2149, %v2147
    %v2198 = vpack.c.b16 %v2152, %v2150
    %v2199 = vpack.c.b16 %v2153, %v2151
    %v2200 = vpack.c.b16 %v2156, %v2154
    %v2201 = vpack.c.b16 %v2157, %v2155
    %v2202 = vpack.c.b16 %v2160, %v2158
    %v2203 = vpack.c.b16 %v2161, %v2159
    %v2204 = vpack.c.b16 %v2164, %v2162
    %v2205 = vpack.c.b16 %v2165, %v2163
    %v2206 = vpack.c.b16 %v2168, %v2166
    %v2207 = vpack.c.b16 %v2169, %v2167
    %v2208 = vpack.c.b16 %v2172, %v2170
    %v2209 = vpack.c.b16 %v2173, %v2171
    %v2210 = vpack.c.b16 %v2176, %v2174
    %v2211 = vpack.c.b16 %v2177, %v2175
    %v2212 = vpack.c.b16 %v2180, %v2178
    %v2213 = vpack.c.b16 %v2181, %v2179
    %2246 = vmatprep.subr.bf16.mxu0 %v2183
    %2247 = vmatpush1.bf16.msra.mxu0 %v2182
    %2248 = vmatprep.subr.bf16.mxu0 %v2185
    %2249 = vmatpush1.bf16.msra.mxu0 %v2184
    %2250 = vmatprep.subr.bf16.mxu0 %v2187
    %2251 = vmatpush1.bf16.msra.mxu0 %v2186
    %2252 = vmatprep.subr.bf16.mxu0 %v2189
    %2253 = vmatpush1.bf16.msra.mxu0 %v2188
    %2254 = vmatprep.subr.bf16.mxu0 %v2191
    %2255 = vmatpush1.bf16.msra.mxu0 %v2190
    %2256 = vmatprep.subr.bf16.mxu0 %v2193
    %2257 = vmatpush1.bf16.msra.mxu0 %v2192
    %2258 = vmatprep.subr.bf16.mxu0 %v2195
    %2259 = vmatpush1.bf16.msra.mxu0 %v2194
    %2260 = vmatprep.subr.bf16.mxu0 %v2197
    %2261 = vmatpush1.bf16.msra.mxu0 %v2196
    %2262 = vmatprep.subr.bf16.mxu0 %v2199
    %2263 = vmatpush1.bf16.msra.mxu0 %v2198
    %2264 = vmatprep.subr.bf16.mxu0 %v2201
    %2265 = vmatpush1.bf16.msra.mxu0 %v2200
    %2266 = vmatprep.subr.bf16.mxu0 %v2203
    %2267 = vmatpush1.bf16.msra.mxu0 %v2202
    %2268 = vmatprep.subr.bf16.mxu0 %v2205
    %2269 = vmatpush1.bf16.msra.mxu0 %v2204
    %2270 = vmatprep.subr.bf16.mxu0 %v2207
    %2271 = vmatpush1.bf16.msra.mxu0 %v2206
    %2272 = vmatprep.subr.bf16.mxu0 %v2209
    %2273 = vmatpush1.bf16.msra.mxu0 %v2208
    %2274 = vmatprep.subr.bf16.mxu0 %v2211
    %2275 = vmatpush1.bf16.msra.mxu0 %v2210
    %2276 = vmatprep.subr.bf16.mxu0 %v2213
    %2277 = vmatpush1.bf16.msra.mxu0 %v2212
    %2278 = vmatprep.mubr.bf16.mxu0 %v2067
    %2279 = vmatmul.mubr.bf16.gmra.mrb[0].mxu0 %v2066
    %v2280 = vpop.f32.mrb[0].mxu0
    %v2281 = vadd.f32 %v2081, %v2280
    %v2282 = vpop.f32.mrb[0].mxu0
    %v2283 = vadd.f32 %v2085, %v2282
    %v2284 = vpop.f32.mrb[0].mxu0
    %v2285 = vadd.f32 %v2081, %v2284
    %v2286 = vpop.f32.mrb[0].mxu0
    %v2287 = vadd.f32 %v2085, %v2286
    %2288 = vdwg.mxu0
    %v2289 = vpack.c.bf16 %v1598, %v1595
    %v2290 = vpack.c.bf16 %v2285, %v2281
    %v2291 = vpack.c.bf16 %v2287, %v2283
    %v2293 = vlaneseq
    %v2294 = vshrl.u32 %v2293, 7
    %v2295 = vsub.s32 0, %v2294
    %v2296 = vrot.slane %v531, %v2295
    %v2346 = vunpack.c.l.b16 %v483
    %v2347 = vunpack.c.l.b16 %v484
    %v2348 = vunpack.c.l.b16 %v485
    %v2349 = vunpack.c.l.b16 %v486
    %v2350 = vunpack.c.l.b16 %v487
    %v2351 = vunpack.c.l.b16 %v488
    %v2352 = vunpack.c.l.b16 %v489
    %v2353 = vunpack.c.l.b16 %v490
    %v2354 = vunpack.c.l.b16 %v491
    %v2355 = vunpack.c.l.b16 %v492
    %v2356 = vunpack.c.l.b16 %v493
    %v2357 = vunpack.c.l.b16 %v494
    %v2358 = vunpack.c.l.b16 %v495
    %v2359 = vunpack.c.l.b16 %v496
    %v2360 = vunpack.c.l.b16 %v497
    %v2361 = vunpack.c.l.b16 %v498
    %v2362 = vunpack.c.l.b16 %v499
    %v2363 = vunpack.c.l.b16 %v500
    %v2364 = vunpack.c.l.b16 %v501
    %v2365 = vunpack.c.l.b16 %v502
    %v2366 = vunpack.c.l.b16 %v503
    %v2367 = vunpack.c.l.b16 %v504
    %v2368 = vunpack.c.l.b16 %v505
    %v2369 = vunpack.c.l.b16 %v506
    %v2370 = vunpack.c.l.b16 %v507
    %v2371 = vunpack.c.l.b16 %v508
    %v2372 = vunpack.c.l.b16 %v509
    %v2373 = vunpack.c.l.b16 %v510
    %v2374 = vunpack.c.l.b16 %v511
    %v2375 = vunpack.c.l.b16 %v512
    %v2376 = vunpack.c.l.b16 %v513
    %v2377 = vunpack.c.l.b16 %v514
    %v2378 = vunpack.c.l.b16 %v515
    %v2379 = vunpack.c.l.b16 %v516
    %v2380 = vunpack.c.l.b16 %v517
    %v2381 = vunpack.c.l.b16 %v518
    %v2382 = vunpack.c.l.b16 %v519
    %v2383 = vunpack.c.l.b16 %v520
    %v2384 = vunpack.c.l.b16 %v521
    %v2385 = vunpack.c.l.b16 %v522
    %v2386 = vunpack.c.l.b16 %v523
    %v2387 = vunpack.c.l.b16 %v524
    %v2388 = vunpack.c.l.b16 %v525
    %v2389 = vunpack.c.l.b16 %v526
    %v2390 = vunpack.c.l.b16 %v527
    %v2391 = vunpack.c.l.b16 %v528
    %v2392 = vunpack.c.l.b16 %v529
    %v2393 = vunpack.c.l.b16 %v530
    %v2394 = vpack.c.b16 %v2347, %v2346
    %v2395 = vpack.c.b16 %v2349, %v2348
    %v2396 = vpack.c.b16 %v2351, %v2350
    %v2397 = vpack.c.b16 %v2353, %v2352
    %v2398 = vpack.c.b16 %v2355, %v2354
    %v2399 = vpack.c.b16 %v2357, %v2356
    %v2400 = vpack.c.b16 %v2359, %v2358
    %v2401 = vpack.c.b16 %v2361, %v2360
    %v2402 = vpack.c.b16 %v2363, %v2362
    %v2403 = vpack.c.b16 %v2365, %v2364
    %v2404 = vpack.c.b16 %v2367, %v2366
    %v2405 = vpack.c.b16 %v2369, %v2368
    %v2406 = vpack.c.b16 %v2371, %v2370
    %v2407 = vpack.c.b16 %v2373, %v2372
    %v2408 = vpack.c.b16 %v2375, %v2374
    %v2409 = vpack.c.b16 %v2377, %v2376
    %v2410 = vpack.c.b16 %v2379, %v2378
    %v2411 = vpack.c.b16 %v2381, %v2380
    %v2412 = vpack.c.b16 %v2383, %v2382
    %v2413 = vpack.c.b16 %v2385, %v2384
    %v2414 = vpack.c.b16 %v2387, %v2386
    %v2415 = vpack.c.b16 %v2389, %v2388
    %v2416 = vpack.c.b16 %v2391, %v2390
    %v2417 = vpack.c.b16 %v2393, %v2392
    %2442 = vmatprep.subr.bf16.mxu0 0
    %2443 = vmatpush1.bf16.msra.mxu0 %v2394
    %2444 = vmatprep.subr.bf16.mxu0 0
    %2445 = vmatpush1.bf16.msra.mxu0 %v2395
    %2446 = vmatprep.subr.bf16.mxu0 0
    %2447 = vmatpush1.bf16.msra.mxu0 %v2396
    %2448 = vmatprep.subr.bf16.mxu0 0
    %2449 = vmatpush1.bf16.msra.mxu0 %v2397
    %2450 = vmatprep.subr.bf16.mxu0 0
    %2451 = vmatpush1.bf16.msra.mxu0 %v2398
    %2452 = vmatprep.subr.bf16.mxu0 0
    %2453 = vmatpush1.bf16.msra.mxu0 %v2399
    %2454 = vmatprep.subr.bf16.mxu0 0
    %2455 = vmatpush1.bf16.msra.mxu0 %v2400
    %2456 = vmatprep.subr.bf16.mxu0 0
    %2457 = vmatpush1.bf16.msra.mxu0 %v2401
    %2458 = vmatprep.subr.bf16.mxu0 0
    %2459 = vmatpush1.bf16.msra.mxu0 %v2402
    %2460 = vmatprep.subr.bf16.mxu0 0
    %2461 = vmatpush1.bf16.msra.mxu0 %v2403
    %2462 = vmatprep.subr.bf16.mxu0 0
    %2463 = vmatpush1.bf16.msra.mxu0 %v2404
    %2464 = vmatprep.subr.bf16.mxu0 0
    %2465 = vmatpush1.bf16.msra.mxu0 %v2405
    %2466 = vmatprep.subr.bf16.mxu0 0
    %2467 = vmatpush1.bf16.msra.mxu0 %v2406
    %2468 = vmatprep.subr.bf16.mxu0 0
    %2469 = vmatpush1.bf16.msra.mxu0 %v2407
    %2470 = vmatprep.subr.bf16.mxu0 0
    %2471 = vmatpush1.bf16.msra.mxu0 %v2408
    %2472 = vmatprep.subr.bf16.mxu0 0
    %2473 = vmatpush1.bf16.msra.mxu0 %v2409
    %2474 = vmatprep.mubr.bf16.mxu0 %v2290
    %2475 = vmatmul.mubr.bf16.gmra.mrb[0].mxu0 %v2289
    %v2476 = vpop.f32.mrb[0].mxu0
    %v2477 = vadd.f32 %v2296, %v2476
    %v2478 = vpop.f32.mrb[0].mxu0
    %v2479 = vpop.f32.mrb[0].mxu0
    %v2480 = vadd.f32 %v2296, %v2479
    %v2481 = vpop.f32.mrb[0].mxu0
    %2482 = vdwg.mxu0
    %2483 = vmatprep.subr.bf16.mxu0 0
    %2484 = vmatpush1.bf16.msra.mxu0 %v2410
    %2485 = vmatprep.subr.bf16.mxu0 0
    %2486 = vmatpush1.bf16.msra.mxu0 %v2411
    %2487 = vmatprep.subr.bf16.mxu0 0
    %2488 = vmatpush1.bf16.msra.mxu0 %v2412
    %2489 = vmatprep.subr.bf16.mxu0 0
    %2490 = vmatpush1.bf16.msra.mxu0 %v2413
    %2491 = vmatprep.subr.bf16.mxu0 0
    %2492 = vmatpush1.bf16.msra.mxu0 %v2414
    %2493 = vmatprep.subr.bf16.mxu0 0
    %2494 = vmatpush1.bf16.msra.mxu0 %v2415
    %2495 = vmatprep.subr.bf16.mxu0 0
    %2496 = vmatpush1.bf16.msra.mxu0 %v2416
    %2497 = vmatprep.subr.bf16.mxu0 0
    %2498 = vmatpush1.bf16.msra.mxu0 %v2417
    %2499 = vmatprep.subr.bf16.mxu0 0
    %2500 = vmatpush1.bf16.msra.mxu0 0
    %2501 = vmatprep.subr.bf16.mxu0 0
    %2502 = vmatpush1.bf16.msra.mxu0 0
    %2503 = vmatprep.subr.bf16.mxu0 0
    %2504 = vmatpush1.bf16.msra.mxu0 0
    %2505 = vmatprep.subr.bf16.mxu0 0
    %2506 = vmatpush1.bf16.msra.mxu0 0
    %2507 = vmatprep.subr.bf16.mxu0 0
    %2508 = vmatpush1.bf16.msra.mxu0 0
    %2509 = vmatprep.subr.bf16.mxu0 0
    %2510 = vmatpush1.bf16.msra.mxu0 0
    %2511 = vmatprep.subr.bf16.mxu0 0
    %2512 = vmatpush1.bf16.msra.mxu0 0
    %2513 = vmatprep.subr.bf16.mxu0 0
    %2514 = vmatpush1.bf16.msra.mxu0 0
    %2515 = vmatprep.mubr.bf16.mxu0 0
    %2516 = vmatmul.mubr.bf16.gmra.mrb[0].mxu0 %v2291
    %v2517 = vpop.f32.mrb[0].mxu0
    %v2518 = vadd.f32 %v2477, %v2517
    %v2519 = vpop.f32.mrb[0].mxu0
    %v2520 = vpop.f32.mrb[0].mxu0
    %v2521 = vadd.f32 %v2480, %v2520
    %v2522 = vpop.f32.mrb[0].mxu0
    %2523 = vdwg.mxu0
    %v2524 = vmax.f32 %v2518, 0.0
    %v2525 = vmax.f32 %v2521, 0.0
    %v2526 = vld [vmem:[#allocation11] sm:$0xff]
    %v2527 = vld [vmem:[#allocation11 + $0x8] sm:$0xf]
    %v2528 = vld [vmem:[#allocation11 + $0xc] sm:$0xff]
    %v2529 = vld [vmem:[#allocation11 + $0x14] sm:$0xf]
    %v2530 = vld [vmem:[#allocation11 + $0x18] sm:$0xff]
    %v2531 = vld [vmem:[#allocation11 + $0x20] sm:$0xf]
    %v2532 = vld [vmem:[#allocation11 + $0x24] sm:$0xff]
    %v2533 = vld [vmem:[#allocation11 + $0x2c] sm:$0xf]
    %v2534 = vld [vmem:[#allocation11 + $0x30] sm:$0xff]
    %v2535 = vld [vmem:[#allocation11 + $0x38] sm:$0xf]
    %v2536 = vld [vmem:[#allocation11 + $0x3c] sm:$0xff]
    %v2537 = vld [vmem:[#allocation11 + $0x44] sm:$0xf]
    %v2538 = vld [vmem:[#allocation11 + $0x48] sm:$0xff]
    %v2539 = vld [vmem:[#allocation11 + $0x50] sm:$0xf]
    %v2540 = vld [vmem:[#allocation11 + $0x54] sm:$0xff]
    %v2541 = vld [vmem:[#allocation11 + $0x5c] sm:$0xf]
    %v2542 = vld [vmem:[#allocation11 + $0x60] sm:$0xff]
    %v2543 = vld [vmem:[#allocation11 + $0x68] sm:$0xf]
    %v2544 = vld [vmem:[#allocation11 + $0x6c] sm:$0xff]
    %v2545 = vld [vmem:[#allocation11 + $0x74] sm:$0xf]
    %v2546 = vld [vmem:[#allocation11 + $0x78] sm:$0xff]
    %v2547 = vld [vmem:[#allocation11 + $0x80] sm:$0xf]
    %v2548 = vld [vmem:[#allocation11 + $0x84] sm:$0xff]
    %v2549 = vld [vmem:[#allocation11 + $0x8c] sm:$0xf]
    %v2550 = vld [vmem:[#allocation11 + $0x90] sm:$0xff]
    %v2551 = vld [vmem:[#allocation11 + $0x98] sm:$0xf]
    %v2552 = vld [vmem:[#allocation11 + $0x9c] sm:$0xff]
    %v2553 = vld [vmem:[#allocation11 + $0xa4] sm:$0xf]
    %v2554 = vld [vmem:[#allocation11 + $0xa8] sm:$0xff]
    %v2555 = vld [vmem:[#allocation11 + $0xb0] sm:$0xf]
    %v2556 = vld [vmem:[#allocation11 + $0xb4] sm:$0xff]
    %v2557 = vld [vmem:[#allocation11 + $0xbc] sm:$0xf]
    %v2558 = vld [vmem:[#allocation11 + $0xc0] sm:$0xff]
    %v2559 = vld [vmem:[#allocation11 + $0xc8] sm:$0xf]
    %v2560 = vld [vmem:[#allocation11 + $0xcc] sm:$0xff]
    %v2561 = vld [vmem:[#allocation11 + $0xd4] sm:$0xf]
    %v2562 = vld [vmem:[#allocation11 + $0xd8] sm:$0xff]
    %v2563 = vld [vmem:[#allocation11 + $0xe0] sm:$0xf]
    %v2564 = vld [vmem:[#allocation11 + $0xe4] sm:$0xff]
    %v2565 = vld [vmem:[#allocation11 + $0xec] sm:$0xf]
    %v2566 = vld [vmem:[#allocation11 + $0xf0] sm:$0xff]
    %v2567 = vld [vmem:[#allocation11 + $0xf8] sm:$0xf]
    %v2568 = vld [vmem:[#allocation11 + $0xfc] sm:$0xff]
    %v2569 = vld [vmem:[#allocation11 + $0x104] sm:$0xf]
    %v2570 = vld [vmem:[#allocation11 + $0x108] sm:$0xff]
    %v2571 = vld [vmem:[#allocation11 + $0x110] sm:$0xf]
    %v2572 = vld [vmem:[#allocation11 + $0x114] sm:$0xff]
    %v2573 = vld [vmem:[#allocation11 + $0x11c] sm:$0xf]
    %v2574 = vld [vmem:[#allocation11 + $0x120] sm:$0xff]
    %v2575 = vld [vmem:[#allocation11 + $0x128] sm:$0xf]
    %v2576 = vld [vmem:[#allocation11 + $0x12c] sm:$0xff]
    %v2577 = vld [vmem:[#allocation11 + $0x134] sm:$0xf]
    %v2578 = vld [vmem:[#allocation11 + $0x138] sm:$0xff]
    %v2579 = vld [vmem:[#allocation11 + $0x140] sm:$0xf]
    %v2580 = vld [vmem:[#allocation11 + $0x144] sm:$0xff]
    %v2581 = vld [vmem:[#allocation11 + $0x14c] sm:$0xf]
    %v2582 = vld [vmem:[#allocation11 + $0x150] sm:$0xff]
    %v2583 = vld [vmem:[#allocation11 + $0x158] sm:$0xf]
    %v2584 = vld [vmem:[#allocation11 + $0x15c] sm:$0xff]
    %v2585 = vld [vmem:[#allocation11 + $0x164] sm:$0xf]
    %v2586 = vld [vmem:[#allocation11 + $0x168] sm:$0xff]
    %v2587 = vld [vmem:[#allocation11 + $0x170] sm:$0xf]
    %v2588 = vld [vmem:[#allocation11 + $0x174] sm:$0xff]
    %v2589 = vld [vmem:[#allocation11 + $0x17c] sm:$0xf]
    %v2590 = vld [vmem:[#allocation11 + $0x180] sm:$0xff]
    %v2591 = vld [vmem:[#allocation11 + $0x188] sm:$0xf]
    %v2592 = vld [vmem:[#allocation11 + $0x18c] sm:$0xff]
    %v2593 = vld [vmem:[#allocation11 + $0x194] sm:$0xf]
    %v2594 = vld [vmem:[#allocation11 + $0x198] sm:$0xff]
    %v2595 = vld [vmem:[#allocation11 + $0x1a0] sm:$0xf]
    %v2596 = vld [vmem:[#allocation11 + $0x1a4] sm:$0xff]
    %v2597 = vld [vmem:[#allocation11 + $0x1ac] sm:$0xf]
    %v2598 = vld [vmem:[#allocation11 + $0x1b0] sm:$0xff]
    %v2599 = vld [vmem:[#allocation11 + $0x1b8] sm:$0xf]
    %v2600 = vld [vmem:[#allocation11 + $0x1bc] sm:$0xff]
    %v2601 = vld [vmem:[#allocation11 + $0x1c4] sm:$0xf]
    %v2602 = vld [vmem:[#allocation11 + $0x1c8] sm:$0xff]
    %v2603 = vld [vmem:[#allocation11 + $0x1d0] sm:$0xf]
    %v2604 = vld [vmem:[#allocation11 + $0x1d4] sm:$0xff]
    %v2605 = vld [vmem:[#allocation11 + $0x1dc] sm:$0xf]
    %v2606 = vld [vmem:[#allocation11 + $0x1e0] sm:$0xff]
    %v2607 = vld [vmem:[#allocation11 + $0x1e8] sm:$0xf]
    %v2608 = vld [vmem:[#allocation11 + $0x1ec] sm:$0xff]
    %v2609 = vld [vmem:[#allocation11 + $0x1f4] sm:$0xf]
    %v2610 = vld [vmem:[#allocation11 + $0x1f8] sm:$0xff]
    %v2611 = vld [vmem:[#allocation11 + $0x200] sm:$0xf]
    %v2612 = vld [vmem:[#allocation11 + $0x204] sm:$0xff]
    %v2613 = vld [vmem:[#allocation11 + $0x20c] sm:$0xf]
    %v2614 = vld [vmem:[#allocation11 + $0x210] sm:$0xff]
    %v2615 = vld [vmem:[#allocation11 + $0x218] sm:$0xf]
    %v2616 = vld [vmem:[#allocation11 + $0x21c] sm:$0xff]
    %v2617 = vld [vmem:[#allocation11 + $0x224] sm:$0xf]
    %v2618 = vld [vmem:[#allocation11 + $0x228] sm:$0xff]
    %v2619 = vld [vmem:[#allocation11 + $0x230] sm:$0xf]
    %v2620 = vld [vmem:[#allocation11 + $0x234] sm:$0xff]
    %v2621 = vld [vmem:[#allocation11 + $0x23c] sm:$0xf]
    %v2622 = vld [vmem:[#allocation11 + $0x240] sm:$0xff]
    %v2623 = vld [vmem:[#allocation11 + $0x248] sm:$0xf]
    %v2624 = vld [vmem:[#allocation11 + $0x24c] sm:$0xff]
    %v2625 = vld [vmem:[#allocation11 + $0x254] sm:$0xf]
    %v2626 = vld [vmem:[#allocation11 + $0x258] sm:$0xff]
    %v2627 = vld [vmem:[#allocation11 + $0x260] sm:$0xf]
    %v2628 = vld [vmem:[#allocation11 + $0x264] sm:$0xff]
    %v2629 = vld [vmem:[#allocation11 + $0x26c] sm:$0xf]
    %v2630 = vld [vmem:[#allocation11 + $0x270] sm:$0xff]
    %v2631 = vld [vmem:[#allocation11 + $0x278] sm:$0xf]
    %v2632 = vld [vmem:[#allocation11 + $0x27c] sm:$0xff]
    %v2633 = vld [vmem:[#allocation11 + $0x284] sm:$0xf]
    %v2634 = vld [vmem:[#allocation11 + $0x288] sm:$0xff]
    %v2635 = vld [vmem:[#allocation11 + $0x290] sm:$0xf]
    %v2636 = vld [vmem:[#allocation11 + $0x294] sm:$0xff]
    %v2637 = vld [vmem:[#allocation11 + $0x29c] sm:$0xf]
    %v2638 = vld [vmem:[#allocation11 + $0x2a0] sm:$0xff]
    %v2639 = vld [vmem:[#allocation11 + $0x2a8] sm:$0xf]
    %v2640 = vld [vmem:[#allocation11 + $0x2ac] sm:$0xff]
    %v2641 = vld [vmem:[#allocation11 + $0x2b4] sm:$0xf]
    %v2642 = vld [vmem:[#allocation11 + $0x2b8] sm:$0xff]
    %v2643 = vld [vmem:[#allocation11 + $0x2c0] sm:$0xf]
    %v2644 = vld [vmem:[#allocation11 + $0x2c4] sm:$0xff]
    %v2645 = vld [vmem:[#allocation11 + $0x2cc] sm:$0xf]
    %v2646 = vld [vmem:[#allocation11 + $0x2d0] sm:$0xff]
    %v2647 = vld [vmem:[#allocation11 + $0x2d8] sm:$0xf]
    %v2648 = vld [vmem:[#allocation11 + $0x2dc] sm:$0xff]
    %v2649 = vld [vmem:[#allocation11 + $0x2e4] sm:$0xf]
    %v2650 = vld [vmem:[#allocation11 + $0x2e8] sm:$0xff]
    %v2651 = vld [vmem:[#allocation11 + $0x2f0] sm:$0xf]
    %v2652 = vld [vmem:[#allocation11 + $0x2f4] sm:$0xff]
    %v2653 = vld [vmem:[#allocation11 + $0x2fc] sm:$0xf]
    %v2654 = vld [vmem:[#allocation11 + $0x300] sm:$0xff]
    %v2655 = vld [vmem:[#allocation11 + $0x308] sm:$0xf]
    %v2656 = vld [vmem:[#allocation11 + $0x30c] sm:$0xff]
    %v2657 = vld [vmem:[#allocation11 + $0x314] sm:$0xf]
    %v2658 = vld [vmem:[#allocation11 + $0x318] sm:$0xff]
    %v2659 = vld [vmem:[#allocation11 + $0x320] sm:$0xf]
    %v2660 = vld [vmem:[#allocation11 + $0x324] sm:$0xff]
    %v2661 = vld [vmem:[#allocation11 + $0x32c] sm:$0xf]
    %v2662 = vld [vmem:[#allocation11 + $0x330] sm:$0xff]
    %v2663 = vld [vmem:[#allocation11 + $0x338] sm:$0xf]
    %v2664 = vld [vmem:[#allocation11 + $0x33c] sm:$0xff]
    %v2665 = vld [vmem:[#allocation11 + $0x344] sm:$0xf]
    %v2666 = vld [vmem:[#allocation11 + $0x348] sm:$0xff]
    %v2667 = vld [vmem:[#allocation11 + $0x350] sm:$0xf]
    %v2668 = vld [vmem:[#allocation11 + $0x354] sm:$0xff]
    %v2669 = vld [vmem:[#allocation11 + $0x35c] sm:$0xf]
    %v2670 = vld [vmem:[#allocation11 + $0x360] sm:$0xff]
    %v2671 = vld [vmem:[#allocation11 + $0x368] sm:$0xf]
    %v2672 = vld [vmem:[#allocation11 + $0x36c] sm:$0xff]
    %v2673 = vld [vmem:[#allocation11 + $0x374] sm:$0xf]
    %v2674 = vld [vmem:[#allocation11 + $0x378] sm:$0xff]
    %v2675 = vld [vmem:[#allocation11 + $0x380] sm:$0xf]
    %v2676 = vld [vmem:[#allocation11 + $0x384] sm:$0xff]
    %v2677 = vld [vmem:[#allocation11 + $0x38c] sm:$0xf]
    %v2678 = vld [vmem:[#allocation11 + $0x390] sm:$0xff]
    %v2679 = vld [vmem:[#allocation11 + $0x398] sm:$0xf]
    %v2680 = vld [vmem:[#allocation11 + $0x39c] sm:$0xff]
    %v2681 = vld [vmem:[#allocation11 + $0x3a4] sm:$0xf]
    %v2682 = vld [vmem:[#allocation11 + $0x3a8] sm:$0xff]
    %v2683 = vld [vmem:[#allocation11 + $0x3b0] sm:$0xf]
    %v2684 = vld [vmem:[#allocation11 + $0x3b4] sm:$0xff]
    %v2685 = vld [vmem:[#allocation11 + $0x3bc] sm:$0xf]
    %v2686 = vld [vmem:[#allocation13] sm:$0xff]
    %v2687 = vld [vmem:[#allocation13 + $0x8] sm:$0xf]
    %v2688 = vld [vmem:[#allocation13 + $0xc] sm:$0xff]
    %v2689 = vld [vmem:[#allocation13 + $0x14] sm:$0xf]
    %v2690 = vld [vmem:[#allocation13 + $0x18] sm:$0xff]
    %v2691 = vld [vmem:[#allocation13 + $0x20] sm:$0xf]
    %v2692 = vld [vmem:[#allocation13 + $0x24] sm:$0xff]
    %v2693 = vld [vmem:[#allocation13 + $0x2c] sm:$0xf]
    %v2694 = vld [vmem:[#allocation13 + $0x30] sm:$0xff]
    %v2695 = vld [vmem:[#allocation13 + $0x38] sm:$0xf]
    %v2696 = vld [vmem:[#allocation13 + $0x3c] sm:$0xff]
    %v2697 = vld [vmem:[#allocation13 + $0x44] sm:$0xf]
    %v2698 = vld [vmem:[#allocation13 + $0x48] sm:$0xff]
    %v2699 = vld [vmem:[#allocation13 + $0x50] sm:$0xf]
    %v2700 = vld [vmem:[#allocation13 + $0x54] sm:$0xff]
    %v2701 = vld [vmem:[#allocation13 + $0x5c] sm:$0xf]
    %v2702 = vld [vmem:[#allocation13 + $0x60] sm:$0xff]
    %v2703 = vld [vmem:[#allocation13 + $0x68] sm:$0xf]
    %v2704 = vld [vmem:[#allocation13 + $0x6c] sm:$0xff]
    %v2705 = vld [vmem:[#allocation13 + $0x74] sm:$0xf]
    %v2706 = vld [vmem:[#allocation13 + $0x78] sm:$0xff]
    %v2707 = vld [vmem:[#allocation13 + $0x80] sm:$0xf]
    %v2708 = vld [vmem:[#allocation13 + $0x84] sm:$0xff]
    %v2709 = vld [vmem:[#allocation13 + $0x8c] sm:$0xf]
    %v2710 = vld [vmem:[#allocation13 + $0x90] sm:$0xff]
    %v2711 = vld [vmem:[#allocation13 + $0x98] sm:$0xf]
    %v2712 = vld [vmem:[#allocation13 + $0x9c] sm:$0xff]
    %v2713 = vld [vmem:[#allocation13 + $0xa4] sm:$0xf]
    %v2714 = vld [vmem:[#allocation13 + $0xa8] sm:$0xff]
    %v2715 = vld [vmem:[#allocation13 + $0xb0] sm:$0xf]
    %v2716 = vld [vmem:[#allocation13 + $0xb4] sm:$0xff]
    %v2717 = vld [vmem:[#allocation13 + $0xbc] sm:$0xf]
    %v2718 = vld [vmem:[%s15] sm:$0x3f]
    %v2719 = vld [vmem:[#allocation14] sm:$0xff]
    %v2720 = vld [vmem:[#allocation14 + $0x8] sm:$0xff]
    %v2721 = vld [vmem:[#allocation14 + $0x10] sm:$0xff]
    %v2722 = vld [vmem:[#allocation14 + $0x18] sm:$0xff]
    %v2723 = vld [vmem:[#allocation14 + $0x20] sm:$0xff]
    %v2724 = vld [vmem:[#allocation14 + $0x28] sm:$0xff]
    %v2725 = vld [vmem:[#allocation14 + $0x30] sm:$0xff]
    %v2726 = vld [vmem:[#allocation14 + $0x38] sm:$0xff]
    %v2727 = vld [vmem:[#allocation14 + $0x40] sm:$0xff]
    %v2728 = vld [vmem:[#allocation14 + $0x48] sm:$0xff]
    %v2729 = vld [vmem:[#allocation14 + $0x50] sm:$0xff]
    %v2730 = vld [vmem:[#allocation14 + $0x58] sm:$0xff]
    %v2731 = vld [vmem:[#allocation14 + $0x60] sm:$0xff]
    %v2732 = vld [vmem:[#allocation14 + $0x68] sm:$0xff]
    %v2733 = vld [vmem:[#allocation14 + $0x70] sm:$0xff]
    %v2734 = vld [vmem:[#allocation14 + $0x78] sm:$0xff]
    %v2735 = vld [vmem:[#allocation14 + $0x80] sm:$0xff]
    %v2736 = vld [vmem:[#allocation14 + $0x88] sm:$0xff]
    %v2737 = vld [vmem:[#allocation14 + $0x90] sm:$0xff]
    %v2738 = vld [vmem:[#allocation14 + $0x98] sm:$0xff]
    %v2739 = vld [vmem:[#allocation14 + $0xa0] sm:$0xff]
    %v2740 = vld [vmem:[#allocation14 + $0xa8] sm:$0xff]
    %v2741 = vld [vmem:[#allocation14 + $0xb0] sm:$0xff]
    %v2742 = vld [vmem:[#allocation14 + $0xb8] sm:$0xff]
    %v2743 = vld [vmem:[#allocation14 + $0xc0] sm:$0xff]
    %v2744 = vld [vmem:[#allocation14 + $0xc8] sm:$0xff]
    %v2745 = vld [vmem:[#allocation14 + $0xd0] sm:$0xff]
    %v2746 = vld [vmem:[#allocation14 + $0xd8] sm:$0xff]
    %v2747 = vld [vmem:[#allocation14 + $0xe0] sm:$0xff]
    %v2748 = vld [vmem:[#allocation14 + $0xe8] sm:$0xff]
    %v2749 = vld [vmem:[#allocation14 + $0xf0] sm:$0xff]
    %v2750 = vld [vmem:[#allocation14 + $0xf8] sm:$0xff]
    %s2751 = scalar_lea.vmem [#allocation14], 256
    %v2752 = vld [vmem:[%s2751] sm:$0xff]
    %v2753 = vld [vmem:[%s2751 + $0x8] sm:$0xff]
    %v2754 = vld [vmem:[%s2751 + $0x10] sm:$0xff]
    %v2755 = vld [vmem:[%s2751 + $0x18] sm:$0xff]
    %v2756 = vld [vmem:[%s2751 + $0x20] sm:$0xff]
    %v2757 = vld [vmem:[%s2751 + $0x28] sm:$0xff]
    %v2758 = vld [vmem:[%s2751 + $0x30] sm:$0xff]
    %v2759 = vld [vmem:[%s2751 + $0x38] sm:$0xff]
    %v2760 = vld [vmem:[%s2751 + $0x40] sm:$0xff]
    %v2761 = vld [vmem:[%s2751 + $0x48] sm:$0xff]
    %v2762 = vld [vmem:[%s2751 + $0x50] sm:$0xff]
    %v2763 = vld [vmem:[%s2751 + $0x58] sm:$0xff]
    %v2764 = vld [vmem:[%s2751 + $0x60] sm:$0xff]
    %v2765 = vld [vmem:[%s2751 + $0x68] sm:$0xff]
    %v2766 = vld [vmem:[%s2751 + $0x70] sm:$0xff]
    %v2767 = vld [vmem:[%s2751 + $0x78] sm:$0xff]
    %v2768 = vld [vmem:[%s2751 + $0x80] sm:$0xff]
    %v2769 = vld [vmem:[%s2751 + $0x88] sm:$0xff]
    %v2770 = vld [vmem:[%s2751 + $0x90] sm:$0xff]
    %v2771 = vld [vmem:[%s2751 + $0x98] sm:$0xff]
    %v2772 = vld [vmem:[%s2751 + $0xa0] sm:$0xff]
    %v2773 = vld [vmem:[%s2751 + $0xa8] sm:$0xff]
    %v2774 = vld [vmem:[%s2751 + $0xb0] sm:$0xff]
    %v2775 = vld [vmem:[%s2751 + $0xb8] sm:$0xff]
    %v2776 = vld [vmem:[%s2751 + $0xc0] sm:$0xff]
    %v2777 = vld [vmem:[%s2751 + $0xc8] sm:$0xff]
    %v2778 = vld [vmem:[%s2751 + $0xd0] sm:$0xff]
    %v2779 = vld [vmem:[%s2751 + $0xd8] sm:$0xff]
    %v2780 = vld [vmem:[%s2751 + $0xe0] sm:$0xff]
    %v2781 = vld [vmem:[%s2751 + $0xe8] sm:$0xff]
    %v2782 = vld [vmem:[%s2751 + $0xf0] sm:$0xff]
    %v2783 = vld [vmem:[%s2751 + $0xf8] sm:$0xff]
    %s2784 = scalar_lea.vmem [#allocation14], 512
    %v2785 = vld [vmem:[%s2784] sm:$0xff]
    %v2786 = vld [vmem:[%s2784 + $0x8] sm:$0xff]
    %v2787 = vld [vmem:[%s2784 + $0x10] sm:$0xff]
    %v2788 = vld [vmem:[%s2784 + $0x18] sm:$0xff]
    %v2789 = vld [vmem:[%s2784 + $0x20] sm:$0xff]
    %v2790 = vld [vmem:[%s2784 + $0x28] sm:$0xff]
    %v2791 = vld [vmem:[%s2784 + $0x30] sm:$0xff]
    %v2792 = vld [vmem:[%s2784 + $0x38] sm:$0xff]
    %v2793 = vld [vmem:[%s2784 + $0x40] sm:$0xff]
    %v2794 = vld [vmem:[%s2784 + $0x48] sm:$0xff]
    %v2795 = vld [vmem:[%s2784 + $0x50] sm:$0xff]
    %v2796 = vld [vmem:[%s2784 + $0x58] sm:$0xff]
    %v2797 = vld [vmem:[%s2784 + $0x60] sm:$0xff]
    %v2798 = vld [vmem:[%s2784 + $0x68] sm:$0xff]
    %v2799 = vld [vmem:[%s2784 + $0x70] sm:$0xff]
    %v2800 = vld [vmem:[%s2784 + $0x78] sm:$0xff]
    %v2801 = vld [vmem:[%s2784 + $0x80] sm:$0xff]
    %v2802 = vld [vmem:[%s2784 + $0x88] sm:$0xff]
    %v2803 = vld [vmem:[%s2784 + $0x90] sm:$0xff]
    %v2804 = vld [vmem:[%s2784 + $0x98] sm:$0xff]
    %v2805 = vld [vmem:[%s2784 + $0xa0] sm:$0xff]
    %v2806 = vld [vmem:[%s2784 + $0xa8] sm:$0xff]
    %v2807 = vld [vmem:[%s2784 + $0xb0] sm:$0xff]
    %v2808 = vld [vmem:[%s2784 + $0xb8] sm:$0xff]
    %v2809 = vld [vmem:[%s2784 + $0xc0] sm:$0xff]
    %v2810 = vld [vmem:[%s2784 + $0xc8] sm:$0xff]
    %v2811 = vld [vmem:[%s2784 + $0xd0] sm:$0xff]
    %v2812 = vld [vmem:[%s2784 + $0xd8] sm:$0xff]
    %v2813 = vld [vmem:[%s2784 + $0xe0] sm:$0xff]
    %v2814 = vld [vmem:[%s2784 + $0xe8] sm:$0xff]
    %v2815 = vld [vmem:[%s2784 + $0xf0] sm:$0xff]
    %v2816 = vld [vmem:[%s2784 + $0xf8] sm:$0xff]
    %v2817 = vld [vmem:[%s17] sm:$0x77]
    %v2818 = vld [vmem:[#allocation16] sm:$0xff]
    %v2819 = vld [vmem:[#allocation16 + $0x8] sm:$0xff]
    %v2820 = vld [vmem:[#allocation16 + $0x10] sm:$0xff]
    %v2821 = vld [vmem:[#allocation16 + $0x18] sm:$0xff]
    %v2822 = vld [vmem:[#allocation16 + $0x20] sm:$0xff]
    %v2823 = vld [vmem:[#allocation16 + $0x28] sm:$0xff]
    %v2824 = vld [vmem:[#allocation16 + $0x30] sm:$0xff]
    %v2825 = vld [vmem:[#allocation16 + $0x38] sm:$0xff]
    %v2826 = vld [vmem:[#allocation16 + $0x40] sm:$0xff]
    %v2827 = vld [vmem:[#allocation16 + $0x48] sm:$0xff]
    %v2828 = vld [vmem:[#allocation16 + $0x50] sm:$0xff]
    %v2829 = vld [vmem:[#allocation16 + $0x58] sm:$0xff]
    %v2830 = vld [vmem:[#allocation16 + $0x60] sm:$0xff]
    %v2831 = vld [vmem:[#allocation16 + $0x68] sm:$0xff]
    %v2832 = vld [vmem:[#allocation16 + $0x70] sm:$0xff]
    %v2833 = vld [vmem:[#allocation16 + $0x78] sm:$0xff]
    %v2834 = vld [vmem:[#allocation16 + $0x80] sm:$0xff]
    %v2835 = vld [vmem:[#allocation16 + $0x88] sm:$0xff]
    %v2836 = vld [vmem:[#allocation16 + $0x90] sm:$0xff]
    %v2837 = vld [vmem:[#allocation16 + $0x98] sm:$0xff]
    %v2838 = vld [vmem:[#allocation16 + $0xa0] sm:$0xff]
    %v2839 = vld [vmem:[#allocation16 + $0xa8] sm:$0xff]
    %v2840 = vld [vmem:[#allocation16 + $0xb0] sm:$0xff]
    %v2841 = vld [vmem:[#allocation16 + $0xb8] sm:$0xff]
    %v2842 = vld [vmem:[#allocation16 + $0xc0] sm:$0xff]
    %v2843 = vld [vmem:[#allocation16 + $0xc8] sm:$0xff]
    %v2844 = vld [vmem:[#allocation16 + $0xd0] sm:$0xff]
    %v2845 = vld [vmem:[#allocation16 + $0xd8] sm:$0xff]
    %v2846 = vld [vmem:[#allocation16 + $0xe0] sm:$0xff]
    %v2847 = vld [vmem:[#allocation16 + $0xe8] sm:$0xff]
    %v2848 = vld [vmem:[#allocation16 + $0xf0] sm:$0xff]
    %v2849 = vld [vmem:[#allocation16 + $0xf8] sm:$0xff]
    %v2850 = vld [vmem:[#allocation17] sm:$0x3]
    %v2851 = vlaneseq
    %v2852 = vand.u32 %v2851, 127
    %v2853 = vpack.c.bf16 %v2525, %v2524
    %v2854 = vld [vmem:[%s0] sm:$0xff]
    %v2855 = vld [vmem:[%s0 + $0x8] sm:$0xff]
    %2856 = vset.pattern.permute.xlu0 0
    %2857 = vperm.xlu0 %2856, %v2854
    %v2858 = vpop.permute.xlu0 %2857
    %2859 = vset.pattern.permute.xlu0 0
    %2860 = vperm.xlu0 %2859, %v2855
    %v2861 = vpop.permute.xlu0 %2860
    %vm2862 = vcmp.eq.s32.totalorder %v2852, %v2858
    %vm2863 = vcmp.eq.s32.totalorder %v2852, %v2861
    %v2864 = vsel %vm2862, 1.0, 0.0
    %v2865 = vsel %vm2863, 1.0, 0.0
    %v2866 = vpack.c.bf16 %v2865, %v2864
    %vm2867 = vcmask 130048
    %v2869 = vsel %vm2867, %v2866, 0
    %2871 = vmatprep.subr.bf16.mxu0 0
    %2872 = vmatpush1.bf16.msra.mxu0 %v2853
    %2873 = vmatprep.subr.bf16.mxu0 0
    %2874 = vmatpush1.bf16.msra.mxu0 0
    %2875 = vmatprep.subr.bf16.mxu0 0
    %2876 = vmatpush1.bf16.msra.mxu0 0
    %2877 = vmatprep.subr.bf16.mxu0 0
    %2878 = vmatpush1.bf16.msra.mxu0 0
    %2879 = vmatprep.subr.bf16.mxu0 0
    %2880 = vmatpush1.bf16.msra.mxu0 0
    %2881 = vmatprep.subr.bf16.mxu0 0
    %2882 = vmatpush1.bf16.msra.mxu0 0
    %2883 = vmatprep.subr.bf16.mxu0 0
    %2884 = vmatpush1.bf16.msra.mxu0 0
    %2885 = vmatprep.subr.bf16.mxu0 0
    %2886 = vmatpush1.bf16.msra.mxu0 0
    %2887 = vmatprep.subr.bf16.mxu0 0
    %2888 = vmatpush1.bf16.msra.mxu0 0
    %2889 = vmatprep.subr.bf16.mxu0 0
    %2890 = vmatpush1.bf16.msra.mxu0 0
    %2891 = vmatprep.subr.bf16.mxu0 0
    %2892 = vmatpush1.bf16.msra.mxu0 0
    %2893 = vmatprep.subr.bf16.mxu0 0
    %2894 = vmatpush1.bf16.msra.mxu0 0
    %2895 = vmatprep.subr.bf16.mxu0 0
    %2896 = vmatpush1.bf16.msra.mxu0 0
    %2897 = vmatprep.subr.bf16.mxu0 0
    %2898 = vmatpush1.bf16.msra.mxu0 0
    %2899 = vmatprep.subr.bf16.mxu0 0
    %2900 = vmatpush1.bf16.msra.mxu0 0
    %2901 = vmatprep.subr.bf16.mxu0 0
    %2902 = vmatpush1.bf16.msra.mxu0 0
    %2903 = vmatprep.mubr.bf16.mxu0 0
    %2904 = vmatmul.mubr.bf16.gmra.mrb[0].mxu0 %v2869
    %v2905 = vpop.f32.mrb[0].mxu0
    %v2906 = vadd.f32 0.0, %v2905
    %v2907 = vpop.f32.mrb[0].mxu0
    %v2908 = vpop.f32.mrb[0].mxu0
    %v2909 = vadd.f32 0.0, %v2908
    %v2910 = vpop.f32.mrb[0].mxu0
    %2911 = vdwg.mxu0
    %s2912 = scalar_lea.vmem %s0, 16
    %v2913 = vld [vmem:[%s2912] sm:$0xff]
    %v2914 = vld [vmem:[%s2912 + $0x8] sm:$0xff]
    %2915 = vset.pattern.permute.xlu0 0
    %2916 = vperm.xlu0 %2915, %v2913
    %v2917 = vpop.permute.xlu0 %2916
    %2918 = vset.pattern.permute.xlu0 0
    %2919 = vperm.xlu0 %2918, %v2914
    %v2920 = vpop.permute.xlu0 %2919
    %vm2921 = vcmp.eq.s32.totalorder %v2852, %v2917
    %vm2922 = vcmp.eq.s32.totalorder %v2852, %v2920
    %v2923 = vsel %vm2921, 1.0, 0.0
    %v2924 = vsel %vm2922, 1.0, 0.0
    %v2925 = vpack.c.bf16 %v2924, %v2923
    %v2927 = vsel %vm2867, %v2925, 0
    %2929 = vmatprep.subr.bf16.mxu0 0
    %2930 = vmatpush1.bf16.msra.mxu0 %v2853
    %2931 = vmatprep.subr.bf16.mxu0 0
    %2932 = vmatpush1.bf16.msra.mxu0 0
    %2933 = vmatprep.subr.bf16.mxu0 0
    %2934 = vmatpush1.bf16.msra.mxu0 0
    %2935 = vmatprep.subr.bf16.mxu0 0
    %2936 = vmatpush1.bf16.msra.mxu0 0
    %2937 = vmatprep.subr.bf16.mxu0 0
    %2938 = vmatpush1.bf16.msra.mxu0 0
    %2939 = vmatprep.subr.bf16.mxu0 0
    %2940 = vmatpush1.bf16.msra.mxu0 0
    %2941 = vmatprep.subr.bf16.mxu0 0
    %2942 = vmatpush1.bf16.msra.mxu0 0
    %2943 = vmatprep.subr.bf16.mxu0 0
    %2944 = vmatpush1.bf16.msra.mxu0 0
    %2945 = vmatprep.subr.bf16.mxu0 0
    %2946 = vmatpush1.bf16.msra.mxu0 0
    %2947 = vmatprep.subr.bf16.mxu0 0
    %2948 = vmatpush1.bf16.msra.mxu0 0
    %2949 = vmatprep.subr.bf16.mxu0 0
    %2950 = vmatpush1.bf16.msra.mxu0 0
    %2951 = vmatprep.subr.bf16.mxu0 0
    %2952 = vmatpush1.bf16.msra.mxu0 0
    %2953 = vmatprep.subr.bf16.mxu0 0
    %2954 = vmatpush1.bf16.msra.mxu0 0
    %2955 = vmatprep.subr.bf16.mxu0 0
    %2956 = vmatpush1.bf16.msra.mxu0 0
    %2957 = vmatprep.subr.bf16.mxu0 0
    %2958 = vmatpush1.bf16.msra.mxu0 0
    %2959 = vmatprep.subr.bf16.mxu0 0
    %2960 = vmatpush1.bf16.msra.mxu0 0
    %2961 = vmatprep.mubr.bf16.mxu0 0
    %2962 = vmatmul.mubr.bf16.gmra.mrb[0].mxu0 %v2927
    %v2963 = vpop.f32.mrb[0].mxu0
    %v2964 = vadd.f32 0.0, %v2963
    %v2965 = vpop.f32.mrb[0].mxu0
    %v2966 = vpop.f32.mrb[0].mxu0
    %v2967 = vadd.f32 0.0, %v2966
    %v2968 = vpop.f32.mrb[0].mxu0
    %2969 = vdwg.mxu0
    %s2970 = scalar_lea.vmem %s0, 32
    %v2971 = vld [vmem:[%s2970] sm:$0xff]
    %v2972 = vld [vmem:[%s2970 + $0x8] sm:$0xff]
    %2973 = vset.pattern.permute.xlu0 0
    %2974 = vperm.xlu0 %2973, %v2971
    %v2975 = vpop.permute.xlu0 %2974
    %2976 = vset.pattern.permute.xlu0 0
    %2977 = vperm.xlu0 %2976, %v2972
    %v2978 = vpop.permute.xlu0 %2977
    %vm2979 = vcmp.eq.s32.totalorder %v2852, %v2975
    %vm2980 = vcmp.eq.s32.totalorder %v2852, %v2978
    %v2981 = vsel %vm2979, 1.0, 0.0
    %v2982 = vsel %vm2980, 1.0, 0.0
    %v2983 = vpack.c.bf16 %v2982, %v2981
    %v2985 = vsel %vm2867, %v2983, 0
    %2987 = vmatprep.subr.bf16.mxu0 0
    %2988 = vmatpush1.bf16.msra.mxu0 %v2853
    %2989 = vmatprep.subr.bf16.mxu0 0
    %2990 = vmatpush1.bf16.msra.mxu0 0
    %2991 = vmatprep.subr.bf16.mxu0 0
    %2992 = vmatpush1.bf16.msra.mxu0 0
    %2993 = vmatprep.subr.bf16.mxu0 0
    %2994 = vmatpush1.bf16.msra.mxu0 0
    %2995 = vmatprep.subr.bf16.mxu0 0
    %2996 = vmatpush1.bf16.msra.mxu0 0
    %2997 = vmatprep.subr.bf16.mxu0 0
    %2998 = vmatpush1.bf16.msra.mxu0 0
    %2999 = vmatprep.subr.bf16.mxu0 0
    %3000 = vmatpush1.bf16.msra.mxu0 0
    %3001 = vmatprep.subr.bf16.mxu0 0
    %3002 = vmatpush1.bf16.msra.mxu0 0
    %3003 = vmatprep.subr.bf16.mxu0 0
    %3004 = vmatpush1.bf16.msra.mxu0 0
    %3005 = vmatprep.subr.bf16.mxu0 0
    %3006 = vmatpush1.bf16.msra.mxu0 0
    %3007 = vmatprep.subr.bf16.mxu0 0
    %3008 = vmatpush1.bf16.msra.mxu0 0
    %3009 = vmatprep.subr.bf16.mxu0 0
    %3010 = vmatpush1.bf16.msra.mxu0 0
    %3011 = vmatprep.subr.bf16.mxu0 0
    %3012 = vmatpush1.bf16.msra.mxu0 0
    %3013 = vmatprep.subr.bf16.mxu0 0
    %3014 = vmatpush1.bf16.msra.mxu0 0
    %3015 = vmatprep.subr.bf16.mxu0 0
    %3016 = vmatpush1.bf16.msra.mxu0 0
    %3017 = vmatprep.subr.bf16.mxu0 0
    %3018 = vmatpush1.bf16.msra.mxu0 0
    %3019 = vmatprep.mubr.bf16.mxu0 0
    %3020 = vmatmul.mubr.bf16.gmra.mrb[0].mxu0 %v2985
    %v3021 = vpop.f32.mrb[0].mxu0
    %v3022 = vadd.f32 0.0, %v3021
    %v3023 = vpop.f32.mrb[0].mxu0
    %v3024 = vpop.f32.mrb[0].mxu0
    %v3025 = vadd.f32 0.0, %v3024
    %v3026 = vpop.f32.mrb[0].mxu0
    %3027 = vdwg.mxu0
    %s3028 = scalar_lea.vmem %s0, 48
    %v3029 = vld [vmem:[%s3028] sm:$0xff]
    %v3030 = vld [vmem:[%s3028 + $0x8] sm:$0xff]
    %3031 = vset.pattern.permute.xlu0 0
    %3032 = vperm.xlu0 %3031, %v3029
    %v3033 = vpop.permute.xlu0 %3032
    %3034 = vset.pattern.permute.xlu0 0
    %3035 = vperm.xlu0 %3034, %v3030
    %v3036 = vpop.permute.xlu0 %3035
    %vm3037 = vcmp.eq.s32.totalorder %v2852, %v3033
    %vm3038 = vcmp.eq.s32.totalorder %v2852, %v3036
    %v3039 = vsel %vm3037, 1.0, 0.0
    %v3040 = vsel %vm3038, 1.0, 0.0
    %v3041 = vpack.c.bf16 %v3040, %v3039
    %v3043 = vsel %vm2867, %v3041, 0
    %3045 = vmatprep.subr.bf16.mxu0 0
    %3046 = vmatpush1.bf16.msra.mxu0 %v2853
    %3047 = vmatprep.subr.bf16.mxu0 0
    %3048 = vmatpush1.bf16.msra.mxu0 0
    %3049 = vmatprep.subr.bf16.mxu0 0
    %3050 = vmatpush1.bf16.msra.mxu0 0
    %3051 = vmatprep.subr.bf16.mxu0 0
    %3052 = vmatpush1.bf16.msra.mxu0 0
    %3053 = vmatprep.subr.bf16.mxu0 0
    %3054 = vmatpush1.bf16.msra.mxu0 0
    %3055 = vmatprep.subr.bf16.mxu0 0
    %3056 = vmatpush1.bf16.msra.mxu0 0
    %3057 = vmatprep.subr.bf16.mxu0 0
    %3058 = vmatpush1.bf16.msra.mxu0 0
    %3059 = vmatprep.subr.bf16.mxu0 0
    %3060 = vmatpush1.bf16.msra.mxu0 0
    %3061 = vmatprep.subr.bf16.mxu0 0
    %3062 = vmatpush1.bf16.msra.mxu0 0
    %3063 = vmatprep.subr.bf16.mxu0 0
    %3064 = vmatpush1.bf16.msra.mxu0 0
    %3065 = vmatprep.subr.bf16.mxu0 0
    %3066 = vmatpush1.bf16.msra.mxu0 0
    %3067 = vmatprep.subr.bf16.mxu0 0
    %3068 = vmatpush1.bf16.msra.mxu0 0
    %3069 = vmatprep.subr.bf16.mxu0 0
    %3070 = vmatpush1.bf16.msra.mxu0 0
    %3071 = vmatprep.subr.bf16.mxu0 0
    %3072 = vmatpush1.bf16.msra.mxu0 0
    %3073 = vmatprep.subr.bf16.mxu0 0
    %3074 = vmatpush1.bf16.msra.mxu0 0
    %3075 = vmatprep.subr.bf16.mxu0 0
    %3076 = vmatpush1.bf16.msra.mxu0 0
    %3077 = vmatprep.mubr.bf16.mxu0 0
    %3078 = vmatmul.mubr.bf16.gmra.mrb[0].mxu0 %v3043
    %v3079 = vpop.f32.mrb[0].mxu0
    %v3080 = vadd.f32 0.0, %v3079
    %v3081 = vpop.f32.mrb[0].mxu0
    %v3082 = vpop.f32.mrb[0].mxu0
    %v3083 = vadd.f32 0.0, %v3082
    %v3084 = vpop.f32.mrb[0].mxu0
    %3085 = vdwg.mxu0
    %s3086 = scalar_lea.vmem %s0, 64
    %v3087 = vld [vmem:[%s3086] sm:$0xff]
    %v3088 = vld [vmem:[%s3086 + $0x8] sm:$0xff]
    %3089 = vset.pattern.permute.xlu0 0
    %3090 = vperm.xlu0 %3089, %v3087
    %v3091 = vpop.permute.xlu0 %3090
    %3092 = vset.pattern.permute.xlu0 0
    %3093 = vperm.xlu0 %3092, %v3088
    %v3094 = vpop.permute.xlu0 %3093
    %vm3095 = vcmp.eq.s32.totalorder %v2852, %v3091
    %vm3096 = vcmp.eq.s32.totalorder %v2852, %v3094
    %v3097 = vsel %vm3095, 1.0, 0.0
    %v3098 = vsel %vm3096, 1.0, 0.0
    %v3099 = vpack.c.bf16 %v3098, %v3097
    %v3101 = vsel %vm2867, %v3099, 0
    %3103 = vmatprep.subr.bf16.mxu0 0
    %3104 = vmatpush1.bf16.msra.mxu0 %v2853
    %3105 = vmatprep.subr.bf16.mxu0 0
    %3106 = vmatpush1.bf16.msra.mxu0 0
    %3107 = vmatprep.subr.bf16.mxu0 0
    %3108 = vmatpush1.bf16.msra.mxu0 0
    %3109 = vmatprep.subr.bf16.mxu0 0
    %3110 = vmatpush1.bf16.msra.mxu0 0
    %3111 = vmatprep.subr.bf16.mxu0 0
    %3112 = vmatpush1.bf16.msra.mxu0 0
    %3113 = vmatprep.subr.bf16.mxu0 0
    %3114 = vmatpush1.bf16.msra.mxu0 0
    %3115 = vmatprep.subr.bf16.mxu0 0
    %3116 = vmatpush1.bf16.msra.mxu0 0
    %3117 = vmatprep.subr.bf16.mxu0 0
    %3118 = vmatpush1.bf16.msra.mxu0 0
    %3119 = vmatprep.subr.bf16.mxu0 0
    %3120 = vmatpush1.bf16.msra.mxu0 0
    %3121 = vmatprep.subr.bf16.mxu0 0
    %3122 = vmatpush1.bf16.msra.mxu0 0
    %3123 = vmatprep.subr.bf16.mxu0 0
    %3124 = vmatpush1.bf16.msra.mxu0 0
    %3125 = vmatprep.subr.bf16.mxu0 0
    %3126 = vmatpush1.bf16.msra.mxu0 0
    %3127 = vmatprep.subr.bf16.mxu0 0
    %3128 = vmatpush1.bf16.msra.mxu0 0
    %3129 = vmatprep.subr.bf16.mxu0 0
    %3130 = vmatpush1.bf16.msra.mxu0 0
    %3131 = vmatprep.subr.bf16.mxu0 0
    %3132 = vmatpush1.bf16.msra.mxu0 0
    %3133 = vmatprep.subr.bf16.mxu0 0
    %3134 = vmatpush1.bf16.msra.mxu0 0
    %3135 = vmatprep.mubr.bf16.mxu0 0
    %3136 = vmatmul.mubr.bf16.gmra.mrb[0].mxu0 %v3101
    %v3137 = vpop.f32.mrb[0].mxu0
    %v3138 = vadd.f32 0.0, %v3137
    %v3139 = vpop.f32.mrb[0].mxu0
    %v3140 = vpop.f32.mrb[0].mxu0
    %v3141 = vadd.f32 0.0, %v3140
    %v3142 = vpop.f32.mrb[0].mxu0
    %3143 = vdwg.mxu0
    %v3144 = vpack.c.bf16 %v2909, %v2906
    %v3145 = vpack.c.bf16 %v2967, %v2964
    %v3146 = vpack.c.bf16 %v3025, %v3022
    %v3147 = vpack.c.bf16 %v3083, %v3080
    %v3148 = vpack.c.bf16 %v3141, %v3138
    %v3150 = vlaneseq
    %v3151 = vshrl.u32 %v3150, 7
    %v3152 = vsub.s32 0, %v3151
    %v3153 = vrot.slane %v2718, %v3152
    %v3154 = vlaneseq
    %v3155 = vshrl.u32 %v3154, 7
    %v3156 = vsub.s32 2, %v3155
    %v3157 = vrot.slane %v2718, %v3156
    %v3158 = vlaneseq
    %v3159 = vshrl.u32 %v3158, 7
    %v3160 = vsub.s32 4, %v3159
    %v3161 = vrot.slane %v2718, %v3160
    %v3165 = vlaneseq
    %v3166 = vshrl.u32 %v3165, 7
    %v3167 = vsub.s32 0, %v3166
    %v3168 = vrot.slane %v3153, %v3167
    %v3169 = vlaneseq
    %v3170 = vshrl.u32 %v3169, 7
    %v3171 = vsub.s32 0, %v3170
    %v3172 = vrot.slane %v3157, %v3171
    %v3173 = vlaneseq
    %v3174 = vshrl.u32 %v3173, 7
    %v3175 = vsub.s32 0, %v3174
    %v3176 = vrot.slane %v3161, %v3175
    %v3337 = vunpack.c.l.b16 %v2526
    %v3338 = vunpack.c.h.b16 %v2526
    %v3339 = vunpack.c.l.b16 %v2527
    %v3340 = vunpack.c.l.b16 %v2528
    %v3341 = vunpack.c.h.b16 %v2528
    %v3342 = vunpack.c.l.b16 %v2529
    %v3343 = vunpack.c.l.b16 %v2530
    %v3344 = vunpack.c.h.b16 %v2530
    %v3345 = vunpack.c.l.b16 %v2531
    %v3346 = vunpack.c.l.b16 %v2532
    %v3347 = vunpack.c.h.b16 %v2532
    %v3348 = vunpack.c.l.b16 %v2533
    %v3349 = vunpack.c.l.b16 %v2534
    %v3350 = vunpack.c.h.b16 %v2534
    %v3351 = vunpack.c.l.b16 %v2535
    %v3352 = vunpack.c.l.b16 %v2536
    %v3353 = vunpack.c.h.b16 %v2536
    %v3354 = vunpack.c.l.b16 %v2537
    %v3355 = vunpack.c.l.b16 %v2538
    %v3356 = vunpack.c.h.b16 %v2538
    %v3357 = vunpack.c.l.b16 %v2539
    %v3358 = vunpack.c.l.b16 %v2540
    %v3359 = vunpack.c.h.b16 %v2540
    %v3360 = vunpack.c.l.b16 %v2541
    %v3361 = vunpack.c.l.b16 %v2542
    %v3362 = vunpack.c.h.b16 %v2542
    %v3363 = vunpack.c.l.b16 %v2543
    %v3364 = vunpack.c.l.b16 %v2544
    %v3365 = vunpack.c.h.b16 %v2544
    %v3366 = vunpack.c.l.b16 %v2545
    %v3367 = vunpack.c.l.b16 %v2546
    %v3368 = vunpack.c.h.b16 %v2546
    %v3369 = vunpack.c.l.b16 %v2547
    %v3370 = vunpack.c.l.b16 %v2548
    %v3371 = vunpack.c.h.b16 %v2548
    %v3372 = vunpack.c.l.b16 %v2549
    %v3373 = vunpack.c.l.b16 %v2550
    %v3374 = vunpack.c.h.b16 %v2550
    %v3375 = vunpack.c.l.b16 %v2551
    %v3376 = vunpack.c.l.b16 %v2552
    %v3377 = vunpack.c.h.b16 %v2552
    %v3378 = vunpack.c.l.b16 %v2553
    %v3379 = vunpack.c.l.b16 %v2554
    %v3380 = vunpack.c.h.b16 %v2554
    %v3381 = vunpack.c.l.b16 %v2555
    %v3382 = vunpack.c.l.b16 %v2556
    %v3383 = vunpack.c.h.b16 %v2556
    %v3384 = vunpack.c.l.b16 %v2557
    %v3385 = vunpack.c.l.b16 %v2558
    %v3386 = vunpack.c.h.b16 %v2558
    %v3387 = vunpack.c.l.b16 %v2559
    %v3388 = vunpack.c.l.b16 %v2560
    %v3389 = vunpack.c.h.b16 %v2560
    %v3390 = vunpack.c.l.b16 %v2561
    %v3391 = vunpack.c.l.b16 %v2562
    %v3392 = vunpack.c.h.b16 %v2562
    %v3393 = vunpack.c.l.b16 %v2563
    %v3394 = vunpack.c.l.b16 %v2564
    %v3395 = vunpack.c.h.b16 %v2564
    %v3396 = vunpack.c.l.b16 %v2565
    %v3397 = vunpack.c.l.b16 %v2566
    %v3398 = vunpack.c.h.b16 %v2566
    %v3399 = vunpack.c.l.b16 %v2567
    %v3400 = vunpack.c.l.b16 %v2568
    %v3401 = vunpack.c.h.b16 %v2568
    %v3402 = vunpack.c.l.b16 %v2569
    %v3403 = vunpack.c.l.b16 %v2570
    %v3404 = vunpack.c.h.b16 %v2570
    %v3405 = vunpack.c.l.b16 %v2571
    %v3406 = vunpack.c.l.b16 %v2572
    %v3407 = vunpack.c.h.b16 %v2572
    %v3408 = vunpack.c.l.b16 %v2573
    %v3409 = vunpack.c.l.b16 %v2574
    %v3410 = vunpack.c.h.b16 %v2574
    %v3411 = vunpack.c.l.b16 %v2575
    %v3412 = vunpack.c.l.b16 %v2576
    %v3413 = vunpack.c.h.b16 %v2576
    %v3414 = vunpack.c.l.b16 %v2577
    %v3415 = vunpack.c.l.b16 %v2578
    %v3416 = vunpack.c.h.b16 %v2578
    %v3417 = vunpack.c.l.b16 %v2579
    %v3418 = vunpack.c.l.b16 %v2580
    %v3419 = vunpack.c.h.b16 %v2580
    %v3420 = vunpack.c.l.b16 %v2581
    %v3421 = vunpack.c.l.b16 %v2582
    %v3422 = vunpack.c.h.b16 %v2582
    %v3423 = vunpack.c.l.b16 %v2583
    %v3424 = vunpack.c.l.b16 %v2584
    %v3425 = vunpack.c.h.b16 %v2584
    %v3426 = vunpack.c.l.b16 %v2585
    %v3427 = vunpack.c.l.b16 %v2586
    %v3428 = vunpack.c.h.b16 %v2586
    %v3429 = vunpack.c.l.b16 %v2587
    %v3430 = vunpack.c.l.b16 %v2588
    %v3431 = vunpack.c.h.b16 %v2588
    %v3432 = vunpack.c.l.b16 %v2589
    %v3433 = vunpack.c.l.b16 %v2590
    %v3434 = vunpack.c.h.b16 %v2590
    %v3435 = vunpack.c.l.b16 %v2591
    %v3436 = vunpack.c.l.b16 %v2592
    %v3437 = vunpack.c.h.b16 %v2592
    %v3438 = vunpack.c.l.b16 %v2593
    %v3439 = vunpack.c.l.b16 %v2594
    %v3440 = vunpack.c.h.b16 %v2594
    %v3441 = vunpack.c.l.b16 %v2595
    %v3442 = vunpack.c.l.b16 %v2596
    %v3443 = vunpack.c.h.b16 %v2596
    %v3444 = vunpack.c.l.b16 %v2597
    %v3445 = vunpack.c.l.b16 %v2598
    %v3446 = vunpack.c.h.b16 %v2598
    %v3447 = vunpack.c.l.b16 %v2599
    %v3448 = vunpack.c.l.b16 %v2600
    %v3449 = vunpack.c.h.b16 %v2600
    %v3450 = vunpack.c.l.b16 %v2601
    %v3451 = vunpack.c.l.b16 %v2602
    %v3452 = vunpack.c.h.b16 %v2602
    %v3453 = vunpack.c.l.b16 %v2603
    %v3454 = vunpack.c.l.b16 %v2604
    %v3455 = vunpack.c.h.b16 %v2604
    %v3456 = vunpack.c.l.b16 %v2605
    %v3457 = vunpack.c.l.b16 %v2606
    %v3458 = vunpack.c.h.b16 %v2606
    %v3459 = vunpack.c.l.b16 %v2607
    %v3460 = vunpack.c.l.b16 %v2608
    %v3461 = vunpack.c.h.b16 %v2608
    %v3462 = vunpack.c.l.b16 %v2609
    %v3463 = vunpack.c.l.b16 %v2610
    %v3464 = vunpack.c.h.b16 %v2610
    %v3465 = vunpack.c.l.b16 %v2611
    %v3466 = vunpack.c.l.b16 %v2612
    %v3467 = vunpack.c.h.b16 %v2612
    %v3468 = vunpack.c.l.b16 %v2613
    %v3469 = vunpack.c.l.b16 %v2614
    %v3470 = vunpack.c.h.b16 %v2614
    %v3471 = vunpack.c.l.b16 %v2615
    %v3472 = vunpack.c.l.b16 %v2616
    %v3473 = vunpack.c.h.b16 %v2616
    %v3474 = vunpack.c.l.b16 %v2617
    %v3475 = vunpack.c.l.b16 %v2618
    %v3476 = vunpack.c.h.b16 %v2618
    %v3477 = vunpack.c.l.b16 %v2619
    %v3478 = vunpack.c.l.b16 %v2620
    %v3479 = vunpack.c.h.b16 %v2620
    %v3480 = vunpack.c.l.b16 %v2621
    %v3481 = vunpack.c.l.b16 %v2622
    %v3482 = vunpack.c.h.b16 %v2622
    %v3483 = vunpack.c.l.b16 %v2623
    %v3484 = vunpack.c.l.b16 %v2624
    %v3485 = vunpack.c.h.b16 %v2624
    %v3486 = vunpack.c.l.b16 %v2625
    %v3487 = vunpack.c.l.b16 %v2626
    %v3488 = vunpack.c.h.b16 %v2626
    %v3489 = vunpack.c.l.b16 %v2627
    %v3490 = vunpack.c.l.b16 %v2628
    %v3491 = vunpack.c.h.b16 %v2628
    %v3492 = vunpack.c.l.b16 %v2629
    %v3493 = vunpack.c.l.b16 %v2630
    %v3494 = vunpack.c.h.b16 %v2630
    %v3495 = vunpack.c.l.b16 %v2631
    %v3496 = vunpack.c.l.b16 %v2632
    %v3497 = vunpack.c.h.b16 %v2632
    %v3498 = vunpack.c.l.b16 %v2633
    %v3499 = vunpack.c.l.b16 %v2634
    %v3500 = vunpack.c.h.b16 %v2634
    %v3501 = vunpack.c.l.b16 %v2635
    %v3502 = vunpack.c.l.b16 %v2636
    %v3503 = vunpack.c.h.b16 %v2636
    %v3504 = vunpack.c.l.b16 %v2637
    %v3505 = vunpack.c.l.b16 %v2638
    %v3506 = vunpack.c.h.b16 %v2638
    %v3507 = vunpack.c.l.b16 %v2639
    %v3508 = vunpack.c.l.b16 %v2640
    %v3509 = vunpack.c.h.b16 %v2640
    %v3510 = vunpack.c.l.b16 %v2641
    %v3511 = vunpack.c.l.b16 %v2642
    %v3512 = vunpack.c.h.b16 %v2642
    %v3513 = vunpack.c.l.b16 %v2643
    %v3514 = vunpack.c.l.b16 %v2644
    %v3515 = vunpack.c.h.b16 %v2644
    %v3516 = vunpack.c.l.b16 %v2645
    %v3517 = vunpack.c.l.b16 %v2646
    %v3518 = vunpack.c.h.b16 %v2646
    %v3519 = vunpack.c.l.b16 %v2647
    %v3520 = vunpack.c.l.b16 %v2648
    %v3521 = vunpack.c.h.b16 %v2648
    %v3522 = vunpack.c.l.b16 %v2649
    %v3523 = vunpack.c.l.b16 %v2650
    %v3524 = vunpack.c.h.b16 %v2650
    %v3525 = vunpack.c.l.b16 %v2651
    %v3526 = vunpack.c.l.b16 %v2652
    %v3527 = vunpack.c.h.b16 %v2652
    %v3528 = vunpack.c.l.b16 %v2653
    %v3529 = vunpack.c.l.b16 %v2654
    %v3530 = vunpack.c.h.b16 %v2654
    %v3531 = vunpack.c.l.b16 %v2655
    %v3532 = vunpack.c.l.b16 %v2656
    %v3533 = vunpack.c.h.b16 %v2656
    %v3534 = vunpack.c.l.b16 %v2657
    %v3535 = vunpack.c.l.b16 %v2658
    %v3536 = vunpack.c.h.b16 %v2658
    %v3537 = vunpack.c.l.b16 %v2659
    %v3538 = vunpack.c.l.b16 %v2660
    %v3539 = vunpack.c.h.b16 %v2660
    %v3540 = vunpack.c.l.b16 %v2661
    %v3541 = vunpack.c.l.b16 %v2662
    %v3542 = vunpack.c.h.b16 %v2662
    %v3543 = vunpack.c.l.b16 %v2663
    %v3544 = vunpack.c.l.b16 %v2664
    %v3545 = vunpack.c.h.b16 %v2664
    %v3546 = vunpack.c.l.b16 %v2665
    %v3547 = vunpack.c.l.b16 %v2666
    %v3548 = vunpack.c.h.b16 %v2666
    %v3549 = vunpack.c.l.b16 %v2667
    %v3550 = vunpack.c.l.b16 %v2668
    %v3551 = vunpack.c.h.b16 %v2668
    %v3552 = vunpack.c.l.b16 %v2669
    %v3553 = vunpack.c.l.b16 %v2670
    %v3554 = vunpack.c.h.b16 %v2670
    %v3555 = vunpack.c.l.b16 %v2671
    %v3556 = vunpack.c.l.b16 %v2672
    %v3557 = vunpack.c.h.b16 %v2672
    %v3558 = vunpack.c.l.b16 %v2673
    %v3559 = vunpack.c.l.b16 %v2674
    %v3560 = vunpack.c.h.b16 %v2674
    %v3561 = vunpack.c.l.b16 %v2675
    %v3562 = vunpack.c.l.b16 %v2676
    %v3563 = vunpack.c.h.b16 %v2676
    %v3564 = vunpack.c.l.b16 %v2677
    %v3565 = vunpack.c.l.b16 %v2678
    %v3566 = vunpack.c.h.b16 %v2678
    %v3567 = vunpack.c.l.b16 %v2679
    %v3568 = vunpack.c.l.b16 %v2680
    %v3569 = vunpack.c.h.b16 %v2680
    %v3570 = vunpack.c.l.b16 %v2681
    %v3571 = vunpack.c.l.b16 %v2682
    %v3572 = vunpack.c.h.b16 %v2682
    %v3573 = vunpack.c.l.b16 %v2683
    %v3574 = vunpack.c.l.b16 %v2684
    %v3575 = vunpack.c.h.b16 %v2684
    %v3576 = vunpack.c.l.b16 %v2685
    %v3577 = vpack.c.b16 %v3340, %v3337
    %v3578 = vpack.c.b16 %v3341, %v3338
    %v3579 = vpack.c.b16 %v3342, %v3339
    %v3580 = vpack.c.b16 %v3346, %v3343
    %v3581 = vpack.c.b16 %v3347, %v3344
    %v3582 = vpack.c.b16 %v3348, %v3345
    %v3583 = vpack.c.b16 %v3352, %v3349
    %v3584 = vpack.c.b16 %v3353, %v3350
    %v3585 = vpack.c.b16 %v3354, %v3351
    %v3586 = vpack.c.b16 %v3358, %v3355
    %v3587 = vpack.c.b16 %v3359, %v3356
    %v3588 = vpack.c.b16 %v3360, %v3357
    %v3589 = vpack.c.b16 %v3364, %v3361
    %v3590 = vpack.c.b16 %v3365, %v3362
    %v3591 = vpack.c.b16 %v3366, %v3363
    %v3592 = vpack.c.b16 %v3370, %v3367
    %v3593 = vpack.c.b16 %v3371, %v3368
    %v3594 = vpack.c.b16 %v3372, %v3369
    %v3595 = vpack.c.b16 %v3376, %v3373
    %v3596 = vpack.c.b16 %v3377, %v3374
    %v3597 = vpack.c.b16 %v3378, %v3375
    %v3598 = vpack.c.b16 %v3382, %v3379
    %v3599 = vpack.c.b16 %v3383, %v3380
    %v3600 = vpack.c.b16 %v3384, %v3381
    %v3601 = vpack.c.b16 %v3388, %v3385
    %v3602 = vpack.c.b16 %v3389, %v3386
    %v3603 = vpack.c.b16 %v3390, %v3387
    %v3604 = vpack.c.b16 %v3394, %v3391
    %v3605 = vpack.c.b16 %v3395, %v3392
    %v3606 = vpack.c.b16 %v3396, %v3393
    %v3607 = vpack.c.b16 %v3400, %v3397
    %v3608 = vpack.c.b16 %v3401, %v3398
    %v3609 = vpack.c.b16 %v3402, %v3399
    %v3610 = vpack.c.b16 %v3406, %v3403
    %v3611 = vpack.c.b16 %v3407, %v3404
    %v3612 = vpack.c.b16 %v3408, %v3405
    %v3613 = vpack.c.b16 %v3412, %v3409
    %v3614 = vpack.c.b16 %v3413, %v3410
    %v3615 = vpack.c.b16 %v3414, %v3411
    %v3616 = vpack.c.b16 %v3418, %v3415
    %v3617 = vpack.c.b16 %v3419, %v3416
    %v3618 = vpack.c.b16 %v3420, %v3417
    %v3619 = vpack.c.b16 %v3424, %v3421
    %v3620 = vpack.c.b16 %v3425, %v3422
    %v3621 = vpack.c.b16 %v3426, %v3423
    %v3622 = vpack.c.b16 %v3430, %v3427
    %v3623 = vpack.c.b16 %v3431, %v3428
    %v3624 = vpack.c.b16 %v3432, %v3429
    %v3625 = vpack.c.b16 %v3436, %v3433
    %v3626 = vpack.c.b16 %v3437, %v3434
    %v3627 = vpack.c.b16 %v3438, %v3435
    %v3628 = vpack.c.b16 %v3442, %v3439
    %v3629 = vpack.c.b16 %v3443, %v3440
    %v3630 = vpack.c.b16 %v3444, %v3441
    %v3631 = vpack.c.b16 %v3448, %v3445
    %v3632 = vpack.c.b16 %v3449, %v3446
    %v3633 = vpack.c.b16 %v3450, %v3447
    %v3634 = vpack.c.b16 %v3454, %v3451
    %v3635 = vpack.c.b16 %v3455, %v3452
    %v3636 = vpack.c.b16 %v3456, %v3453
    %v3637 = vpack.c.b16 %v3460, %v3457
    %v3638 = vpack.c.b16 %v3461, %v3458
    %v3639 = vpack.c.b16 %v3462, %v3459
    %v3640 = vpack.c.b16 %v3466, %v3463
    %v3641 = vpack.c.b16 %v3467, %v3464
    %v3642 = vpack.c.b16 %v3468, %v3465
    %v3643 = vpack.c.b16 %v3472, %v3469
    %v3644 = vpack.c.b16 %v3473, %v3470
    %v3645 = vpack.c.b16 %v3474, %v3471
    %v3646 = vpack.c.b16 %v3478, %v3475
    %v3647 = vpack.c.b16 %v3479, %v3476
    %v3648 = vpack.c.b16 %v3480, %v3477
    %v3649 = vpack.c.b16 %v3484, %v3481
    %v3650 = vpack.c.b16 %v3485, %v3482
    %v3651 = vpack.c.b16 %v3486, %v3483
    %v3652 = vpack.c.b16 %v3490, %v3487
    %v3653 = vpack.c.b16 %v3491, %v3488
    %v3654 = vpack.c.b16 %v3492, %v3489
    %v3655 = vpack.c.b16 %v3496, %v3493
    %v3656 = vpack.c.b16 %v3497, %v3494
    %v3657 = vpack.c.b16 %v3498, %v3495
    %v3658 = vpack.c.b16 %v3502, %v3499
    %v3659 = vpack.c.b16 %v3503, %v3500
    %v3660 = vpack.c.b16 %v3504, %v3501
    %v3661 = vpack.c.b16 %v3508, %v3505
    %v3662 = vpack.c.b16 %v3509, %v3506
    %v3663 = vpack.c.b16 %v3510, %v3507
    %v3664 = vpack.c.b16 %v3514, %v3511
    %v3665 = vpack.c.b16 %v3515, %v3512
    %v3666 = vpack.c.b16 %v3516, %v3513
    %v3667 = vpack.c.b16 %v3520, %v3517
    %v3668 = vpack.c.b16 %v3521, %v3518
    %v3669 = vpack.c.b16 %v3522, %v3519
    %v3670 = vpack.c.b16 %v3526, %v3523
    %v3671 = vpack.c.b16 %v3527, %v3524
    %v3672 = vpack.c.b16 %v3528, %v3525
    %v3673 = vpack.c.b16 %v3532, %v3529
    %v3674 = vpack.c.b16 %v3533, %v3530
    %v3675 = vpack.c.b16 %v3534, %v3531
    %v3676 = vpack.c.b16 %v3538, %v3535
    %v3677 = vpack.c.b16 %v3539, %v3536
    %v3678 = vpack.c.b16 %v3540, %v3537
    %v3679 = vpack.c.b16 %v3544, %v3541
    %v3680 = vpack.c.b16 %v3545, %v3542
    %v3681 = vpack.c.b16 %v3546, %v3543
    %v3682 = vpack.c.b16 %v3550, %v3547
    %v3683 = vpack.c.b16 %v3551, %v3548
    %v3684 = vpack.c.b16 %v3552, %v3549
    %v3685 = vpack.c.b16 %v3556, %v3553
    %v3686 = vpack.c.b16 %v3557, %v3554
    %v3687 = vpack.c.b16 %v3558, %v3555
    %v3688 = vpack.c.b16 %v3562, %v3559
    %v3689 = vpack.c.b16 %v3563, %v3560
    %v3690 = vpack.c.b16 %v3564, %v3561
    %v3691 = vpack.c.b16 %v3568, %v3565
    %v3692 = vpack.c.b16 %v3569, %v3566
    %v3693 = vpack.c.b16 %v3570, %v3567
    %v3694 = vpack.c.b16 %v3574, %v3571
    %v3695 = vpack.c.b16 %v3575, %v3572
    %v3696 = vpack.c.b16 %v3576, %v3573
    %3817 = vmatprep.subr.bf16.mxu0 %v3578
    %3818 = vmatpush1.bf16.msra.mxu0 %v3577
    %3819 = vmatprep.subr.bf16.mxu0 %v3581
    %3820 = vmatpush1.bf16.msra.mxu0 %v3580
    %3821 = vmatprep.subr.bf16.mxu0 %v3584
    %3822 = vmatpush1.bf16.msra.mxu0 %v3583
    %3823 = vmatprep.subr.bf16.mxu0 %v3587
    %3824 = vmatpush1.bf16.msra.mxu0 %v3586
    %3825 = vmatprep.subr.bf16.mxu0 %v3590
    %3826 = vmatpush1.bf16.msra.mxu0 %v3589
    %3827 = vmatprep.subr.bf16.mxu0 %v3593
    %3828 = vmatpush1.bf16.msra.mxu0 %v3592
    %3829 = vmatprep.subr.bf16.mxu0 %v3596
    %3830 = vmatpush1.bf16.msra.mxu0 %v3595
    %3831 = vmatprep.subr.bf16.mxu0 %v3599
    %3832 = vmatpush1.bf16.msra.mxu0 %v3598
    %3833 = vmatprep.subr.bf16.mxu0 %v3602
    %3834 = vmatpush1.bf16.msra.mxu0 %v3601
    %3835 = vmatprep.subr.bf16.mxu0 %v3605
    %3836 = vmatpush1.bf16.msra.mxu0 %v3604
    %3837 = vmatprep.subr.bf16.mxu0 %v3608
    %3838 = vmatpush1.bf16.msra.mxu0 %v3607
    %3839 = vmatprep.subr.bf16.mxu0 %v3611
    %3840 = vmatpush1.bf16.msra.mxu0 %v3610
    %3841 = vmatprep.subr.bf16.mxu0 %v3614
    %3842 = vmatpush1.bf16.msra.mxu0 %v3613
    %3843 = vmatprep.subr.bf16.mxu0 %v3617
    %3844 = vmatpush1.bf16.msra.mxu0 %v3616
    %3845 = vmatprep.subr.bf16.mxu0 %v3620
    %3846 = vmatpush1.bf16.msra.mxu0 %v3619
    %3847 = vmatprep.subr.bf16.mxu0 %v3623
    %3848 = vmatpush1.bf16.msra.mxu0 %v3622
    %3849 = vmatprep.mubr.bf16.mxu0 %v3145
    %3850 = vmatmul.mubr.bf16.gmra.mrb[0].mxu0 %v3144
    %v3851 = vpop.f32.mrb[0].mxu0
    %v3852 = vadd.f32 %v3168, %v3851
    %v3853 = vpop.f32.mrb[0].mxu0
    %v3854 = vadd.f32 %v3172, %v3853
    %v3855 = vpop.f32.mrb[0].mxu0
    %v3856 = vadd.f32 %v3168, %v3855
    %v3857 = vpop.f32.mrb[0].mxu0
    %v3858 = vadd.f32 %v3172, %v3857
    %3859 = vdwg.mxu0
    %3860 = vmatprep.subr.bf16.mxu0 %v3626
    %3861 = vmatpush1.bf16.msra.mxu0 %v3625
    %3862 = vmatprep.subr.bf16.mxu0 %v3629
    %3863 = vmatpush1.bf16.msra.mxu0 %v3628
    %3864 = vmatprep.subr.bf16.mxu0 %v3632
    %3865 = vmatpush1.bf16.msra.mxu0 %v3631
    %3866 = vmatprep.subr.bf16.mxu0 %v3635
    %3867 = vmatpush1.bf16.msra.mxu0 %v3634
    %3868 = vmatprep.subr.bf16.mxu0 %v3638
    %3869 = vmatpush1.bf16.msra.mxu0 %v3637
    %3870 = vmatprep.subr.bf16.mxu0 %v3641
    %3871 = vmatpush1.bf16.msra.mxu0 %v3640
    %3872 = vmatprep.subr.bf16.mxu0 %v3644
    %3873 = vmatpush1.bf16.msra.mxu0 %v3643
    %3874 = vmatprep.subr.bf16.mxu0 %v3647
    %3875 = vmatpush1.bf16.msra.mxu0 %v3646
    %3876 = vmatprep.subr.bf16.mxu0 %v3650
    %3877 = vmatpush1.bf16.msra.mxu0 %v3649
    %3878 = vmatprep.subr.bf16.mxu0 %v3653
    %3879 = vmatpush1.bf16.msra.mxu0 %v3652
    %3880 = vmatprep.subr.bf16.mxu0 %v3656
    %3881 = vmatpush1.bf16.msra.mxu0 %v3655
    %3882 = vmatprep.subr.bf16.mxu0 %v3659
    %3883 = vmatpush1.bf16.msra.mxu0 %v3658
    %3884 = vmatprep.subr.bf16.mxu0 %v3662
    %3885 = vmatpush1.bf16.msra.mxu0 %v3661
    %3886 = vmatprep.subr.bf16.mxu0 %v3665
    %3887 = vmatpush1.bf16.msra.mxu0 %v3664
    %3888 = vmatprep.subr.bf16.mxu0 %v3668
    %3889 = vmatpush1.bf16.msra.mxu0 %v3667
    %3890 = vmatprep.subr.bf16.mxu0 %v3671
    %3891 = vmatpush1.bf16.msra.mxu0 %v3670
    %3892 = vmatprep.mubr.bf16.mxu0 %v3147
    %3893 = vmatmul.mubr.bf16.gmra.mrb[0].mxu0 %v3146
    %v3894 = vpop.f32.mrb[0].mxu0
    %v3895 = vadd.f32 %v3852, %v3894
    %v3896 = vpop.f32.mrb[0].mxu0
    %v3897 = vadd.f32 %v3854, %v3896
    %v3898 = vpop.f32.mrb[0].mxu0
    %v3899 = vadd.f32 %v3856, %v3898
    %v3900 = vpop.f32.mrb[0].mxu0
    %v3901 = vadd.f32 %v3858, %v3900
    %3902 = vdwg.mxu0
    %3903 = vmatprep.subr.bf16.mxu0 %v3674
    %3904 = vmatpush1.bf16.msra.mxu0 %v3673
    %3905 = vmatprep.subr.bf16.mxu0 %v3677
    %3906 = vmatpush1.bf16.msra.mxu0 %v3676
    %3907 = vmatprep.subr.bf16.mxu0 %v3680
    %3908 = vmatpush1.bf16.msra.mxu0 %v3679
    %3909 = vmatprep.subr.bf16.mxu0 %v3683
    %3910 = vmatpush1.bf16.msra.mxu0 %v3682
    %3911 = vmatprep.subr.bf16.mxu0 %v3686
    %3912 = vmatpush1.bf16.msra.mxu0 %v3685
    %3913 = vmatprep.subr.bf16.mxu0 %v3689
    %3914 = vmatpush1.bf16.msra.mxu0 %v3688
    %3915 = vmatprep.subr.bf16.mxu0 %v3692
    %3916 = vmatpush1.bf16.msra.mxu0 %v3691
    %3917 = vmatprep.subr.bf16.mxu0 %v3695
    %3918 = vmatpush1.bf16.msra.mxu0 %v3694
    %3919 = vmatprep.subr.bf16.mxu0 0
    %3920 = vmatpush1.bf16.msra.mxu0 0
    %3921 = vmatprep.subr.bf16.mxu0 0
    %3922 = vmatpush1.bf16.msra.mxu0 0
    %3923 = vmatprep.subr.bf16.mxu0 0
    %3924 = vmatpush1.bf16.msra.mxu0 0
    %3925 = vmatprep.subr.bf16.mxu0 0
    %3926 = vmatpush1.bf16.msra.mxu0 0
    %3927 = vmatprep.subr.bf16.mxu0 0
    %3928 = vmatpush1.bf16.msra.mxu0 0
    %3929 = vmatprep.subr.bf16.mxu0 0
    %3930 = vmatpush1.bf16.msra.mxu0 0
    %3931 = vmatprep.subr.bf16.mxu0 0
    %3932 = vmatpush1.bf16.msra.mxu0 0
    %3933 = vmatprep.subr.bf16.mxu0 0
    %3934 = vmatpush1.bf16.msra.mxu0 0
    %3935 = vmatprep.mubr.bf16.mxu0 0
    %3936 = vmatmul.mubr.bf16.gmra.mrb[0].mxu0 %v3148
    %v3937 = vpop.f32.mrb[0].mxu0
    %v3938 = vadd.f32 %v3895, %v3937
    %v3939 = vpop.f32.mrb[0].mxu0
    %v3940 = vadd.f32 %v3897, %v3939
    %v3941 = vpop.f32.mrb[0].mxu0
    %v3942 = vadd.f32 %v3899, %v3941
    %v3943 = vpop.f32.mrb[0].mxu0
    %v3944 = vadd.f32 %v3901, %v3943
    %3945 = vdwg.mxu0
    %3946 = vmatprep.subr.bf16.mxu0 0
    %3947 = vmatpush1.bf16.msra.mxu0 %v3579
    %3948 = vmatprep.subr.bf16.mxu0 0
    %3949 = vmatpush1.bf16.msra.mxu0 %v3582
    %3950 = vmatprep.subr.bf16.mxu0 0
    %3951 = vmatpush1.bf16.msra.mxu0 %v3585
    %3952 = vmatprep.subr.bf16.mxu0 0
    %3953 = vmatpush1.bf16.msra.mxu0 %v3588
    %3954 = vmatprep.subr.bf16.mxu0 0
    %3955 = vmatpush1.bf16.msra.mxu0 %v3591
    %3956 = vmatprep.subr.bf16.mxu0 0
    %3957 = vmatpush1.bf16.msra.mxu0 %v3594
    %3958 = vmatprep.subr.bf16.mxu0 0
    %3959 = vmatpush1.bf16.msra.mxu0 %v3597
    %3960 = vmatprep.subr.bf16.mxu0 0
    %3961 = vmatpush1.bf16.msra.mxu0 %v3600
    %3962 = vmatprep.subr.bf16.mxu0 0
    %3963 = vmatpush1.bf16.msra.mxu0 %v3603
    %3964 = vmatprep.subr.bf16.mxu0 0
    %3965 = vmatpush1.bf16.msra.mxu0 %v3606
    %3966 = vmatprep.subr.bf16.mxu0 0
    %3967 = vmatpush1.bf16.msra.mxu0 %v3609
    %3968 = vmatprep.subr.bf16.mxu0 0
    %3969 = vmatpush1.bf16.msra.mxu0 %v3612
    %3970 = vmatprep.subr.bf16.mxu0 0
    %3971 = vmatpush1.bf16.msra.mxu0 %v3615
    %3972 = vmatprep.subr.bf16.mxu0 0
    %3973 = vmatpush1.bf16.msra.mxu0 %v3618
    %3974 = vmatprep.subr.bf16.mxu0 0
    %3975 = vmatpush1.bf16.msra.mxu0 %v3621
    %3976 = vmatprep.subr.bf16.mxu0 0
    %3977 = vmatpush1.bf16.msra.mxu0 %v3624
    %3978 = vmatprep.mubr.bf16.mxu0 %v3145
    %3979 = vmatmul.mubr.bf16.gmra.mrb[0].mxu0 %v3144
    %v3980 = vpop.f32.mrb[0].mxu0
    %v3981 = vadd.f32 %v3176, %v3980
    %v3982 = vpop.f32.mrb[0].mxu0
    %v3983 = vpop.f32.mrb[0].mxu0
    %v3984 = vadd.f32 %v3176, %v3983
    %v3985 = vpop.f32.mrb[0].mxu0
    %3986 = vdwg.mxu0
    %3987 = vmatprep.subr.bf16.mxu0 0
    %3988 = vmatpush1.bf16.msra.mxu0 %v3627
    %3989 = vmatprep.subr.bf16.mxu0 0
    %3990 = vmatpush1.bf16.msra.mxu0 %v3630
    %3991 = vmatprep.subr.bf16.mxu0 0
    %3992 = vmatpush1.bf16.msra.mxu0 %v3633
    %3993 = vmatprep.subr.bf16.mxu0 0
    %3994 = vmatpush1.bf16.msra.mxu0 %v3636
    %3995 = vmatprep.subr.bf16.mxu0 0
    %3996 = vmatpush1.bf16.msra.mxu0 %v3639
    %3997 = vmatprep.subr.bf16.mxu0 0
    %3998 = vmatpush1.bf16.msra.mxu0 %v3642
    %3999 = vmatprep.subr.bf16.mxu0 0
    %4000 = vmatpush1.bf16.msra.mxu0 %v3645
    %4001 = vmatprep.subr.bf16.mxu0 0
    %4002 = vmatpush1.bf16.msra.mxu0 %v3648
    %4003 = vmatprep.subr.bf16.mxu0 0
    %4004 = vmatpush1.bf16.msra.mxu0 %v3651
    %4005 = vmatprep.subr.bf16.mxu0 0
    %4006 = vmatpush1.bf16.msra.mxu0 %v3654
    %4007 = vmatprep.subr.bf16.mxu0 0
    %4008 = vmatpush1.bf16.msra.mxu0 %v3657
    %4009 = vmatprep.subr.bf16.mxu0 0
    %4010 = vmatpush1.bf16.msra.mxu0 %v3660
    %4011 = vmatprep.subr.bf16.mxu0 0
    %4012 = vmatpush1.bf16.msra.mxu0 %v3663
    %4013 = vmatprep.subr.bf16.mxu0 0
    %4014 = vmatpush1.bf16.msra.mxu0 %v3666
    %4015 = vmatprep.subr.bf16.mxu0 0
    %4016 = vmatpush1.bf16.msra.mxu0 %v3669
    %4017 = vmatprep.subr.bf16.mxu0 0
    %4018 = vmatpush1.bf16.msra.mxu0 %v3672
    %4019 = vmatprep.mubr.bf16.mxu0 %v3147
    %4020 = vmatmul.mubr.bf16.gmra.mrb[0].mxu0 %v3146
    %v4021 = vpop.f32.mrb[0].mxu0
    %v4022 = vadd.f32 %v3981, %v4021
    %v4023 = vpop.f32.mrb[0].mxu0
    %v4024 = vpop.f32.mrb[0].mxu0
    %v4025 = vadd.f32 %v3984, %v4024
    %v4026 = vpop.f32.mrb[0].mxu0
    %4027 = vdwg.mxu0
    %4028 = vmatprep.subr.bf16.mxu0 0
    %4029 = vmatpush1.bf16.msra.mxu0 %v3675
    %4030 = vmatprep.subr.bf16.mxu0 0
    %4031 = vmatpush1.bf16.msra.mxu0 %v3678
    %4032 = vmatprep.subr.bf16.mxu0 0
    %4033 = vmatpush1.bf16.msra.mxu0 %v3681
    %4034 = vmatprep.subr.bf16.mxu0 0
    %4035 = vmatpush1.bf16.msra.mxu0 %v3684
    %4036 = vmatprep.subr.bf16.mxu0 0
    %4037 = vmatpush1.bf16.msra.mxu0 %v3687
    %4038 = vmatprep.subr.bf16.mxu0 0
    %4039 = vmatpush1.bf16.msra.mxu0 %v3690
    %4040 = vmatprep.subr.bf16.mxu0 0
    %4041 = vmatpush1.bf16.msra.mxu0 %v3693
    %4042 = vmatprep.subr.bf16.mxu0 0
    %4043 = vmatpush1.bf16.msra.mxu0 %v3696
    %4044 = vmatprep.subr.bf16.mxu0 0
    %4045 = vmatpush1.bf16.msra.mxu0 0
    %4046 = vmatprep.subr.bf16.mxu0 0
    %4047 = vmatpush1.bf16.msra.mxu0 0
    %4048 = vmatprep.subr.bf16.mxu0 0
    %4049 = vmatpush1.bf16.msra.mxu0 0
    %4050 = vmatprep.subr.bf16.mxu0 0
    %4051 = vmatpush1.bf16.msra.mxu0 0
    %4052 = vmatprep.subr.bf16.mxu0 0
    %4053 = vmatpush1.bf16.msra.mxu0 0
    %4054 = vmatprep.subr.bf16.mxu0 0
    %4055 = vmatpush1.bf16.msra.mxu0 0
    %4056 = vmatprep.subr.bf16.mxu0 0
    %4057 = vmatpush1.bf16.msra.mxu0 0
    %4058 = vmatprep.subr.bf16.mxu0 0
    %4059 = vmatpush1.bf16.msra.mxu0 0
    %4060 = vmatprep.mubr.bf16.mxu0 0
    %4061 = vmatmul.mubr.bf16.gmra.mrb[0].mxu0 %v3148
    %v4062 = vpop.f32.mrb[0].mxu0
    %v4063 = vadd.f32 %v4022, %v4062
    %v4064 = vpop.f32.mrb[0].mxu0
    %v4065 = vpop.f32.mrb[0].mxu0
    %v4066 = vadd.f32 %v4025, %v4065
    %v4067 = vpop.f32.mrb[0].mxu0
    %4068 = vdwg.mxu0
    %v4069 = vlaneseq
    %v4070 = vshrl.u32 %v4069, 7
    %v4071 = vsub.s32 1, %v4070
    %v4072 = vrot.slane %v2718, %v4071
    %v4073 = vlaneseq
    %v4074 = vshrl.u32 %v4073, 7
    %v4075 = vsub.s32 3, %v4074
    %v4076 = vrot.slane %v2718, %v4075
    %v4077 = vlaneseq
    %v4078 = vshrl.u32 %v4077, 7
    %v4079 = vsub.s32 5, %v4078
    %v4080 = vrot.slane %v2718, %v4079
    %v4084 = vlaneseq
    %v4085 = vshrl.u32 %v4084, 7
    %v4086 = vsub.s32 1, %v4085
    %v4087 = vrot.slane %v4072, %v4086
    %v4088 = vlaneseq
    %v4089 = vshrl.u32 %v4088, 7
    %v4090 = vsub.s32 1, %v4089
    %v4091 = vrot.slane %v4076, %v4090
    %v4092 = vlaneseq
    %v4093 = vshrl.u32 %v4092, 7
    %v4094 = vsub.s32 1, %v4093
    %v4095 = vrot.slane %v4080, %v4094
    %v4128 = vunpack.c.l.b16 %v2686
    %v4129 = vunpack.c.h.b16 %v2686
    %v4130 = vunpack.c.l.b16 %v2687
    %v4131 = vunpack.c.l.b16 %v2688
    %v4132 = vunpack.c.h.b16 %v2688
    %v4133 = vunpack.c.l.b16 %v2689
    %v4134 = vunpack.c.l.b16 %v2690
    %v4135 = vunpack.c.h.b16 %v2690
    %v4136 = vunpack.c.l.b16 %v2691
    %v4137 = vunpack.c.l.b16 %v2692
    %v4138 = vunpack.c.h.b16 %v2692
    %v4139 = vunpack.c.l.b16 %v2693
    %v4140 = vunpack.c.l.b16 %v2694
    %v4141 = vunpack.c.h.b16 %v2694
    %v4142 = vunpack.c.l.b16 %v2695
    %v4143 = vunpack.c.l.b16 %v2696
    %v4144 = vunpack.c.h.b16 %v2696
    %v4145 = vunpack.c.l.b16 %v2697
    %v4146 = vunpack.c.l.b16 %v2698
    %v4147 = vunpack.c.h.b16 %v2698
    %v4148 = vunpack.c.l.b16 %v2699
    %v4149 = vunpack.c.l.b16 %v2700
    %v4150 = vunpack.c.h.b16 %v2700
    %v4151 = vunpack.c.l.b16 %v2701
    %v4152 = vunpack.c.l.b16 %v2702
    %v4153 = vunpack.c.h.b16 %v2702
    %v4154 = vunpack.c.l.b16 %v2703
    %v4155 = vunpack.c.l.b16 %v2704
    %v4156 = vunpack.c.h.b16 %v2704
    %v4157 = vunpack.c.l.b16 %v2705
    %v4158 = vunpack.c.l.b16 %v2706
    %v4159 = vunpack.c.h.b16 %v2706
    %v4160 = vunpack.c.l.b16 %v2707
    %v4161 = vunpack.c.l.b16 %v2708
    %v4162 = vunpack.c.h.b16 %v2708
    %v4163 = vunpack.c.l.b16 %v2709
    %v4164 = vunpack.c.l.b16 %v2710
    %v4165 = vunpack.c.h.b16 %v2710
    %v4166 = vunpack.c.l.b16 %v2711
    %v4167 = vunpack.c.l.b16 %v2712
    %v4168 = vunpack.c.h.b16 %v2712
    %v4169 = vunpack.c.l.b16 %v2713
    %v4170 = vunpack.c.l.b16 %v2714
    %v4171 = vunpack.c.h.b16 %v2714
    %v4172 = vunpack.c.l.b16 %v2715
    %v4173 = vunpack.c.l.b16 %v2716
    %v4174 = vunpack.c.h.b16 %v2716
    %v4175 = vunpack.c.l.b16 %v2717
    %v4176 = vpack.c.b16 %v4131, %v4128
    %v4177 = vpack.c.b16 %v4132, %v4129
    %v4178 = vpack.c.b16 %v4133, %v4130
    %v4179 = vpack.c.b16 %v4137, %v4134
    %v4180 = vpack.c.b16 %v4138, %v4135
    %v4181 = vpack.c.b16 %v4139, %v4136
    %v4182 = vpack.c.b16 %v4143, %v4140
    %v4183 = vpack.c.b16 %v4144, %v4141
    %v4184 = vpack.c.b16 %v4145, %v4142
    %v4185 = vpack.c.b16 %v4149, %v4146
    %v4186 = vpack.c.b16 %v4150, %v4147
    %v4187 = vpack.c.b16 %v4151, %v4148
    %v4188 = vpack.c.b16 %v4155, %v4152
    %v4189 = vpack.c.b16 %v4156, %v4153
    %v4190 = vpack.c.b16 %v4157, %v4154
    %v4191 = vpack.c.b16 %v4161, %v4158
    %v4192 = vpack.c.b16 %v4162, %v4159
    %v4193 = vpack.c.b16 %v4163, %v4160
    %v4194 = vpack.c.b16 %v4167, %v4164
    %v4195 = vpack.c.b16 %v4168, %v4165
    %v4196 = vpack.c.b16 %v4169, %v4166
    %v4197 = vpack.c.b16 %v4173, %v4170
    %v4198 = vpack.c.b16 %v4174, %v4171
    %v4199 = vpack.c.b16 %v4175, %v4172
    %4224 = vmatprep.subr.bf16.mxu0 %v4177
    %4225 = vmatpush1.bf16.msra.mxu0 %v4176
    %4226 = vmatprep.subr.bf16.mxu0 %v4180
    %4227 = vmatpush1.bf16.msra.mxu0 %v4179
    %4228 = vmatprep.subr.bf16.mxu0 %v4183
    %4229 = vmatpush1.bf16.msra.mxu0 %v4182
    %4230 = vmatprep.subr.bf16.mxu0 %v4186
    %4231 = vmatpush1.bf16.msra.mxu0 %v4185
    %4232 = vmatprep.subr.bf16.mxu0 %v4189
    %4233 = vmatpush1.bf16.msra.mxu0 %v4188
    %4234 = vmatprep.subr.bf16.mxu0 %v4192
    %4235 = vmatpush1.bf16.msra.mxu0 %v4191
    %4236 = vmatprep.subr.bf16.mxu0 %v4195
    %4237 = vmatpush1.bf16.msra.mxu0 %v4194
    %4238 = vmatprep.subr.bf16.mxu0 %v4198
    %4239 = vmatpush1.bf16.msra.mxu0 %v4197
    %4240 = vmatprep.subr.bf16.mxu0 0
    %4241 = vmatpush1.bf16.msra.mxu0 0
    %4242 = vmatprep.subr.bf16.mxu0 0
    %4243 = vmatpush1.bf16.msra.mxu0 0
    %4244 = vmatprep.subr.bf16.mxu0 0
    %4245 = vmatpush1.bf16.msra.mxu0 0
    %4246 = vmatprep.subr.bf16.mxu0 0
    %4247 = vmatpush1.bf16.msra.mxu0 0
    %4248 = vmatprep.subr.bf16.mxu0 0
    %4249 = vmatpush1.bf16.msra.mxu0 0
    %4250 = vmatprep.subr.bf16.mxu0 0
    %4251 = vmatpush1.bf16.msra.mxu0 0
    %4252 = vmatprep.subr.bf16.mxu0 0
    %4253 = vmatpush1.bf16.msra.mxu0 0
    %4254 = vmatprep.subr.bf16.mxu0 0
    %4255 = vmatpush1.bf16.msra.mxu0 0
    %4256 = vmatprep.mubr.bf16.mxu0 0
    %4257 = vmatmul.mubr.bf16.gmra.mrb[0].mxu0 0
    %v4258 = vpop.f32.mrb[0].mxu0
    %v4259 = vadd.f32 %v4087, %v4258
    %v4260 = vpop.f32.mrb[0].mxu0
    %v4261 = vadd.f32 %v4091, %v4260
    %v4262 = vpop.f32.mrb[0].mxu0
    %v4263 = vadd.f32 %v4087, %v4262
    %v4264 = vpop.f32.mrb[0].mxu0
    %v4265 = vadd.f32 %v4091, %v4264
    %4266 = vdwg.mxu0
    %4267 = vmatprep.subr.bf16.mxu0 0
    %4268 = vmatpush1.bf16.msra.mxu0 %v4178
    %4269 = vmatprep.subr.bf16.mxu0 0
    %4270 = vmatpush1.bf16.msra.mxu0 %v4181
    %4271 = vmatprep.subr.bf16.mxu0 0
    %4272 = vmatpush1.bf16.msra.mxu0 %v4184
    %4273 = vmatprep.subr.bf16.mxu0 0
    %4274 = vmatpush1.bf16.msra.mxu0 %v4187
    %4275 = vmatprep.subr.bf16.mxu0 0
    %4276 = vmatpush1.bf16.msra.mxu0 %v4190
    %4277 = vmatprep.subr.bf16.mxu0 0
    %4278 = vmatpush1.bf16.msra.mxu0 %v4193
    %4279 = vmatprep.subr.bf16.mxu0 0
    %4280 = vmatpush1.bf16.msra.mxu0 %v4196
    %4281 = vmatprep.subr.bf16.mxu0 0
    %4282 = vmatpush1.bf16.msra.mxu0 %v4199
    %4283 = vmatprep.subr.bf16.mxu0 0
    %4284 = vmatpush1.bf16.msra.mxu0 0
    %4285 = vmatprep.subr.bf16.mxu0 0
    %4286 = vmatpush1.bf16.msra.mxu0 0
    %4287 = vmatprep.subr.bf16.mxu0 0
    %4288 = vmatpush1.bf16.msra.mxu0 0
    %4289 = vmatprep.subr.bf16.mxu0 0
    %4290 = vmatpush1.bf16.msra.mxu0 0
    %4291 = vmatprep.subr.bf16.mxu0 0
    %4292 = vmatpush1.bf16.msra.mxu0 0
    %4293 = vmatprep.subr.bf16.mxu0 0
    %4294 = vmatpush1.bf16.msra.mxu0 0
    %4295 = vmatprep.subr.bf16.mxu0 0
    %4296 = vmatpush1.bf16.msra.mxu0 0
    %4297 = vmatprep.subr.bf16.mxu0 0
    %4298 = vmatpush1.bf16.msra.mxu0 0
    %4299 = vmatprep.mubr.bf16.mxu0 0
    %4300 = vmatmul.mubr.bf16.gmra.mrb[0].mxu0 0
    %v4301 = vpop.f32.mrb[0].mxu0
    %v4302 = vadd.f32 %v4095, %v4301
    %v4303 = vpop.f32.mrb[0].mxu0
    %v4304 = vpop.f32.mrb[0].mxu0
    %v4305 = vadd.f32 %v4095, %v4304
    %v4306 = vpop.f32.mrb[0].mxu0
    %4307 = vdwg.mxu0
    %v4308 = vadd.f32 %v3938, %v4259
    %v4309 = vadd.f32 %v3942, %v4263
    %v4310 = vxor.u32 %v4308, 2147483648
    %v4311 = vxor.u32 %v4309, 2147483648
    %v4312 = vmul.f32 %v4310, 1.442695
    %v4313 = vpow.pop %v4312
    %v4314 = vmul.f32 %v4311, 1.442695
    %v4315 = vpow.pop %v4314
    %v4316 = vadd.f32 %v4313, 1.0
    %v4317 = vadd.f32 %v4315, 1.0
    %v4318 = vrcp.pop %v4316
    %v4319 = vmul.f32 1.0, %v4318
    %v4320 = vrcp.pop %v4317
    %v4321 = vmul.f32 1.0, %v4320
    %v4322 = vadd.f32 %v3940, %v4261
    %v4323 = vadd.f32 %v3944, %v4265
    %v4324 = vxor.u32 %v4322, 2147483648
    %v4325 = vxor.u32 %v4323, 2147483648
    %v4326 = vmul.f32 %v4324, 1.442695
    %v4327 = vpow.pop %v4326
    %v4328 = vmul.f32 %v4325, 1.442695
    %v4329 = vpow.pop %v4328
    %v4330 = vadd.f32 %v4327, 1.0
    %v4331 = vadd.f32 %v4329, 1.0
    %v4332 = vrcp.pop %v4330
    %v4333 = vmul.f32 1.0, %v4332
    %v4334 = vrcp.pop %v4331
    %v4335 = vmul.f32 1.0, %v4334
    %v4336 = vmul.f32 %v4319, %v4302
    %v4337 = vmul.f32 %v4321, %v4305
    %v4338 = vadd.f32 %v4063, %v4336
    %v4339 = vadd.f32 %v4066, %v4337
    %v4340 = vtanh.pop %v4338
    %v4341 = vtanh.pop %v4339
    %v4342 = vsub.f32 1.0, %v4333
    %v4343 = vsub.f32 1.0, %v4335
    %v4344 = vmul.f32 %v4342, %v4340
    %v4345 = vmul.f32 %v4343, %v4341
    %v4346 = vmul.f32 %v4333, 0.0
    %v4347 = vmul.f32 %v4335, 0.0
    %v4348 = vadd.f32 %v4344, %v4346
    %v4349 = vadd.f32 %v4345, %v4347
    %v4350 = vpack.c.bf16 %v4349, %v4348
    %v4352 = vlaneseq
    %v4353 = vshrl.u32 %v4352, 7
    %v4354 = vsub.s32 0, %v4353
    %v4355 = vrot.slane %v2817, %v4354
    %v4356 = vlaneseq
    %v4357 = vshrl.u32 %v4356, 7
    %v4358 = vsub.s32 4, %v4357
    %v4359 = vrot.slane %v2817, %v4358
    %v4362 = vlaneseq
    %v4363 = vshrl.u32 %v4362, 7
    %v4364 = vsub.s32 0, %v4363
    %v4365 = vrot.slane %v4355, %v4364
    %v4366 = vlaneseq
    %v4367 = vshrl.u32 %v4366, 7
    %v4368 = vsub.s32 0, %v4367
    %v4369 = vrot.slane %v4359, %v4368
    %v4402 = vunpack.c.l.b16 %v2719
    %v4403 = vunpack.c.h.b16 %v2719
    %v4404 = vunpack.c.l.b16 %v2720
    %v4405 = vunpack.c.h.b16 %v2720
    %v4406 = vunpack.c.l.b16 %v2721
    %v4407 = vunpack.c.h.b16 %v2721
    %v4408 = vunpack.c.l.b16 %v2722
    %v4409 = vunpack.c.h.b16 %v2722
    %v4410 = vunpack.c.l.b16 %v2723
    %v4411 = vunpack.c.h.b16 %v2723
    %v4412 = vunpack.c.l.b16 %v2724
    %v4413 = vunpack.c.h.b16 %v2724
    %v4414 = vunpack.c.l.b16 %v2725
    %v4415 = vunpack.c.h.b16 %v2725
    %v4416 = vunpack.c.l.b16 %v2726
    %v4417 = vunpack.c.h.b16 %v2726
    %v4418 = vunpack.c.l.b16 %v2727
    %v4419 = vunpack.c.h.b16 %v2727
    %v4420 = vunpack.c.l.b16 %v2728
    %v4421 = vunpack.c.h.b16 %v2728
    %v4422 = vunpack.c.l.b16 %v2729
    %v4423 = vunpack.c.h.b16 %v2729
    %v4424 = vunpack.c.l.b16 %v2730
    %v4425 = vunpack.c.h.b16 %v2730
    %v4426 = vunpack.c.l.b16 %v2731
    %v4427 = vunpack.c.h.b16 %v2731
    %v4428 = vunpack.c.l.b16 %v2732
    %v4429 = vunpack.c.h.b16 %v2732
    %v4430 = vunpack.c.l.b16 %v2733
    %v4431 = vunpack.c.h.b16 %v2733
    %v4432 = vunpack.c.l.b16 %v2734
    %v4433 = vunpack.c.h.b16 %v2734
    %v4434 = vunpack.c.l.b16 %v2735
    %v4435 = vunpack.c.h.b16 %v2735
    %v4436 = vunpack.c.l.b16 %v2736
    %v4437 = vunpack.c.h.b16 %v2736
    %v4438 = vunpack.c.l.b16 %v2737
    %v4439 = vunpack.c.h.b16 %v2737
    %v4440 = vunpack.c.l.b16 %v2738
    %v4441 = vunpack.c.h.b16 %v2738
    %v4442 = vunpack.c.l.b16 %v2739
    %v4443 = vunpack.c.h.b16 %v2739
    %v4444 = vunpack.c.l.b16 %v2740
    %v4445 = vunpack.c.h.b16 %v2740
    %v4446 = vunpack.c.l.b16 %v2741
    %v4447 = vunpack.c.h.b16 %v2741
    %v4448 = vunpack.c.l.b16 %v2742
    %v4449 = vunpack.c.h.b16 %v2742
    %v4450 = vunpack.c.l.b16 %v2743
    %v4451 = vunpack.c.h.b16 %v2743
    %v4452 = vunpack.c.l.b16 %v2744
    %v4453 = vunpack.c.h.b16 %v2744
    %v4454 = vunpack.c.l.b16 %v2745
    %v4455 = vunpack.c.h.b16 %v2745
    %v4456 = vunpack.c.l.b16 %v2746
    %v4457 = vunpack.c.h.b16 %v2746
    %v4458 = vunpack.c.l.b16 %v2747
    %v4459 = vunpack.c.h.b16 %v2747
    %v4460 = vunpack.c.l.b16 %v2748
    %v4461 = vunpack.c.h.b16 %v2748
    %v4462 = vunpack.c.l.b16 %v2749
    %v4463 = vunpack.c.h.b16 %v2749
    %v4464 = vunpack.c.l.b16 %v2750
    %v4465 = vunpack.c.h.b16 %v2750
    %v4466 = vpack.c.b16 %v4404, %v4402
    %v4467 = vpack.c.b16 %v4405, %v4403
    %v4468 = vpack.c.b16 %v4408, %v4406
    %v4469 = vpack.c.b16 %v4409, %v4407
    %v4470 = vpack.c.b16 %v4412, %v4410
    %v4471 = vpack.c.b16 %v4413, %v4411
    %v4472 = vpack.c.b16 %v4416, %v4414
    %v4473 = vpack.c.b16 %v4417, %v4415
    %v4474 = vpack.c.b16 %v4420, %v4418
    %v4475 = vpack.c.b16 %v4421, %v4419
    %v4476 = vpack.c.b16 %v4424, %v4422
    %v4477 = vpack.c.b16 %v4425, %v4423
    %v4478 = vpack.c.b16 %v4428, %v4426
    %v4479 = vpack.c.b16 %v4429, %v4427
    %v4480 = vpack.c.b16 %v4432, %v4430
    %v4481 = vpack.c.b16 %v4433, %v4431
    %v4482 = vpack.c.b16 %v4436, %v4434
    %v4483 = vpack.c.b16 %v4437, %v4435
    %v4484 = vpack.c.b16 %v4440, %v4438
    %v4485 = vpack.c.b16 %v4441, %v4439
    %v4486 = vpack.c.b16 %v4444, %v4442
    %v4487 = vpack.c.b16 %v4445, %v4443
    %v4488 = vpack.c.b16 %v4448, %v4446
    %v4489 = vpack.c.b16 %v4449, %v4447
    %v4490 = vpack.c.b16 %v4452, %v4450
    %v4491 = vpack.c.b16 %v4453, %v4451
    %v4492 = vpack.c.b16 %v4456, %v4454
    %v4493 = vpack.c.b16 %v4457, %v4455
    %v4494 = vpack.c.b16 %v4460, %v4458
    %v4495 = vpack.c.b16 %v4461, %v4459
    %v4496 = vpack.c.b16 %v4464, %v4462
    %v4497 = vpack.c.b16 %v4465, %v4463
    %4530 = vmatprep.subr.bf16.mxu0 %v4467
    %4531 = vmatpush1.bf16.msra.mxu0 %v4466
    %4532 = vmatprep.subr.bf16.mxu0 %v4469
    %4533 = vmatpush1.bf16.msra.mxu0 %v4468
    %4534 = vmatprep.subr.bf16.mxu0 %v4471
    %4535 = vmatpush1.bf16.msra.mxu0 %v4470
    %4536 = vmatprep.subr.bf16.mxu0 %v4473
    %4537 = vmatpush1.bf16.msra.mxu0 %v4472
    %4538 = vmatprep.subr.bf16.mxu0 %v4475
    %4539 = vmatpush1.bf16.msra.mxu0 %v4474
    %4540 = vmatprep.subr.bf16.mxu0 %v4477
    %4541 = vmatpush1.bf16.msra.mxu0 %v4476
    %4542 = vmatprep.subr.bf16.mxu0 %v4479
    %4543 = vmatpush1.bf16.msra.mxu0 %v4478
    %4544 = vmatprep.subr.bf16.mxu0 %v4481
    %4545 = vmatpush1.bf16.msra.mxu0 %v4480
    %4546 = vmatprep.subr.bf16.mxu0 %v4483
    %4547 = vmatpush1.bf16.msra.mxu0 %v4482
    %4548 = vmatprep.subr.bf16.mxu0 %v4485
    %4549 = vmatpush1.bf16.msra.mxu0 %v4484
    %4550 = vmatprep.subr.bf16.mxu0 %v4487
    %4551 = vmatpush1.bf16.msra.mxu0 %v4486
    %4552 = vmatprep.subr.bf16.mxu0 %v4489
    %4553 = vmatpush1.bf16.msra.mxu0 %v4488
    %4554 = vmatprep.subr.bf16.mxu0 %v4491
    %4555 = vmatpush1.bf16.msra.mxu0 %v4490
    %4556 = vmatprep.subr.bf16.mxu0 %v4493
    %4557 = vmatpush1.bf16.msra.mxu0 %v4492
    %4558 = vmatprep.subr.bf16.mxu0 %v4495
    %4559 = vmatpush1.bf16.msra.mxu0 %v4494
    %4560 = vmatprep.subr.bf16.mxu0 %v4497
    %4561 = vmatpush1.bf16.msra.mxu0 %v4496
    %4562 = vmatprep.mubr.bf16.mxu0 %v4350
    %4563 = vmatmul.mubr.bf16.gmra.mrb[0].mxu0 %v4350
    %v4564 = vpop.f32.mrb[0].mxu0
    %v4565 = vadd.f32 %v4365, %v4564
    %v4566 = vpop.f32.mrb[0].mxu0
    %v4567 = vadd.f32 %v4369, %v4566
    %v4568 = vpop.f32.mrb[0].mxu0
    %v4569 = vadd.f32 %v4365, %v4568
    %v4570 = vpop.f32.mrb[0].mxu0
    %v4571 = vadd.f32 %v4369, %v4570
    %4572 = vdwg.mxu0
    %v4573 = vmax.f32 %v4565, 0.0
    %v4574 = vmax.f32 %v4567, 0.0
    %v4575 = vmax.f32 %v4569, 0.0
    %v4576 = vmax.f32 %v4571, 0.0
    %v4577 = vpack.c.bf16 %v4575, %v4573
    %v4578 = vpack.c.bf16 %v4576, %v4574
    %v4579 = vlaneseq
    %v4580 = vshrl.u32 %v4579, 7
    %v4581 = vsub.s32 1, %v4580
    %v4582 = vrot.slane %v2817, %v4581
    %v4583 = vlaneseq
    %v4584 = vshrl.u32 %v4583, 7
    %v4585 = vsub.s32 5, %v4584
    %v4586 = vrot.slane %v2817, %v4585
    %v4589 = vlaneseq
    %v4590 = vshrl.u32 %v4589, 7
    %v4591 = vsub.s32 1, %v4590
    %v4592 = vrot.slane %v4582, %v4591
    %v4593 = vlaneseq
    %v4594 = vshrl.u32 %v4593, 7
    %v4595 = vsub.s32 1, %v4594
    %v4596 = vrot.slane %v4586, %v4595
    %v4629 = vunpack.c.l.b16 %v2752
    %v4630 = vunpack.c.h.b16 %v2752
    %v4631 = vunpack.c.l.b16 %v2753
    %v4632 = vunpack.c.h.b16 %v2753
    %v4633 = vunpack.c.l.b16 %v2754
    %v4634 = vunpack.c.h.b16 %v2754
    %v4635 = vunpack.c.l.b16 %v2755
    %v4636 = vunpack.c.h.b16 %v2755
    %v4637 = vunpack.c.l.b16 %v2756
    %v4638 = vunpack.c.h.b16 %v2756
    %v4639 = vunpack.c.l.b16 %v2757
    %v4640 = vunpack.c.h.b16 %v2757
    %v4641 = vunpack.c.l.b16 %v2758
    %v4642 = vunpack.c.h.b16 %v2758
    %v4643 = vunpack.c.l.b16 %v2759
    %v4644 = vunpack.c.h.b16 %v2759
    %v4645 = vunpack.c.l.b16 %v2760
    %v4646 = vunpack.c.h.b16 %v2760
    %v4647 = vunpack.c.l.b16 %v2761
    %v4648 = vunpack.c.h.b16 %v2761
    %v4649 = vunpack.c.l.b16 %v2762
    %v4650 = vunpack.c.h.b16 %v2762
    %v4651 = vunpack.c.l.b16 %v2763
    %v4652 = vunpack.c.h.b16 %v2763
    %v4653 = vunpack.c.l.b16 %v2764
    %v4654 = vunpack.c.h.b16 %v2764
    %v4655 = vunpack.c.l.b16 %v2765
    %v4656 = vunpack.c.h.b16 %v2765
    %v4657 = vunpack.c.l.b16 %v2766
    %v4658 = vunpack.c.h.b16 %v2766
    %v4659 = vunpack.c.l.b16 %v2767
    %v4660 = vunpack.c.h.b16 %v2767
    %v4661 = vunpack.c.l.b16 %v2768
    %v4662 = vunpack.c.h.b16 %v2768
    %v4663 = vunpack.c.l.b16 %v2769
    %v4664 = vunpack.c.h.b16 %v2769
    %v4665 = vunpack.c.l.b16 %v2770
    %v4666 = vunpack.c.h.b16 %v2770
    %v4667 = vunpack.c.l.b16 %v2771
    %v4668 = vunpack.c.h.b16 %v2771
    %v4669 = vunpack.c.l.b16 %v2772
    %v4670 = vunpack.c.h.b16 %v2772
    %v4671 = vunpack.c.l.b16 %v2773
    %v4672 = vunpack.c.h.b16 %v2773
    %v4673 = vunpack.c.l.b16 %v2774
    %v4674 = vunpack.c.h.b16 %v2774
    %v4675 = vunpack.c.l.b16 %v2775
    %v4676 = vunpack.c.h.b16 %v2775
    %v4677 = vunpack.c.l.b16 %v2776
    %v4678 = vunpack.c.h.b16 %v2776
    %v4679 = vunpack.c.l.b16 %v2777
    %v4680 = vunpack.c.h.b16 %v2777
    %v4681 = vunpack.c.l.b16 %v2778
    %v4682 = vunpack.c.h.b16 %v2778
    %v4683 = vunpack.c.l.b16 %v2779
    %v4684 = vunpack.c.h.b16 %v2779
    %v4685 = vunpack.c.l.b16 %v2780
    %v4686 = vunpack.c.h.b16 %v2780
    %v4687 = vunpack.c.l.b16 %v2781
    %v4688 = vunpack.c.h.b16 %v2781
    %v4689 = vunpack.c.l.b16 %v2782
    %v4690 = vunpack.c.h.b16 %v2782
    %v4691 = vunpack.c.l.b16 %v2783
    %v4692 = vunpack.c.h.b16 %v2783
    %v4693 = vpack.c.b16 %v4631, %v4629
    %v4694 = vpack.c.b16 %v4632, %v4630
    %v4695 = vpack.c.b16 %v4635, %v4633
    %v4696 = vpack.c.b16 %v4636, %v4634
    %v4697 = vpack.c.b16 %v4639, %v4637
    %v4698 = vpack.c.b16 %v4640, %v4638
    %v4699 = vpack.c.b16 %v4643, %v4641
    %v4700 = vpack.c.b16 %v4644, %v4642
    %v4701 = vpack.c.b16 %v4647, %v4645
    %v4702 = vpack.c.b16 %v4648, %v4646
    %v4703 = vpack.c.b16 %v4651, %v4649
    %v4704 = vpack.c.b16 %v4652, %v4650
    %v4705 = vpack.c.b16 %v4655, %v4653
    %v4706 = vpack.c.b16 %v4656, %v4654
    %v4707 = vpack.c.b16 %v4659, %v4657
    %v4708 = vpack.c.b16 %v4660, %v4658
    %v4709 = vpack.c.b16 %v4663, %v4661
    %v4710 = vpack.c.b16 %v4664, %v4662
    %v4711 = vpack.c.b16 %v4667, %v4665
    %v4712 = vpack.c.b16 %v4668, %v4666
    %v4713 = vpack.c.b16 %v4671, %v4669
    %v4714 = vpack.c.b16 %v4672, %v4670
    %v4715 = vpack.c.b16 %v4675, %v4673
    %v4716 = vpack.c.b16 %v4676, %v4674
    %v4717 = vpack.c.b16 %v4679, %v4677
    %v4718 = vpack.c.b16 %v4680, %v4678
    %v4719 = vpack.c.b16 %v4683, %v4681
    %v4720 = vpack.c.b16 %v4684, %v4682
    %v4721 = vpack.c.b16 %v4687, %v4685
    %v4722 = vpack.c.b16 %v4688, %v4686
    %v4723 = vpack.c.b16 %v4691, %v4689
    %v4724 = vpack.c.b16 %v4692, %v4690
    %4757 = vmatprep.subr.bf16.mxu0 %v4694
    %4758 = vmatpush1.bf16.msra.mxu0 %v4693
    %4759 = vmatprep.subr.bf16.mxu0 %v4696
    %4760 = vmatpush1.bf16.msra.mxu0 %v4695
    %4761 = vmatprep.subr.bf16.mxu0 %v4698
    %4762 = vmatpush1.bf16.msra.mxu0 %v4697
    %4763 = vmatprep.subr.bf16.mxu0 %v4700
    %4764 = vmatpush1.bf16.msra.mxu0 %v4699
    %4765 = vmatprep.subr.bf16.mxu0 %v4702
    %4766 = vmatpush1.bf16.msra.mxu0 %v4701
    %4767 = vmatprep.subr.bf16.mxu0 %v4704
    %4768 = vmatpush1.bf16.msra.mxu0 %v4703
    %4769 = vmatprep.subr.bf16.mxu0 %v4706
    %4770 = vmatpush1.bf16.msra.mxu0 %v4705
    %4771 = vmatprep.subr.bf16.mxu0 %v4708
    %4772 = vmatpush1.bf16.msra.mxu0 %v4707
    %4773 = vmatprep.subr.bf16.mxu0 %v4710
    %4774 = vmatpush1.bf16.msra.mxu0 %v4709
    %4775 = vmatprep.subr.bf16.mxu0 %v4712
    %4776 = vmatpush1.bf16.msra.mxu0 %v4711
    %4777 = vmatprep.subr.bf16.mxu0 %v4714
    %4778 = vmatpush1.bf16.msra.mxu0 %v4713
    %4779 = vmatprep.subr.bf16.mxu0 %v4716
    %4780 = vmatpush1.bf16.msra.mxu0 %v4715
    %4781 = vmatprep.subr.bf16.mxu0 %v4718
    %4782 = vmatpush1.bf16.msra.mxu0 %v4717
    %4783 = vmatprep.subr.bf16.mxu0 %v4720
    %4784 = vmatpush1.bf16.msra.mxu0 %v4719
    %4785 = vmatprep.subr.bf16.mxu0 %v4722
    %4786 = vmatpush1.bf16.msra.mxu0 %v4721
    %4787 = vmatprep.subr.bf16.mxu0 %v4724
    %4788 = vmatpush1.bf16.msra.mxu0 %v4723
    %4789 = vmatprep.mubr.bf16.mxu0 %v4578
    %4790 = vmatmul.mubr.bf16.gmra.mrb[0].mxu0 %v4577
    %v4791 = vpop.f32.mrb[0].mxu0
    %v4792 = vadd.f32 %v4592, %v4791
    %v4793 = vpop.f32.mrb[0].mxu0
    %v4794 = vadd.f32 %v4596, %v4793
    %v4795 = vpop.f32.mrb[0].mxu0
    %v4796 = vadd.f32 %v4592, %v4795
    %v4797 = vpop.f32.mrb[0].mxu0
    %v4798 = vadd.f32 %v4596, %v4797
    %4799 = vdwg.mxu0
    %v4800 = vmax.f32 %v4792, 0.0
    %v4801 = vmax.f32 %v4794, 0.0
    %v4802 = vmax.f32 %v4796, 0.0
    %v4803 = vmax.f32 %v4798, 0.0
    %v4804 = vpack.c.bf16 %v4802, %v4800
    %v4805 = vpack.c.bf16 %v4803, %v4801
    %v4806 = vlaneseq
    %v4807 = vshrl.u32 %v4806, 7
    %v4808 = vsub.s32 2, %v4807
    %v4809 = vrot.slane %v2817, %v4808
    %v4810 = vlaneseq
    %v4811 = vshrl.u32 %v4810, 7
    %v4812 = vsub.s32 6, %v4811
    %v4813 = vrot.slane %v2817, %v4812
    %v4816 = vlaneseq
    %v4817 = vshrl.u32 %v4816, 7
    %v4818 = vsub.s32 2, %v4817
    %v4819 = vrot.slane %v4809, %v4818
    %v4820 = vlaneseq
    %v4821 = vshrl.u32 %v4820, 7
    %v4822 = vsub.s32 2, %v4821
    %v4823 = vrot.slane %v4813, %v4822
    %v4856 = vunpack.c.l.b16 %v2785
    %v4857 = vunpack.c.h.b16 %v2785
    %v4858 = vunpack.c.l.b16 %v2786
    %v4859 = vunpack.c.h.b16 %v2786
    %v4860 = vunpack.c.l.b16 %v2787
    %v4861 = vunpack.c.h.b16 %v2787
    %v4862 = vunpack.c.l.b16 %v2788
    %v4863 = vunpack.c.h.b16 %v2788
    %v4864 = vunpack.c.l.b16 %v2789
    %v4865 = vunpack.c.h.b16 %v2789
    %v4866 = vunpack.c.l.b16 %v2790
    %v4867 = vunpack.c.h.b16 %v2790
    %v4868 = vunpack.c.l.b16 %v2791
    %v4869 = vunpack.c.h.b16 %v2791
    %v4870 = vunpack.c.l.b16 %v2792
    %v4871 = vunpack.c.h.b16 %v2792
    %v4872 = vunpack.c.l.b16 %v2793
    %v4873 = vunpack.c.h.b16 %v2793
    %v4874 = vunpack.c.l.b16 %v2794
    %v4875 = vunpack.c.h.b16 %v2794
    %v4876 = vunpack.c.l.b16 %v2795
    %v4877 = vunpack.c.h.b16 %v2795
    %v4878 = vunpack.c.l.b16 %v2796
    %v4879 = vunpack.c.h.b16 %v2796
    %v4880 = vunpack.c.l.b16 %v2797
    %v4881 = vunpack.c.h.b16 %v2797
    %v4882 = vunpack.c.l.b16 %v2798
    %v4883 = vunpack.c.h.b16 %v2798
    %v4884 = vunpack.c.l.b16 %v2799
    %v4885 = vunpack.c.h.b16 %v2799
    %v4886 = vunpack.c.l.b16 %v2800
    %v4887 = vunpack.c.h.b16 %v2800
    %v4888 = vunpack.c.l.b16 %v2801
    %v4889 = vunpack.c.h.b16 %v2801
    %v4890 = vunpack.c.l.b16 %v2802
    %v4891 = vunpack.c.h.b16 %v2802
    %v4892 = vunpack.c.l.b16 %v2803
    %v4893 = vunpack.c.h.b16 %v2803
    %v4894 = vunpack.c.l.b16 %v2804
    %v4895 = vunpack.c.h.b16 %v2804
    %v4896 = vunpack.c.l.b16 %v2805
    %v4897 = vunpack.c.h.b16 %v2805
    %v4898 = vunpack.c.l.b16 %v2806
    %v4899 = vunpack.c.h.b16 %v2806
    %v4900 = vunpack.c.l.b16 %v2807
    %v4901 = vunpack.c.h.b16 %v2807
    %v4902 = vunpack.c.l.b16 %v2808
    %v4903 = vunpack.c.h.b16 %v2808
    %v4904 = vunpack.c.l.b16 %v2809
    %v4905 = vunpack.c.h.b16 %v2809
    %v4906 = vunpack.c.l.b16 %v2810
    %v4907 = vunpack.c.h.b16 %v2810
    %v4908 = vunpack.c.l.b16 %v2811
    %v4909 = vunpack.c.h.b16 %v2811
    %v4910 = vunpack.c.l.b16 %v2812
    %v4911 = vunpack.c.h.b16 %v2812
    %v4912 = vunpack.c.l.b16 %v2813
    %v4913 = vunpack.c.h.b16 %v2813
    %v4914 = vunpack.c.l.b16 %v2814
    %v4915 = vunpack.c.h.b16 %v2814
    %v4916 = vunpack.c.l.b16 %v2815
    %v4917 = vunpack.c.h.b16 %v2815
    %v4918 = vunpack.c.l.b16 %v2816
    %v4919 = vunpack.c.h.b16 %v2816
    %v4920 = vpack.c.b16 %v4858, %v4856
    %v4921 = vpack.c.b16 %v4859, %v4857
    %v4922 = vpack.c.b16 %v4862, %v4860
    %v4923 = vpack.c.b16 %v4863, %v4861
    %v4924 = vpack.c.b16 %v4866, %v4864
    %v4925 = vpack.c.b16 %v4867, %v4865
    %v4926 = vpack.c.b16 %v4870, %v4868
    %v4927 = vpack.c.b16 %v4871, %v4869
    %v4928 = vpack.c.b16 %v4874, %v4872
    %v4929 = vpack.c.b16 %v4875, %v4873
    %v4930 = vpack.c.b16 %v4878, %v4876
    %v4931 = vpack.c.b16 %v4879, %v4877
    %v4932 = vpack.c.b16 %v4882, %v4880
    %v4933 = vpack.c.b16 %v4883, %v4881
    %v4934 = vpack.c.b16 %v4886, %v4884
    %v4935 = vpack.c.b16 %v4887, %v4885
    %v4936 = vpack.c.b16 %v4890, %v4888
    %v4937 = vpack.c.b16 %v4891, %v4889
    %v4938 = vpack.c.b16 %v4894, %v4892
    %v4939 = vpack.c.b16 %v4895, %v4893
    %v4940 = vpack.c.b16 %v4898, %v4896
    %v4941 = vpack.c.b16 %v4899, %v4897
    %v4942 = vpack.c.b16 %v4902, %v4900
    %v4943 = vpack.c.b16 %v4903, %v4901
    %v4944 = vpack.c.b16 %v4906, %v4904
    %v4945 = vpack.c.b16 %v4907, %v4905
    %v4946 = vpack.c.b16 %v4910, %v4908
    %v4947 = vpack.c.b16 %v4911, %v4909
    %v4948 = vpack.c.b16 %v4914, %v4912
    %v4949 = vpack.c.b16 %v4915, %v4913
    %v4950 = vpack.c.b16 %v4918, %v4916
    %v4951 = vpack.c.b16 %v4919, %v4917
    %4984 = vmatprep.subr.bf16.mxu0 %v4921
    %4985 = vmatpush1.bf16.msra.mxu0 %v4920
    %4986 = vmatprep.subr.bf16.mxu0 %v4923
    %4987 = vmatpush1.bf16.msra.mxu0 %v4922
    %4988 = vmatprep.subr.bf16.mxu0 %v4925
    %4989 = vmatpush1.bf16.msra.mxu0 %v4924
    %4990 = vmatprep.subr.bf16.mxu0 %v4927
    %4991 = vmatpush1.bf16.msra.mxu0 %v4926
    %4992 = vmatprep.subr.bf16.mxu0 %v4929
    %4993 = vmatpush1.bf16.msra.mxu0 %v4928
    %4994 = vmatprep.subr.bf16.mxu0 %v4931
    %4995 = vmatpush1.bf16.msra.mxu0 %v4930
    %4996 = vmatprep.subr.bf16.mxu0 %v4933
    %4997 = vmatpush1.bf16.msra.mxu0 %v4932
    %4998 = vmatprep.subr.bf16.mxu0 %v4935
    %4999 = vmatpush1.bf16.msra.mxu0 %v4934
    %5000 = vmatprep.subr.bf16.mxu0 %v4937
    %5001 = vmatpush1.bf16.msra.mxu0 %v4936
    %5002 = vmatprep.subr.bf16.mxu0 %v4939
    %5003 = vmatpush1.bf16.msra.mxu0 %v4938
    %5004 = vmatprep.subr.bf16.mxu0 %v4941
    %5005 = vmatpush1.bf16.msra.mxu0 %v4940
    %5006 = vmatprep.subr.bf16.mxu0 %v4943
    %5007 = vmatpush1.bf16.msra.mxu0 %v4942
    %5008 = vmatprep.subr.bf16.mxu0 %v4945
    %5009 = vmatpush1.bf16.msra.mxu0 %v4944
    %5010 = vmatprep.subr.bf16.mxu0 %v4947
    %5011 = vmatpush1.bf16.msra.mxu0 %v4946
    %5012 = vmatprep.subr.bf16.mxu0 %v4949
    %5013 = vmatpush1.bf16.msra.mxu0 %v4948
    %5014 = vmatprep.subr.bf16.mxu0 %v4951
    %5015 = vmatpush1.bf16.msra.mxu0 %v4950
    %5016 = vmatprep.mubr.bf16.mxu0 %v4805
    %5017 = vmatmul.mubr.bf16.gmra.mrb[0].mxu0 %v4804
    %v5018 = vpop.f32.mrb[0].mxu0
    %v5019 = vadd.f32 %v4819, %v5018
    %v5020 = vpop.f32.mrb[0].mxu0
    %v5021 = vadd.f32 %v4823, %v5020
    %v5022 = vpop.f32.mrb[0].mxu0
    %v5023 = vadd.f32 %v4819, %v5022
    %v5024 = vpop.f32.mrb[0].mxu0
    %v5025 = vadd.f32 %v4823, %v5024
    %5026 = vdwg.mxu0
    %v5027 = vmax.f32 %v5019, 0.0
    %v5028 = vmax.f32 %v5021, 0.0
    %v5029 = vmax.f32 %v5023, 0.0
    %v5030 = vmax.f32 %v5025, 0.0
    %v5031 = vpack.c.bf16 %v5029, %v5027
    %v5032 = vpack.c.bf16 %v5030, %v5028
    %v5034 = vlaneseq
    %v5035 = vshrl.u32 %v5034, 7
    %v5036 = vsub.s32 0, %v5035
    %v5037 = vrot.slane %v2850, %v5036
    %v5071 = vunpack.c.l.b16 %v2818
    %v5072 = vunpack.c.h.b16 %v2818
    %v5073 = vunpack.c.l.b16 %v2819
    %v5074 = vunpack.c.h.b16 %v2819
    %v5075 = vunpack.c.l.b16 %v2820
    %v5076 = vunpack.c.h.b16 %v2820
    %v5077 = vunpack.c.l.b16 %v2821
    %v5078 = vunpack.c.h.b16 %v2821
    %v5079 = vunpack.c.l.b16 %v2822
    %v5080 = vunpack.c.h.b16 %v2822
    %v5081 = vunpack.c.l.b16 %v2823
    %v5082 = vunpack.c.h.b16 %v2823
    %v5083 = vunpack.c.l.b16 %v2824
    %v5084 = vunpack.c.h.b16 %v2824
    %v5085 = vunpack.c.l.b16 %v2825
    %v5086 = vunpack.c.h.b16 %v2825
    %v5087 = vunpack.c.l.b16 %v2826
    %v5088 = vunpack.c.h.b16 %v2826
    %v5089 = vunpack.c.l.b16 %v2827
    %v5090 = vunpack.c.h.b16 %v2827
    %v5091 = vunpack.c.l.b16 %v2828
    %v5092 = vunpack.c.h.b16 %v2828
    %v5093 = vunpack.c.l.b16 %v2829
    %v5094 = vunpack.c.h.b16 %v2829
    %v5095 = vunpack.c.l.b16 %v2830
    %v5096 = vunpack.c.h.b16 %v2830
    %v5097 = vunpack.c.l.b16 %v2831
    %v5098 = vunpack.c.h.b16 %v2831
    %v5099 = vunpack.c.l.b16 %v2832
    %v5100 = vunpack.c.h.b16 %v2832
    %v5101 = vunpack.c.l.b16 %v2833
    %v5102 = vunpack.c.h.b16 %v2833
    %v5103 = vunpack.c.l.b16 %v2834
    %v5104 = vunpack.c.h.b16 %v2834
    %v5105 = vunpack.c.l.b16 %v2835
    %v5106 = vunpack.c.h.b16 %v2835
    %v5107 = vunpack.c.l.b16 %v2836
    %v5108 = vunpack.c.h.b16 %v2836
    %v5109 = vunpack.c.l.b16 %v2837
    %v5110 = vunpack.c.h.b16 %v2837
    %v5111 = vunpack.c.l.b16 %v2838
    %v5112 = vunpack.c.h.b16 %v2838
    %v5113 = vunpack.c.l.b16 %v2839
    %v5114 = vunpack.c.h.b16 %v2839
    %v5115 = vunpack.c.l.b16 %v2840
    %v5116 = vunpack.c.h.b16 %v2840
    %v5117 = vunpack.c.l.b16 %v2841
    %v5118 = vunpack.c.h.b16 %v2841
    %v5119 = vunpack.c.l.b16 %v2842
    %v5120 = vunpack.c.h.b16 %v2842
    %v5121 = vunpack.c.l.b16 %v2843
    %v5122 = vunpack.c.h.b16 %v2843
    %v5123 = vunpack.c.l.b16 %v2844
    %v5124 = vunpack.c.h.b16 %v2844
    %v5125 = vunpack.c.l.b16 %v2845
    %v5126 = vunpack.c.h.b16 %v2845
    %v5127 = vunpack.c.l.b16 %v2846
    %v5128 = vunpack.c.h.b16 %v2846
    %v5129 = vunpack.c.l.b16 %v2847
    %v5130 = vunpack.c.h.b16 %v2847
    %v5131 = vunpack.c.l.b16 %v2848
    %v5132 = vunpack.c.h.b16 %v2848
    %v5133 = vunpack.c.l.b16 %v2849
    %v5134 = vunpack.c.h.b16 %v2849
    %v5135 = vpack.c.b16 %v5073, %v5071
    %v5136 = vpack.c.b16 %v5074, %v5072
    %v5137 = vpack.c.b16 %v5077, %v5075
    %v5138 = vpack.c.b16 %v5078, %v5076
    %v5139 = vpack.c.b16 %v5081, %v5079
    %v5140 = vpack.c.b16 %v5082, %v5080
    %v5141 = vpack.c.b16 %v5085, %v5083
    %v5142 = vpack.c.b16 %v5086, %v5084
    %v5143 = vpack.c.b16 %v5089, %v5087
    %v5144 = vpack.c.b16 %v5090, %v5088
    %v5145 = vpack.c.b16 %v5093, %v5091
    %v5146 = vpack.c.b16 %v5094, %v5092
    %v5147 = vpack.c.b16 %v5097, %v5095
    %v5148 = vpack.c.b16 %v5098, %v5096
    %v5149 = vpack.c.b16 %v5101, %v5099
    %v5150 = vpack.c.b16 %v5102, %v5100
    %v5151 = vpack.c.b16 %v5105, %v5103
    %v5152 = vpack.c.b16 %v5106, %v5104
    %v5153 = vpack.c.b16 %v5109, %v5107
    %v5154 = vpack.c.b16 %v5110, %v5108
    %v5155 = vpack.c.b16 %v5113, %v5111
    %v5156 = vpack.c.b16 %v5114, %v5112
    %v5157 = vpack.c.b16 %v5117, %v5115
    %v5158 = vpack.c.b16 %v5118, %v5116
    %v5159 = vpack.c.b16 %v5121, %v5119
    %v5160 = vpack.c.b16 %v5122, %v5120
    %v5161 = vpack.c.b16 %v5125, %v5123
    %v5162 = vpack.c.b16 %v5126, %v5124
    %v5163 = vpack.c.b16 %v5129, %v5127
    %v5164 = vpack.c.b16 %v5130, %v5128
    %v5165 = vpack.c.b16 %v5133, %v5131
    %v5166 = vpack.c.b16 %v5134, %v5132
    %5199 = vmatprep.subr.bf16.mxu0 %v5136
    %5200 = vmatpush1.bf16.msra.mxu0 %v5135
    %5201 = vmatprep.subr.bf16.mxu0 %v5138
    %5202 = vmatpush1.bf16.msra.mxu0 %v5137
    %5203 = vmatprep.subr.bf16.mxu0 %v5140
    %5204 = vmatpush1.bf16.msra.mxu0 %v5139
    %5205 = vmatprep.subr.bf16.mxu0 %v5142
    %5206 = vmatpush1.bf16.msra.mxu0 %v5141
    %5207 = vmatprep.subr.bf16.mxu0 %v5144
    %5208 = vmatpush1.bf16.msra.mxu0 %v5143
    %5209 = vmatprep.subr.bf16.mxu0 %v5146
    %5210 = vmatpush1.bf16.msra.mxu0 %v5145
    %5211 = vmatprep.subr.bf16.mxu0 %v5148
    %5212 = vmatpush1.bf16.msra.mxu0 %v5147
    %5213 = vmatprep.subr.bf16.mxu0 %v5150
    %5214 = vmatpush1.bf16.msra.mxu0 %v5149
    %5215 = vmatprep.subr.bf16.mxu0 %v5152
    %5216 = vmatpush1.bf16.msra.mxu0 %v5151
    %5217 = vmatprep.subr.bf16.mxu0 %v5154
    %5218 = vmatpush1.bf16.msra.mxu0 %v5153
    %5219 = vmatprep.subr.bf16.mxu0 %v5156
    %5220 = vmatpush1.bf16.msra.mxu0 %v5155
    %5221 = vmatprep.subr.bf16.mxu0 %v5158
    %5222 = vmatpush1.bf16.msra.mxu0 %v5157
    %5223 = vmatprep.subr.bf16.mxu0 %v5160
    %5224 = vmatpush1.bf16.msra.mxu0 %v5159
    %5225 = vmatprep.subr.bf16.mxu0 %v5162
    %5226 = vmatpush1.bf16.msra.mxu0 %v5161
    %5227 = vmatprep.subr.bf16.mxu0 %v5164
    %5228 = vmatpush1.bf16.msra.mxu0 %v5163
    %5229 = vmatprep.subr.bf16.mxu0 %v5166
    %5230 = vmatpush1.bf16.msra.mxu0 %v5165
    %5231 = vmatprep.mubr.bf16.mxu0 %v5032
    %5232 = vmatmul.mubr.bf16.gmra.mrb[0].mxu0 %v5031
    %v5233 = vpop.f32.mrb[0].mxu0
    %v5234 = vadd.f32 %v5037, %v5233
    %v5235 = vpop.f32.mrb[0].mxu0
    %v5236 = vpop.f32.mrb[0].mxu0
    %v5237 = vadd.f32 %v5037, %v5236
    %v5238 = vpop.f32.mrb[0].mxu0
    %5239 = vdwg.mxu0
    %5240 = vst [vmem:[#allocation19] sm:$0xff] %v5234
    %5241 = vst [vmem:[#allocation19 + $0x8] sm:$0xff] %v5237
    // Predicated region
    $region122: #{table_detect_forward_pallas.1} parent=1 // pred_check
      _
    $region123: #{table_detect_forward_pallas.1} parent=1 // pred_check_branch
      %5243 = sbr.rel (0) target = $region125
    $region124: #{table_detect_forward_pallas.1} parent=1 // pred_region
      %s5245 = ssub.s32 256, 256
      %5246 = vsyncadd [#allocation4], %s5245
      %s5247 = sshll.u32 [#allocation19], 4
      %s5248 = int_to_ptr.vmem [resolvable:$true] %s5247
      %5253 = dma.vmem_to_hbm [thread:$0]  %s5248, 256, %s20, [#allocation4], 128, 128, 8
    $region125: #{table_detect_forward_pallas.1} parent=1 // pred_fallthru
      _
    // Predicated region
    $region126: #{table_detect_forward_pallas.1} parent=1 // pred_check
      _
    $region127: #{table_detect_forward_pallas.1} parent=1 // pred_check_branch
      %5255 = sbr.rel (0) target = $region129
    $region128: #{table_detect_forward_pallas.1} parent=1 // pred_region
      %5256 = dma.done [#allocation4], 256
    $region129: #{table_detect_forward_pallas.1} parent=1 // pred_fallthru
      _
    %5257 = vsyncpa [#allocation3], 1
    %5258 = vsyncpa [#allocation6], 1
    %5259 = vsyncpa [#allocation9], 1
    %5260 = vsyncpa [#allocation12], 1
    %5261 = vsyncpa [#allocation15], 1
    %5262 = vsyncpa [#allocation18], 1
    %5263 = vsyncpa [#allocation4], 1

</llo_original>
